<compile_context>
chip_gen: v6e
topology: v6e:2x2x1
jax: 0.10.0
libtpu: 0.0.40
codegen_flags: <defaults>
</compile_context>

<pallas_src>
import jax
import jax.numpy as jnp
from jax import lax
from jax.experimental import pallas as pl
from jax.experimental.pallas import tpu as pltpu

HIDDEN = 64      # real hidden size (PyTorch module)
HPAD = 128       # lane-padded hidden size used inside the kernel
FC1 = 32         # real fc1 width
FC1P = 128       # lane-padded fc1 width


def lstm_model_kernel(gx_ref, whh1_ref, w2_ref, b2_ref,
                      wfc1_ref, bfc1_ref, wfc2_ref, bfc2_ref, out_ref):
    HP = HPAD
    T = gx_ref.shape[0]
    B = gx_ref.shape[1]

    # Hoisted, loop-invariant bias slab (broadcast once, not per iteration).
    b2 = jnp.broadcast_to(b2_ref[...], (B, 4 * HP))

    def cell(gates, c):
        # gate order matches PyTorch: i, f, g, o ; each slice is one full vreg.
        i = jax.nn.sigmoid(gates[:, 0 * HP:1 * HP])
        f = jax.nn.sigmoid(gates[:, 1 * HP:2 * HP])
        g = jnp.tanh(gates[:, 2 * HP:3 * HP])
        o = jax.nn.sigmoid(gates[:, 3 * HP:4 * HP])
        c_new = f * c + i * g
        h_new = o * jnp.tanh(c_new)
        return h_new, c_new

    def step(t, carry):
        h1, c1, h2, c2 = carry
        # ---- layer 1: x_t @ W_ih1 + b1 was pre-folded into gx[t] in the
        # wrapper, so only the K=128 recurrent matmul remains on the
        # serial critical path.
        g1 = gx_ref[t] + jnp.dot(h1, whh1_ref[...],
                                 preferred_element_type=jnp.float32)
        h1, c1 = cell(g1, c1)
        # dropout1 (p=0.02): identity at inference.
        # ---- layer 2: single matmul over stacked [W_ih2 ; W_hh2] (K=256),
        # LHS = [h1(t), h2(t-1)] (two lane-aligned vreg slabs).
        hcat = jnp.concatenate([h1, h2], axis=1)                 # (B, 2*HP)
        g2 = jnp.dot(hcat, w2_ref[...],
                     preferred_element_type=jnp.float32) + b2    # (B, 4*HP)
        h2, c2 = cell(g2, c2)
        return (h1, c1, h2, c2)

    zero = jnp.zeros((B, HP), jnp.float32)
    # T is static & tiny: fully unroll so the LLO scheduler can overlap the
    # layer-2(t) / layer-1(t+1) wavefront across the whole block.
    h1, c1, h2, c2 = lax.fori_loop(0, T, step, (zero, zero, zero, zero),
                                   unroll=True)

    # dropout2: identity at inference. Head on the last-timestep h2.
    z = jnp.maximum(
        jnp.dot(h2, wfc1_ref[...], preferred_element_type=jnp.float32)
        + bfc1_ref[...], 0.0)
    # fc2 has a single output column: VPU multiply + lane reduction instead of
    # an MXU push/drain for a 1-column RHS (runs once per call).
    out_ref[...] = (jnp.sum(z * wfc2_ref[...], axis=1, keepdims=True)
                    + bfc2_ref[...])


def lstm_model_forward(x, kp):
    """x: (B, T, 1) float32 (batch_first, like the PyTorch module)."""
    B, T, _ = x.shape
    x_tm = jnp.transpose(x, (1, 0, 2))                            # (T, B, 1)
    # Hoisted layer-1 input projection (input_size == 1 -> rank-1 broadcast):
    # gx[t] = x_t * W_ih1 + b1, computed for all timesteps in one fused op.
    gx = x_tm * kp["wih1"] + kp["b1"]                             # (T, B, 4*HP)

    vspec = pl.BlockSpec(memory_space=pltpu.MemorySpace.VMEM)
    args = (gx, kp["whh1"], kp["w2"], kp["b2"],
            kp["wfc1"], kp["bfc1"], kp["wfc2"], kp["bfc2"])
    return pl.pallas_call(
        lstm_model_kernel,
        out_shape=jax.ShapeDtypeStruct((B, 1), jnp.float32),
        in_specs=[vspec] * len(args),
        out_specs=vspec,
    )(*args)


# One fused dispatch per forward call (transpose + gx + kernel).
lstm_model_forward_jit = jax.jit(lstm_model_forward)


def init_params(key):
    """Raw (unpadded, pre-transposed) params mirroring PyTorch default init."""
    H = HIDDEN
    ks = jax.random.split(key, 12)
    k_lstm = 1.0 / jnp.sqrt(H)
    k_fc1 = 1.0 / jnp.sqrt(H)
    k_fc2 = 1.0 / jnp.sqrt(FC1)

    def u(k, shape, bound):
        return jax.random.uniform(k, shape, jnp.float32, -bound, bound)

    wih1 = u(ks[0], (4 * H, 1), k_lstm)
    whh1 = u(ks[1], (4 * H, H), k_lstm)
    b1 = u(ks[2], (4 * H,), k_lstm) + u(ks[3], (4 * H,), k_lstm)
    wih2 = u(ks[4], (4 * H, H), k_lstm)
    whh2 = u(ks[5], (4 * H, H), k_lstm)
    b2 = u(ks[6], (4 * H,), k_lstm) + u(ks[7], (4 * H,), k_lstm)
    wfc1 = u(ks[8], (FC1, H), k_fc1)
    bfc1 = u(ks[9], (FC1,), k_fc1)
    wfc2 = u(ks[10], (1, FC1), k_fc2)
    bfc2 = u(ks[11], (1,), k_fc2)

    return {
        "wih1_t": wih1.T,            # (1, 4H)
        "whh1_t": whh1.T,            # (H, 4H)
        "b1": b1.reshape(1, 4 * H),
        "wih2_t": wih2.T,            # (H, 4H)
        "whh2_t": whh2.T,            # (H, 4H)
        "b2": b2.reshape(1, 4 * H),
        "wfc1_t": wfc1.T,            # (H, FC1)
        "bfc1": bfc1.reshape(1, FC1),
        "wfc2_t": wfc2.T,            # (FC1, 1)
        "bfc2": bfc2.reshape(1, 1),
    }


def prepare_kernel_params(p):
    """Pad hidden 64->128 per gate block, stack layer-2 weights.

    Call ONCE and cache the result; the kernel wrapper never re-pads weights.
    """
    H, HP = HIDDEN, HPAD

    def pad_gate_cols(w):  # (K, 4H) -> (K, 4HP); gate g real cols in [g*HP, g*HP+H)
        blocks = [jnp.pad(w[:, g * H:(g + 1) * H], ((0, 0), (0, HP - H)))
                  for g in range(4)]
        return jnp.concatenate(blocks, axis=1)

    # layer 1: input projection is hoisted to the wrapper, so only W_hh1 is a
    # kernel operand. W_ih1 / b1 are kept in broadcastable (1,1,4HP) form.
    wih1 = pad_gate_cols(p["wih1_t"]).reshape(1, 1, 4 * HP)             # (1,1,4HP)
    b1 = pad_gate_cols(p["b1"]).reshape(1, 1, 4 * HP)                   # (1,1,4HP)
    whh1 = jnp.pad(pad_gate_cols(p["whh1_t"]), ((0, HP - H), (0, 0)))   # (HP, 4HP)

    # layer 2: rows [0,HP) multiply h1 (W_ih2), rows [HP,2HP) multiply h2 (W_hh2).
    wih2_p = jnp.pad(pad_gate_cols(p["wih2_t"]), ((0, HP - H), (0, 0)))
    whh2_p = jnp.pad(pad_gate_cols(p["whh2_t"]), ((0, HP - H), (0, 0)))
    w2 = jnp.concatenate([wih2_p, whh2_p], axis=0)                      # (2HP,4HP)
    b2 = pad_gate_cols(p["b2"])                                          # (1, 4HP)

    wfc1 = jnp.pad(p["wfc1_t"], ((0, HP - H), (0, FC1P - FC1)))         # (HP,FC1P)
    bfc1 = jnp.pad(p["bfc1"], ((0, 0), (0, FC1P - FC1)))                # (1, FC1P)
    wfc2 = jnp.pad(p["wfc2_t"].T, ((0, 0), (0, FC1P - FC1)))            # (1, FC1P) row
    bfc2 = p["bfc2"]                                                     # (1, 1)

    return {"wih1": wih1, "b1": b1, "whh1": whh1, "w2": w2, "b2": b2,
            "wfc1": wfc1, "bfc1": bfc1, "wfc2": wfc2, "bfc2": bfc2}


def ref_forward(x, p):
    """Pure-JAX reference of the PyTorch forward (eval mode), unpadded."""
    B = x.shape[0]

    def run_layer(inp, wih_t, whh_t, b):
        H = whh_t.shape[0]

        def step(carry, x_t):
            h, c = carry
            gates = x_t @ wih_t + h @ whh_t + b
            i = jax.nn.sigmoid(gates[:, :H])
            f = jax.nn.sigmoid(gates[:, H:2 * H])
            g = jnp.tanh(gates[:, 2 * H:3 * H])
            o = jax.nn.sigmoid(gates[:, 3 * H:])
            c = f * c + i * g
            h = o * jnp.tanh(c)
            return (h, c), h

        init = (jnp.zeros((B, H), jnp.float32), jnp.zeros((B, H), jnp.float32))
        _, hs = lax.scan(step, init, jnp.transpose(inp, (1, 0, 2)))
        return jnp.transpose(hs, (1, 0, 2))

    out1 = run_layer(x, p["wih1_t"], p["whh1_t"], p["b1"])
    out2 = run_layer(out1, p["wih2_t"], p["whh2_t"], p["b2"])
    last = out2[:, -1, :]
    z = jnp.maximum(last @ p["wfc1_t"] + p["bfc1"], 0.0)
    return z @ p["wfc2_t"] + p["bfc2"]


if __name__ == "__main__":
    key = jax.random.PRNGKey(0)
    k_x, k_p = jax.random.split(key)

    B, T = 8, 8
    x = jax.random.normal(k_x, (B, T, 1), jnp.float32)
    params = init_params(k_p)
    # Weight prep happens once; kparams is reused across forward calls.
    kparams = jax.tree_util.tree_map(jax.block_until_ready,
                                     prepare_kernel_params(params))

    out = jax.block_until_ready(lstm_model_forward_jit(x, kparams))
    ref = jax.block_until_ready(ref_forward(x, params))

    assert out.shape == (B, 1), out.shape
    assert jnp.allclose(out, ref, atol=5e-5, rtol=5e-5), (out, ref)
    print("KERNEL_OK")
</pallas_src>

<mosaic_0001>
module attributes {stable_mosaic.version = 11 : i64} {
  func.func @lstm_model_kernel(%arg0: memref<8x8x512xf32, #tpu.memory_space<vmem>>, %arg1: memref<128x512xf32, #tpu.memory_space<vmem>>, %arg2: memref<256x512xf32, #tpu.memory_space<vmem>>, %arg3: memref<1x512xf32, #tpu.memory_space<vmem>>, %arg4: memref<128x128xf32, #tpu.memory_space<vmem>>, %arg5: memref<1x128xf32, #tpu.memory_space<vmem>>, %arg6: memref<1x128xf32, #tpu.memory_space<vmem>>, %arg7: memref<1x1xf32, #tpu.memory_space<vmem>>, %arg8: memref<8x1xf32, #tpu.memory_space<vmem>>) attributes {dimension_semantics = [], scalar_prefetch = 0 : i64, scratch_operands = 0 : i64, tpu.core_type = #tpu.core_type<tc>} {
    %c0 = arith.constant 0 : index
    %c0_0 = arith.constant 0 : index
    %0 = vector.load %arg3[%c0, %c0_0] : memref<1x512xf32, #tpu.memory_space<vmem>>, vector<1x512xf32>
    %1 = vector.shape_cast %0 : vector<1x512xf32> to vector<1x512xf32>
    %2 = vector.broadcast %1 : vector<1x512xf32> to vector<8x512xf32>
    %cst = arith.constant 0.000000e+00 : f32
    %3 = vector.broadcast %cst : f32 to vector<8x128xf32>
    %c0_i32 = arith.constant 0 : i32
    %4 = arith.index_cast %c0_i32 : i32 to index
    %c0_1 = arith.constant 0 : index
    %c0_2 = arith.constant 0 : index
    %5 = vector.load %arg0[%4, %c0_1, %c0_2] : memref<8x8x512xf32, #tpu.memory_space<vmem>>, vector<1x8x512xf32>
    %6 = vector.shape_cast %5 : vector<1x8x512xf32> to vector<8x512xf32>
    %c0_3 = arith.constant 0 : index
    %c0_4 = arith.constant 0 : index
    %7 = vector.load %arg1[%c0_3, %c0_4] : memref<128x512xf32, #tpu.memory_space<vmem>>, vector<128x512xf32>
    %cst_5 = arith.constant dense<0.000000e+00> : vector<8x512xf32>
    %8 = tpu.matmul %3, %7, %cst_5 {dimension_numbers = #tpu.dot_dimension_numbers<[1], [0], [0], [1], [0, 0, 1, 1], [], []>} : vector<8x128xf32>, vector<128x512xf32>, vector<8x512xf32> -> vector<8x512xf32>
    %9 = arith.addf %6, %8 : vector<8x512xf32>
    %10 = vector.extract_strided_slice %9 {offsets = [0, 0], sizes = [8, 128], strides = [1, 1]} : vector<8x512xf32> to vector<8x128xf32>
    %11 = arith.negf %10 : vector<8x128xf32>
    %12 = math.exp %11 : vector<8x128xf32>
    %cst_6 = arith.constant 1.000000e+00 : f32
    %13 = vector.broadcast %cst_6 : f32 to vector<8x128xf32>
    %14 = arith.addf %13, %12 : vector<8x128xf32>
    %15 = arith.divf %13, %14 : vector<8x128xf32>
    %16 = vector.extract_strided_slice %9 {offsets = [0, 128], sizes = [8, 128], strides = [1, 1]} : vector<8x512xf32> to vector<8x128xf32>
    %17 = arith.negf %16 : vector<8x128xf32>
    %18 = math.exp %17 : vector<8x128xf32>
    %cst_7 = arith.constant 1.000000e+00 : f32
    %19 = vector.broadcast %cst_7 : f32 to vector<8x128xf32>
    %20 = arith.addf %19, %18 : vector<8x128xf32>
    %21 = arith.divf %19, %20 : vector<8x128xf32>
    %22 = vector.extract_strided_slice %9 {offsets = [0, 256], sizes = [8, 128], strides = [1, 1]} : vector<8x512xf32> to vector<8x128xf32>
    %23 = math.tanh %22 : vector<8x128xf32>
    %24 = vector.extract_strided_slice %9 {offsets = [0, 384], sizes = [8, 128], strides = [1, 1]} : vector<8x512xf32> to vector<8x128xf32>
    %25 = arith.negf %24 : vector<8x128xf32>
    %26 = math.exp %25 : vector<8x128xf32>
    %cst_8 = arith.constant 1.000000e+00 : f32
    %27 = vector.broadcast %cst_8 : f32 to vector<8x128xf32>
    %28 = arith.addf %27, %26 : vector<8x128xf32>
    %29 = arith.divf %27, %28 : vector<8x128xf32>
    %30 = arith.mulf %21, %3 : vector<8x128xf32>
    %31 = arith.mulf %15, %23 : vector<8x128xf32>
    %32 = arith.addf %30, %31 : vector<8x128xf32>
    %33 = math.tanh %32 : vector<8x128xf32>
    %34 = arith.mulf %29, %33 : vector<8x128xf32>
    %35 = tpu.concatenate %34, %3 in 1 : vector<8x128xf32>, vector<8x128xf32> -> vector<8x256xf32>
    %c0_9 = arith.constant 0 : index
    %c0_10 = arith.constant 0 : index
    %36 = vector.load %arg2[%c0_9, %c0_10] : memref<256x512xf32, #tpu.memory_space<vmem>>, vector<256x512xf32>
    %cst_11 = arith.constant dense<0.000000e+00> : vector<8x512xf32>
    %37 = tpu.matmul %35, %36, %cst_11 {dimension_numbers = #tpu.dot_dimension_numbers<[1], [0], [0], [1], [0, 0, 1, 1], [], []>} : vector<8x256xf32>, vector<256x512xf32>, vector<8x512xf32> -> vector<8x512xf32>
    %38 = arith.addf %37, %2 : vector<8x512xf32>
    %39 = vector.extract_strided_slice %38 {offsets = [0, 0], sizes = [8, 128], strides = [1, 1]} : vector<8x512xf32> to vector<8x128xf32>
    %40 = arith.negf %39 : vector<8x128xf32>
    %41 = math.exp %40 : vector<8x128xf32>
    %cst_12 = arith.constant 1.000000e+00 : f32
    %42 = vector.broadcast %cst_12 : f32 to vector<8x128xf32>
    %43 = arith.addf %42, %41 : vector<8x128xf32>
    %44 = arith.divf %42, %43 : vector<8x128xf32>
    %45 = vector.extract_strided_slice %38 {offsets = [0, 128], sizes = [8, 128], strides = [1, 1]} : vector<8x512xf32> to vector<8x128xf32>
    %46 = arith.negf %45 : vector<8x128xf32>
    %47 = math.exp %46 : vector<8x128xf32>
    %cst_13 = arith.constant 1.000000e+00 : f32
    %48 = vector.broadcast %cst_13 : f32 to vector<8x128xf32>
    %49 = arith.addf %48, %47 : vector<8x128xf32>
    %50 = arith.divf %48, %49 : vector<8x128xf32>
    %51 = vector.extract_strided_slice %38 {offsets = [0, 256], sizes = [8, 128], strides = [1, 1]} : vector<8x512xf32> to vector<8x128xf32>
    %52 = math.tanh %51 : vector<8x128xf32>
    %53 = vector.extract_strided_slice %38 {offsets = [0, 384], sizes = [8, 128], strides = [1, 1]} : vector<8x512xf32> to vector<8x128xf32>
    %54 = arith.negf %53 : vector<8x128xf32>
    %55 = math.exp %54 : vector<8x128xf32>
    %cst_14 = arith.constant 1.000000e+00 : f32
    %56 = vector.broadcast %cst_14 : f32 to vector<8x128xf32>
    %57 = arith.addf %56, %55 : vector<8x128xf32>
    %58 = arith.divf %56, %57 : vector<8x128xf32>
    %59 = arith.mulf %50, %3 : vector<8x128xf32>
    %60 = arith.mulf %44, %52 : vector<8x128xf32>
    %61 = arith.addf %59, %60 : vector<8x128xf32>
    %62 = math.tanh %61 : vector<8x128xf32>
    %63 = arith.mulf %58, %62 : vector<8x128xf32>
    %c1_i32 = arith.constant 1 : i32
    %64 = arith.index_cast %c1_i32 : i32 to index
    %c0_15 = arith.constant 0 : index
    %c0_16 = arith.constant 0 : index
    %65 = vector.load %arg0[%64, %c0_15, %c0_16] : memref<8x8x512xf32, #tpu.memory_space<vmem>>, vector<1x8x512xf32>
    %66 = vector.shape_cast %65 : vector<1x8x512xf32> to vector<8x512xf32>
    %c0_17 = arith.constant 0 : index
    %c0_18 = arith.constant 0 : index
    %67 = vector.load %arg1[%c0_17, %c0_18] : memref<128x512xf32, #tpu.memory_space<vmem>>, vector<128x512xf32>
    %cst_19 = arith.constant dense<0.000000e+00> : vector<8x512xf32>
    %68 = tpu.matmul %34, %67, %cst_19 {dimension_numbers = #tpu.dot_dimension_numbers<[1], [0], [0], [1], [0, 0, 1, 1], [], []>} : vector<8x128xf32>, vector<128x512xf32>, vector<8x512xf32> -> vector<8x512xf32>
    %69 = arith.addf %66, %68 : vector<8x512xf32>
    %70 = vector.extract_strided_slice %69 {offsets = [0, 0], sizes = [8, 128], strides = [1, 1]} : vector<8x512xf32> to vector<8x128xf32>
    %71 = arith.negf %70 : vector<8x128xf32>
    %72 = math.exp %71 : vector<8x128xf32>
    %cst_20 = arith.constant 1.000000e+00 : f32
    %73 = vector.broadcast %cst_20 : f32 to vector<8x128xf32>
    %74 = arith.addf %73, %72 : vector<8x128xf32>
    %75 = arith.divf %73, %74 : vector<8x128xf32>
    %76 = vector.extract_strided_slice %69 {offsets = [0, 128], sizes = [8, 128], strides = [1, 1]} : vector<8x512xf32> to vector<8x128xf32>
    %77 = arith.negf %76 : vector<8x128xf32>
    %78 = math.exp %77 : vector<8x128xf32>
    %cst_21 = arith.constant 1.000000e+00 : f32
    %79 = vector.broadcast %cst_21 : f32 to vector<8x128xf32>
    %80 = arith.addf %79, %78 : vector<8x128xf32>
    %81 = arith.divf %79, %80 : vector<8x128xf32>
    %82 = vector.extract_strided_slice %69 {offsets = [0, 256], sizes = [8, 128], strides = [1, 1]} : vector<8x512xf32> to vector<8x128xf32>
    %83 = math.tanh %82 : vector<8x128xf32>
    %84 = vector.extract_strided_slice %69 {offsets = [0, 384], sizes = [8, 128], strides = [1, 1]} : vector<8x512xf32> to vector<8x128xf32>
    %85 = arith.negf %84 : vector<8x128xf32>
    %86 = math.exp %85 : vector<8x128xf32>
    %cst_22 = arith.constant 1.000000e+00 : f32
    %87 = vector.broadcast %cst_22 : f32 to vector<8x128xf32>
    %88 = arith.addf %87, %86 : vector<8x128xf32>
    %89 = arith.divf %87, %88 : vector<8x128xf32>
    %90 = arith.mulf %81, %32 : vector<8x128xf32>
    %91 = arith.mulf %75, %83 : vector<8x128xf32>
    %92 = arith.addf %90, %91 : vector<8x128xf32>
    %93 = math.tanh %92 : vector<8x128xf32>
    %94 = arith.mulf %89, %93 : vector<8x128xf32>
    %95 = tpu.concatenate %94, %63 in 1 : vector<8x128xf32>, vector<8x128xf32> -> vector<8x256xf32>
    %c0_23 = arith.constant 0 : index
    %c0_24 = arith.constant 0 : index
    %96 = vector.load %arg2[%c0_23, %c0_24] : memref<256x512xf32, #tpu.memory_space<vmem>>, vector<256x512xf32>
    %cst_25 = arith.constant dense<0.000000e+00> : vector<8x512xf32>
    %97 = tpu.matmul %95, %96, %cst_25 {dimension_numbers = #tpu.dot_dimension_numbers<[1], [0], [0], [1], [0, 0, 1, 1], [], []>} : vector<8x256xf32>, vector<256x512xf32>, vector<8x512xf32> -> vector<8x512xf32>
    %98 = arith.addf %97, %2 : vector<8x512xf32>
    %99 = vector.extract_strided_slice %98 {offsets = [0, 0], sizes = [8, 128], strides = [1, 1]} : vector<8x512xf32> to vector<8x128xf32>
    %100 = arith.negf %99 : vector<8x128xf32>
    %101 = math.exp %100 : vector<8x128xf32>
    %cst_26 = arith.constant 1.000000e+00 : f32
    %102 = vector.broadcast %cst_26 : f32 to vector<8x128xf32>
    %103 = arith.addf %102, %101 : vector<8x128xf32>
    %104 = arith.divf %102, %103 : vector<8x128xf32>
    %105 = vector.extract_strided_slice %98 {offsets = [0, 128], sizes = [8, 128], strides = [1, 1]} : vector<8x512xf32> to vector<8x128xf32>
    %106 = arith.negf %105 : vector<8x128xf32>
    %107 = math.exp %106 : vector<8x128xf32>
    %cst_27 = arith.constant 1.000000e+00 : f32
    %108 = vector.broadcast %cst_27 : f32 to vector<8x128xf32>
    %109 = arith.addf %108, %107 : vector<8x128xf32>
    %110 = arith.divf %108, %109 : vector<8x128xf32>
    %111 = vector.extract_strided_slice %98 {offsets = [0, 256], sizes = [8, 128], strides = [1, 1]} : vector<8x512xf32> to vector<8x128xf32>
    %112 = math.tanh %111 : vector<8x128xf32>
    %113 = vector.extract_strided_slice %98 {offsets = [0, 384], sizes = [8, 128], strides = [1, 1]} : vector<8x512xf32> to vector<8x128xf32>
    %114 = arith.negf %113 : vector<8x128xf32>
    %115 = math.exp %114 : vector<8x128xf32>
    %cst_28 = arith.constant 1.000000e+00 : f32
    %116 = vector.broadcast %cst_28 : f32 to vector<8x128xf32>
    %117 = arith.addf %116, %115 : vector<8x128xf32>
    %118 = arith.divf %116, %117 : vector<8x128xf32>
    %119 = arith.mulf %110, %61 : vector<8x128xf32>
    %120 = arith.mulf %104, %112 : vector<8x128xf32>
    %121 = arith.addf %119, %120 : vector<8x128xf32>
    %122 = math.tanh %121 : vector<8x128xf32>
    %123 = arith.mulf %118, %122 : vector<8x128xf32>
    %c2_i32 = arith.constant 2 : i32
    %124 = arith.index_cast %c2_i32 : i32 to index
    %c0_29 = arith.constant 0 : index
    %c0_30 = arith.constant 0 : index
    %125 = vector.load %arg0[%124, %c0_29, %c0_30] : memref<8x8x512xf32, #tpu.memory_space<vmem>>, vector<1x8x512xf32>
    %126 = vector.shape_cast %125 : vector<1x8x512xf32> to vector<8x512xf32>
    %c0_31 = arith.constant 0 : index
    %c0_32 = arith.constant 0 : index
    %127 = vector.load %arg1[%c0_31, %c0_32] : memref<128x512xf32, #tpu.memory_space<vmem>>, vector<128x512xf32>
    %cst_33 = arith.constant dense<0.000000e+00> : vector<8x512xf32>
    %128 = tpu.matmul %94, %127, %cst_33 {dimension_numbers = #tpu.dot_dimension_numbers<[1], [0], [0], [1], [0, 0, 1, 1], [], []>} : vector<8x128xf32>, vector<128x512xf32>, vector<8x512xf32> -> vector<8x512xf32>
    %129 = arith.addf %126, %128 : vector<8x512xf32>
    %130 = vector.extract_strided_slice %129 {offsets = [0, 0], sizes = [8, 128], strides = [1, 1]} : vector<8x512xf32> to vector<8x128xf32>
    %131 = arith.negf %130 : vector<8x128xf32>
    %132 = math.exp %131 : vector<8x128xf32>
    %cst_34 = arith.constant 1.000000e+00 : f32
    %133 = vector.broadcast %cst_34 : f32 to vector<8x128xf32>
    %134 = arith.addf %133, %132 : vector<8x128xf32>
    %135 = arith.divf %133, %134 : vector<8x128xf32>
    %136 = vector.extract_strided_slice %129 {offsets = [0, 128], sizes = [8, 128], strides = [1, 1]} : vector<8x512xf32> to vector<8x128xf32>
    %137 = arith.negf %136 : vector<8x128xf32>
    %138 = math.exp %137 : vector<8x128xf32>
    %cst_35 = arith.constant 1.000000e+00 : f32
    %139 = vector.broadcast %cst_35 : f32 to vector<8x128xf32>
    %140 = arith.addf %139, %138 : vector<8x128xf32>
    %141 = arith.divf %139, %140 : vector<8x128xf32>
    %142 = vector.extract_strided_slice %129 {offsets = [0, 256], sizes = [8, 128], strides = [1, 1]} : vector<8x512xf32> to vector<8x128xf32>
    %143 = math.tanh %142 : vector<8x128xf32>
    %144 = vector.extract_strided_slice %129 {offsets = [0, 384], sizes = [8, 128], strides = [1, 1]} : vector<8x512xf32> to vector<8x128xf32>
    %145 = arith.negf %144 : vector<8x128xf32>
    %146 = math.exp %145 : vector<8x128xf32>
    %cst_36 = arith.constant 1.000000e+00 : f32
    %147 = vector.broadcast %cst_36 : f32 to vector<8x128xf32>
    %148 = arith.addf %147, %146 : vector<8x128xf32>
    %149 = arith.divf %147, %148 : vector<8x128xf32>
    %150 = arith.mulf %141, %92 : vector<8x128xf32>
    %151 = arith.mulf %135, %143 : vector<8x128xf32>
    %152 = arith.addf %150, %151 : vector<8x128xf32>
    %153 = math.tanh %152 : vector<8x128xf32>
    %154 = arith.mulf %149, %153 : vector<8x128xf32>
    %155 = tpu.concatenate %154, %123 in 1 : vector<8x128xf32>, vector<8x128xf32> -> vector<8x256xf32>
    %c0_37 = arith.constant 0 : index
    %c0_38 = arith.constant 0 : index
    %156 = vector.load %arg2[%c0_37, %c0_38] : memref<256x512xf32, #tpu.memory_space<vmem>>, vector<256x512xf32>
    %cst_39 = arith.constant dense<0.000000e+00> : vector<8x512xf32>
    %157 = tpu.matmul %155, %156, %cst_39 {dimension_numbers = #tpu.dot_dimension_numbers<[1], [0], [0], [1], [0, 0, 1, 1], [], []>} : vector<8x256xf32>, vector<256x512xf32>, vector<8x512xf32> -> vector<8x512xf32>
    %158 = arith.addf %157, %2 : vector<8x512xf32>
    %159 = vector.extract_strided_slice %158 {offsets = [0, 0], sizes = [8, 128], strides = [1, 1]} : vector<8x512xf32> to vector<8x128xf32>
    %160 = arith.negf %159 : vector<8x128xf32>
    %161 = math.exp %160 : vector<8x128xf32>
    %cst_40 = arith.constant 1.000000e+00 : f32
    %162 = vector.broadcast %cst_40 : f32 to vector<8x128xf32>
    %163 = arith.addf %162, %161 : vector<8x128xf32>
    %164 = arith.divf %162, %163 : vector<8x128xf32>
    %165 = vector.extract_strided_slice %158 {offsets = [0, 128], sizes = [8, 128], strides = [1, 1]} : vector<8x512xf32> to vector<8x128xf32>
    %166 = arith.negf %165 : vector<8x128xf32>
    %167 = math.exp %166 : vector<8x128xf32>
    %cst_41 = arith.constant 1.000000e+00 : f32
    %168 = vector.broadcast %cst_41 : f32 to vector<8x128xf32>
    %169 = arith.addf %168, %167 : vector<8x128xf32>
    %170 = arith.divf %168, %169 : vector<8x128xf32>
    %171 = vector.extract_strided_slice %158 {offsets = [0, 256], sizes = [8, 128], strides = [1, 1]} : vector<8x512xf32> to vector<8x128xf32>
    %172 = math.tanh %171 : vector<8x128xf32>
    %173 = vector.extract_strided_slice %158 {offsets = [0, 384], sizes = [8, 128], strides = [1, 1]} : vector<8x512xf32> to vector<8x128xf32>
    %174 = arith.negf %173 : vector<8x128xf32>
    %175 = math.exp %174 : vector<8x128xf32>
    %cst_42 = arith.constant 1.000000e+00 : f32
    %176 = vector.broadcast %cst_42 : f32 to vector<8x128xf32>
    %177 = arith.addf %176, %175 : vector<8x128xf32>
    %178 = arith.divf %176, %177 : vector<8x128xf32>
    %179 = arith.mulf %170, %121 : vector<8x128xf32>
    %180 = arith.mulf %164, %172 : vector<8x128xf32>
    %181 = arith.addf %179, %180 : vector<8x128xf32>
    %182 = math.tanh %181 : vector<8x128xf32>
    %183 = arith.mulf %178, %182 : vector<8x128xf32>
    %c3_i32 = arith.constant 3 : i32
    %184 = arith.index_cast %c3_i32 : i32 to index
    %c0_43 = arith.constant 0 : index
    %c0_44 = arith.constant 0 : index
    %185 = vector.load %arg0[%184, %c0_43, %c0_44] : memref<8x8x512xf32, #tpu.memory_space<vmem>>, vector<1x8x512xf32>
    %186 = vector.shape_cast %185 : vector<1x8x512xf32> to vector<8x512xf32>
    %c0_45 = arith.constant 0 : index
    %c0_46 = arith.constant 0 : index
    %187 = vector.load %arg1[%c0_45, %c0_46] : memref<128x512xf32, #tpu.memory_space<vmem>>, vector<128x512xf32>
    %cst_47 = arith.constant dense<0.000000e+00> : vector<8x512xf32>
    %188 = tpu.matmul %154, %187, %cst_47 {dimension_numbers = #tpu.dot_dimension_numbers<[1], [0], [0], [1], [0, 0, 1, 1], [], []>} : vector<8x128xf32>, vector<128x512xf32>, vector<8x512xf32> -> vector<8x512xf32>
    %189 = arith.addf %186, %188 : vector<8x512xf32>
    %190 = vector.extract_strided_slice %189 {offsets = [0, 0], sizes = [8, 128], strides = [1, 1]} : vector<8x512xf32> to vector<8x128xf32>
    %191 = arith.negf %190 : vector<8x128xf32>
    %192 = math.exp %191 : vector<8x128xf32>
    %cst_48 = arith.constant 1.000000e+00 : f32
    %193 = vector.broadcast %cst_48 : f32 to vector<8x128xf32>
    %194 = arith.addf %193, %192 : vector<8x128xf32>
    %195 = arith.divf %193, %194 : vector<8x128xf32>
    %196 = vector.extract_strided_slice %189 {offsets = [0, 128], sizes = [8, 128], strides = [1, 1]} : vector<8x512xf32> to vector<8x128xf32>
    %197 = arith.negf %196 : vector<8x128xf32>
    %198 = math.exp %197 : vector<8x128xf32>
    %cst_49 = arith.constant 1.000000e+00 : f32
    %199 = vector.broadcast %cst_49 : f32 to vector<8x128xf32>
    %200 = arith.addf %199, %198 : vector<8x128xf32>
    %201 = arith.divf %199, %200 : vector<8x128xf32>
    %202 = vector.extract_strided_slice %189 {offsets = [0, 256], sizes = [8, 128], strides = [1, 1]} : vector<8x512xf32> to vector<8x128xf32>
    %203 = math.tanh %202 : vector<8x128xf32>
    %204 = vector.extract_strided_slice %189 {offsets = [0, 384], sizes = [8, 128], strides = [1, 1]} : vector<8x512xf32> to vector<8x128xf32>
    %205 = arith.negf %204 : vector<8x128xf32>
    %206 = math.exp %205 : vector<8x128xf32>
    %cst_50 = arith.constant 1.000000e+00 : f32
    %207 = vector.broadcast %cst_50 : f32 to vector<8x128xf32>
    %208 = arith.addf %207, %206 : vector<8x128xf32>
    %209 = arith.divf %207, %208 : vector<8x128xf32>
    %210 = arith.mulf %201, %152 : vector<8x128xf32>
    %211 = arith.mulf %195, %203 : vector<8x128xf32>
    %212 = arith.addf %210, %211 : vector<8x128xf32>
    %213 = math.tanh %212 : vector<8x128xf32>
    %214 = arith.mulf %209, %213 : vector<8x128xf32>
    %215 = tpu.concatenate %214, %183 in 1 : vector<8x128xf32>, vector<8x128xf32> -> vector<8x256xf32>
    %c0_51 = arith.constant 0 : index
    %c0_52 = arith.constant 0 : index
    %216 = vector.load %arg2[%c0_51, %c0_52] : memref<256x512xf32, #tpu.memory_space<vmem>>, vector<256x512xf32>
    %cst_53 = arith.constant dense<0.000000e+00> : vector<8x512xf32>
    %217 = tpu.matmul %215, %216, %cst_53 {dimension_numbers = #tpu.dot_dimension_numbers<[1], [0], [0], [1], [0, 0, 1, 1], [], []>} : vector<8x256xf32>, vector<256x512xf32>, vector<8x512xf32> -> vector<8x512xf32>
    %218 = arith.addf %217, %2 : vector<8x512xf32>
    %219 = vector.extract_strided_slice %218 {offsets = [0, 0], sizes = [8, 128], strides = [1, 1]} : vector<8x512xf32> to vector<8x128xf32>
    %220 = arith.negf %219 : vector<8x128xf32>
    %221 = math.exp %220 : vector<8x128xf32>
    %cst_54 = arith.constant 1.000000e+00 : f32
    %222 = vector.broadcast %cst_54 : f32 to vector<8x128xf32>
    %223 = arith.addf %222, %221 : vector<8x128xf32>
    %224 = arith.divf %222, %223 : vector<8x128xf32>
    %225 = vector.extract_strided_slice %218 {offsets = [0, 128], sizes = [8, 128], strides = [1, 1]} : vector<8x512xf32> to vector<8x128xf32>
    %226 = arith.negf %225 : vector<8x128xf32>
    %227 = math.exp %226 : vector<8x128xf32>
    %cst_55 = arith.constant 1.000000e+00 : f32
    %228 = vector.broadcast %cst_55 : f32 to vector<8x128xf32>
    %229 = arith.addf %228, %227 : vector<8x128xf32>
    %230 = arith.divf %228, %229 : vector<8x128xf32>
    %231 = vector.extract_strided_slice %218 {offsets = [0, 256], sizes = [8, 128], strides = [1, 1]} : vector<8x512xf32> to vector<8x128xf32>
    %232 = math.tanh %231 : vector<8x128xf32>
    %233 = vector.extract_strided_slice %218 {offsets = [0, 384], sizes = [8, 128], strides = [1, 1]} : vector<8x512xf32> to vector<8x128xf32>
    %234 = arith.negf %233 : vector<8x128xf32>
    %235 = math.exp %234 : vector<8x128xf32>
    %cst_56 = arith.constant 1.000000e+00 : f32
    %236 = vector.broadcast %cst_56 : f32 to vector<8x128xf32>
    %237 = arith.addf %236, %235 : vector<8x128xf32>
    %238 = arith.divf %236, %237 : vector<8x128xf32>
    %239 = arith.mulf %230, %181 : vector<8x128xf32>
    %240 = arith.mulf %224, %232 : vector<8x128xf32>
    %241 = arith.addf %239, %240 : vector<8x128xf32>
    %242 = math.tanh %241 : vector<8x128xf32>
    %243 = arith.mulf %238, %242 : vector<8x128xf32>
    %c4_i32 = arith.constant 4 : i32
    %244 = arith.index_cast %c4_i32 : i32 to index
    %c0_57 = arith.constant 0 : index
    %c0_58 = arith.constant 0 : index
    %245 = vector.load %arg0[%244, %c0_57, %c0_58] : memref<8x8x512xf32, #tpu.memory_space<vmem>>, vector<1x8x512xf32>
    %246 = vector.shape_cast %245 : vector<1x8x512xf32> to vector<8x512xf32>
    %c0_59 = arith.constant 0 : index
    %c0_60 = arith.constant 0 : index
    %247 = vector.load %arg1[%c0_59, %c0_60] : memref<128x512xf32, #tpu.memory_space<vmem>>, vector<128x512xf32>
    %cst_61 = arith.constant dense<0.000000e+00> : vector<8x512xf32>
    %248 = tpu.matmul %214, %247, %cst_61 {dimension_numbers = #tpu.dot_dimension_numbers<[1], [0], [0], [1], [0, 0, 1, 1], [], []>} : vector<8x128xf32>, vector<128x512xf32>, vector<8x512xf32> -> vector<8x512xf32>
    %249 = arith.addf %246, %248 : vector<8x512xf32>
    %250 = vector.extract_strided_slice %249 {offsets = [0, 0], sizes = [8, 128], strides = [1, 1]} : vector<8x512xf32> to vector<8x128xf32>
    %251 = arith.negf %250 : vector<8x128xf32>
    %252 = math.exp %251 : vector<8x128xf32>
    %cst_62 = arith.constant 1.000000e+00 : f32
    %253 = vector.broadcast %cst_62 : f32 to vector<8x128xf32>
    %254 = arith.addf %253, %252 : vector<8x128xf32>
    %255 = arith.divf %253, %254 : vector<8x128xf32>
    %256 = vector.extract_strided_slice %249 {offsets = [0, 128], sizes = [8, 128], strides = [1, 1]} : vector<8x512xf32> to vector<8x128xf32>
    %257 = arith.negf %256 : vector<8x128xf32>
    %258 = math.exp %257 : vector<8x128xf32>
    %cst_63 = arith.constant 1.000000e+00 : f32
    %259 = vector.broadcast %cst_63 : f32 to vector<8x128xf32>
    %260 = arith.addf %259, %258 : vector<8x128xf32>
    %261 = arith.divf %259, %260 : vector<8x128xf32>
    %262 = vector.extract_strided_slice %249 {offsets = [0, 256], sizes = [8, 128], strides = [1, 1]} : vector<8x512xf32> to vector<8x128xf32>
    %263 = math.tanh %262 : vector<8x128xf32>
    %264 = vector.extract_strided_slice %249 {offsets = [0, 384], sizes = [8, 128], strides = [1, 1]} : vector<8x512xf32> to vector<8x128xf32>
    %265 = arith.negf %264 : vector<8x128xf32>
    %266 = math.exp %265 : vector<8x128xf32>
    %cst_64 = arith.constant 1.000000e+00 : f32
    %267 = vector.broadcast %cst_64 : f32 to vector<8x128xf32>
    %268 = arith.addf %267, %266 : vector<8x128xf32>
    %269 = arith.divf %267, %268 : vector<8x128xf32>
    %270 = arith.mulf %261, %212 : vector<8x128xf32>
    %271 = arith.mulf %255, %263 : vector<8x128xf32>
    %272 = arith.addf %270, %271 : vector<8x128xf32>
    %273 = math.tanh %272 : vector<8x128xf32>
    %274 = arith.mulf %269, %273 : vector<8x128xf32>
    %275 = tpu.concatenate %274, %243 in 1 : vector<8x128xf32>, vector<8x128xf32> -> vector<8x256xf32>
    %c0_65 = arith.constant 0 : index
    %c0_66 = arith.constant 0 : index
    %276 = vector.load %arg2[%c0_65, %c0_66] : memref<256x512xf32, #tpu.memory_space<vmem>>, vector<256x512xf32>
    %cst_67 = arith.constant dense<0.000000e+00> : vector<8x512xf32>
    %277 = tpu.matmul %275, %276, %cst_67 {dimension_numbers = #tpu.dot_dimension_numbers<[1], [0], [0], [1], [0, 0, 1, 1], [], []>} : vector<8x256xf32>, vector<256x512xf32>, vector<8x512xf32> -> vector<8x512xf32>
    %278 = arith.addf %277, %2 : vector<8x512xf32>
    %279 = vector.extract_strided_slice %278 {offsets = [0, 0], sizes = [8, 128], strides = [1, 1]} : vector<8x512xf32> to vector<8x128xf32>
    %280 = arith.negf %279 : vector<8x128xf32>
    %281 = math.exp %280 : vector<8x128xf32>
    %cst_68 = arith.constant 1.000000e+00 : f32
    %282 = vector.broadcast %cst_68 : f32 to vector<8x128xf32>
    %283 = arith.addf %282, %281 : vector<8x128xf32>
    %284 = arith.divf %282, %283 : vector<8x128xf32>
    %285 = vector.extract_strided_slice %278 {offsets = [0, 128], sizes = [8, 128], strides = [1, 1]} : vector<8x512xf32> to vector<8x128xf32>
    %286 = arith.negf %285 : vector<8x128xf32>
    %287 = math.exp %286 : vector<8x128xf32>
    %cst_69 = arith.constant 1.000000e+00 : f32
    %288 = vector.broadcast %cst_69 : f32 to vector<8x128xf32>
    %289 = arith.addf %288, %287 : vector<8x128xf32>
    %290 = arith.divf %288, %289 : vector<8x128xf32>
    %291 = vector.extract_strided_slice %278 {offsets = [0, 256], sizes = [8, 128], strides = [1, 1]} : vector<8x512xf32> to vector<8x128xf32>
    %292 = math.tanh %291 : vector<8x128xf32>
    %293 = vector.extract_strided_slice %278 {offsets = [0, 384], sizes = [8, 128], strides = [1, 1]} : vector<8x512xf32> to vector<8x128xf32>
    %294 = arith.negf %293 : vector<8x128xf32>
    %295 = math.exp %294 : vector<8x128xf32>
    %cst_70 = arith.constant 1.000000e+00 : f32
    %296 = vector.broadcast %cst_70 : f32 to vector<8x128xf32>
    %297 = arith.addf %296, %295 : vector<8x128xf32>
    %298 = arith.divf %296, %297 : vector<8x128xf32>
    %299 = arith.mulf %290, %241 : vector<8x128xf32>
    %300 = arith.mulf %284, %292 : vector<8x128xf32>
    %301 = arith.addf %299, %300 : vector<8x128xf32>
    %302 = math.tanh %301 : vector<8x128xf32>
    %303 = arith.mulf %298, %302 : vector<8x128xf32>
    %c5_i32 = arith.constant 5 : i32
    %304 = arith.index_cast %c5_i32 : i32 to index
    %c0_71 = arith.constant 0 : index
    %c0_72 = arith.constant 0 : index
    %305 = vector.load %arg0[%304, %c0_71, %c0_72] : memref<8x8x512xf32, #tpu.memory_space<vmem>>, vector<1x8x512xf32>
    %306 = vector.shape_cast %305 : vector<1x8x512xf32> to vector<8x512xf32>
    %c0_73 = arith.constant 0 : index
    %c0_74 = arith.constant 0 : index
    %307 = vector.load %arg1[%c0_73, %c0_74] : memref<128x512xf32, #tpu.memory_space<vmem>>, vector<128x512xf32>
    %cst_75 = arith.constant dense<0.000000e+00> : vector<8x512xf32>
    %308 = tpu.matmul %274, %307, %cst_75 {dimension_numbers = #tpu.dot_dimension_numbers<[1], [0], [0], [1], [0, 0, 1, 1], [], []>} : vector<8x128xf32>, vector<128x512xf32>, vector<8x512xf32> -> vector<8x512xf32>
    %309 = arith.addf %306, %308 : vector<8x512xf32>
    %310 = vector.extract_strided_slice %309 {offsets = [0, 0], sizes = [8, 128], strides = [1, 1]} : vector<8x512xf32> to vector<8x128xf32>
    %311 = arith.negf %310 : vector<8x128xf32>
    %312 = math.exp %311 : vector<8x128xf32>
    %cst_76 = arith.constant 1.000000e+00 : f32
    %313 = vector.broadcast %cst_76 : f32 to vector<8x128xf32>
    %314 = arith.addf %313, %312 : vector<8x128xf32>
    %315 = arith.divf %313, %314 : vector<8x128xf32>
    %316 = vector.extract_strided_slice %309 {offsets = [0, 128], sizes = [8, 128], strides = [1, 1]} : vector<8x512xf32> to vector<8x128xf32>
    %317 = arith.negf %316 : vector<8x128xf32>
    %318 = math.exp %317 : vector<8x128xf32>
    %cst_77 = arith.constant 1.000000e+00 : f32
    %319 = vector.broadcast %cst_77 : f32 to vector<8x128xf32>
    %320 = arith.addf %319, %318 : vector<8x128xf32>
    %321 = arith.divf %319, %320 : vector<8x128xf32>
    %322 = vector.extract_strided_slice %309 {offsets = [0, 256], sizes = [8, 128], strides = [1, 1]} : vector<8x512xf32> to vector<8x128xf32>
    %323 = math.tanh %322 : vector<8x128xf32>
    %324 = vector.extract_strided_slice %309 {offsets = [0, 384], sizes = [8, 128], strides = [1, 1]} : vector<8x512xf32> to vector<8x128xf32>
    %325 = arith.negf %324 : vector<8x128xf32>
    %326 = math.exp %325 : vector<8x128xf32>
    %cst_78 = arith.constant 1.000000e+00 : f32
    %327 = vector.broadcast %cst_78 : f32 to vector<8x128xf32>
    %328 = arith.addf %327, %326 : vector<8x128xf32>
    %329 = arith.divf %327, %328 : vector<8x128xf32>
    %330 = arith.mulf %321, %272 : vector<8x128xf32>
    %331 = arith.mulf %315, %323 : vector<8x128xf32>
    %332 = arith.addf %330, %331 : vector<8x128xf32>
    %333 = math.tanh %332 : vector<8x128xf32>
    %334 = arith.mulf %329, %333 : vector<8x128xf32>
    %335 = tpu.concatenate %334, %303 in 1 : vector<8x128xf32>, vector<8x128xf32> -> vector<8x256xf32>
    %c0_79 = arith.constant 0 : index
    %c0_80 = arith.constant 0 : index
    %336 = vector.load %arg2[%c0_79, %c0_80] : memref<256x512xf32, #tpu.memory_space<vmem>>, vector<256x512xf32>
    %cst_81 = arith.constant dense<0.000000e+00> : vector<8x512xf32>
    %337 = tpu.matmul %335, %336, %cst_81 {dimension_numbers = #tpu.dot_dimension_numbers<[1], [0], [0], [1], [0, 0, 1, 1], [], []>} : vector<8x256xf32>, vector<256x512xf32>, vector<8x512xf32> -> vector<8x512xf32>
    %338 = arith.addf %337, %2 : vector<8x512xf32>
    %339 = vector.extract_strided_slice %338 {offsets = [0, 0], sizes = [8, 128], strides = [1, 1]} : vector<8x512xf32> to vector<8x128xf32>
    %340 = arith.negf %339 : vector<8x128xf32>
    %341 = math.exp %340 : vector<8x128xf32>
    %cst_82 = arith.constant 1.000000e+00 : f32
    %342 = vector.broadcast %cst_82 : f32 to vector<8x128xf32>
    %343 = arith.addf %342, %341 : vector<8x128xf32>
    %344 = arith.divf %342, %343 : vector<8x128xf32>
    %345 = vector.extract_strided_slice %338 {offsets = [0, 128], sizes = [8, 128], strides = [1, 1]} : vector<8x512xf32> to vector<8x128xf32>
    %346 = arith.negf %345 : vector<8x128xf32>
    %347 = math.exp %346 : vector<8x128xf32>
    %cst_83 = arith.constant 1.000000e+00 : f32
    %348 = vector.broadcast %cst_83 : f32 to vector<8x128xf32>
    %349 = arith.addf %348, %347 : vector<8x128xf32>
    %350 = arith.divf %348, %349 : vector<8x128xf32>
    %351 = vector.extract_strided_slice %338 {offsets = [0, 256], sizes = [8, 128], strides = [1, 1]} : vector<8x512xf32> to vector<8x128xf32>
    %352 = math.tanh %351 : vector<8x128xf32>
    %353 = vector.extract_strided_slice %338 {offsets = [0, 384], sizes = [8, 128], strides = [1, 1]} : vector<8x512xf32> to vector<8x128xf32>
    %354 = arith.negf %353 : vector<8x128xf32>
    %355 = math.exp %354 : vector<8x128xf32>
    %cst_84 = arith.constant 1.000000e+00 : f32
    %356 = vector.broadcast %cst_84 : f32 to vector<8x128xf32>
    %357 = arith.addf %356, %355 : vector<8x128xf32>
    %358 = arith.divf %356, %357 : vector<8x128xf32>
    %359 = arith.mulf %350, %301 : vector<8x128xf32>
    %360 = arith.mulf %344, %352 : vector<8x128xf32>
    %361 = arith.addf %359, %360 : vector<8x128xf32>
    %362 = math.tanh %361 : vector<8x128xf32>
    %363 = arith.mulf %358, %362 : vector<8x128xf32>
    %c6_i32 = arith.constant 6 : i32
    %364 = arith.index_cast %c6_i32 : i32 to index
    %c0_85 = arith.constant 0 : index
    %c0_86 = arith.constant 0 : index
    %365 = vector.load %arg0[%364, %c0_85, %c0_86] : memref<8x8x512xf32, #tpu.memory_space<vmem>>, vector<1x8x512xf32>
    %366 = vector.shape_cast %365 : vector<1x8x512xf32> to vector<8x512xf32>
    %c0_87 = arith.constant 0 : index
    %c0_88 = arith.constant 0 : index
    %367 = vector.load %arg1[%c0_87, %c0_88] : memref<128x512xf32, #tpu.memory_space<vmem>>, vector<128x512xf32>
    %cst_89 = arith.constant dense<0.000000e+00> : vector<8x512xf32>
    %368 = tpu.matmul %334, %367, %cst_89 {dimension_numbers = #tpu.dot_dimension_numbers<[1], [0], [0], [1], [0, 0, 1, 1], [], []>} : vector<8x128xf32>, vector<128x512xf32>, vector<8x512xf32> -> vector<8x512xf32>
    %369 = arith.addf %366, %368 : vector<8x512xf32>
    %370 = vector.extract_strided_slice %369 {offsets = [0, 0], sizes = [8, 128], strides = [1, 1]} : vector<8x512xf32> to vector<8x128xf32>
    %371 = arith.negf %370 : vector<8x128xf32>
    %372 = math.exp %371 : vector<8x128xf32>
    %cst_90 = arith.constant 1.000000e+00 : f32
    %373 = vector.broadcast %cst_90 : f32 to vector<8x128xf32>
    %374 = arith.addf %373, %372 : vector<8x128xf32>
    %375 = arith.divf %373, %374 : vector<8x128xf32>
    %376 = vector.extract_strided_slice %369 {offsets = [0, 128], sizes = [8, 128], strides = [1, 1]} : vector<8x512xf32> to vector<8x128xf32>
    %377 = arith.negf %376 : vector<8x128xf32>
    %378 = math.exp %377 : vector<8x128xf32>
    %cst_91 = arith.constant 1.000000e+00 : f32
    %379 = vector.broadcast %cst_91 : f32 to vector<8x128xf32>
    %380 = arith.addf %379, %378 : vector<8x128xf32>
    %381 = arith.divf %379, %380 : vector<8x128xf32>
    %382 = vector.extract_strided_slice %369 {offsets = [0, 256], sizes = [8, 128], strides = [1, 1]} : vector<8x512xf32> to vector<8x128xf32>
    %383 = math.tanh %382 : vector<8x128xf32>
    %384 = vector.extract_strided_slice %369 {offsets = [0, 384], sizes = [8, 128], strides = [1, 1]} : vector<8x512xf32> to vector<8x128xf32>
    %385 = arith.negf %384 : vector<8x128xf32>
    %386 = math.exp %385 : vector<8x128xf32>
    %cst_92 = arith.constant 1.000000e+00 : f32
    %387 = vector.broadcast %cst_92 : f32 to vector<8x128xf32>
    %388 = arith.addf %387, %386 : vector<8x128xf32>
    %389 = arith.divf %387, %388 : vector<8x128xf32>
    %390 = arith.mulf %381, %332 : vector<8x128xf32>
    %391 = arith.mulf %375, %383 : vector<8x128xf32>
    %392 = arith.addf %390, %391 : vector<8x128xf32>
    %393 = math.tanh %392 : vector<8x128xf32>
    %394 = arith.mulf %389, %393 : vector<8x128xf32>
    %395 = tpu.concatenate %394, %363 in 1 : vector<8x128xf32>, vector<8x128xf32> -> vector<8x256xf32>
    %c0_93 = arith.constant 0 : index
    %c0_94 = arith.constant 0 : index
    %396 = vector.load %arg2[%c0_93, %c0_94] : memref<256x512xf32, #tpu.memory_space<vmem>>, vector<256x512xf32>
    %cst_95 = arith.constant dense<0.000000e+00> : vector<8x512xf32>
    %397 = tpu.matmul %395, %396, %cst_95 {dimension_numbers = #tpu.dot_dimension_numbers<[1], [0], [0], [1], [0, 0, 1, 1], [], []>} : vector<8x256xf32>, vector<256x512xf32>, vector<8x512xf32> -> vector<8x512xf32>
    %398 = arith.addf %397, %2 : vector<8x512xf32>
    %399 = vector.extract_strided_slice %398 {offsets = [0, 0], sizes = [8, 128], strides = [1, 1]} : vector<8x512xf32> to vector<8x128xf32>
    %400 = arith.negf %399 : vector<8x128xf32>
    %401 = math.exp %400 : vector<8x128xf32>
    %cst_96 = arith.constant 1.000000e+00 : f32
    %402 = vector.broadcast %cst_96 : f32 to vector<8x128xf32>
    %403 = arith.addf %402, %401 : vector<8x128xf32>
    %404 = arith.divf %402, %403 : vector<8x128xf32>
    %405 = vector.extract_strided_slice %398 {offsets = [0, 128], sizes = [8, 128], strides = [1, 1]} : vector<8x512xf32> to vector<8x128xf32>
    %406 = arith.negf %405 : vector<8x128xf32>
    %407 = math.exp %406 : vector<8x128xf32>
    %cst_97 = arith.constant 1.000000e+00 : f32
    %408 = vector.broadcast %cst_97 : f32 to vector<8x128xf32>
    %409 = arith.addf %408, %407 : vector<8x128xf32>
    %410 = arith.divf %408, %409 : vector<8x128xf32>
    %411 = vector.extract_strided_slice %398 {offsets = [0, 256], sizes = [8, 128], strides = [1, 1]} : vector<8x512xf32> to vector<8x128xf32>
    %412 = math.tanh %411 : vector<8x128xf32>
    %413 = vector.extract_strided_slice %398 {offsets = [0, 384], sizes = [8, 128], strides = [1, 1]} : vector<8x512xf32> to vector<8x128xf32>
    %414 = arith.negf %413 : vector<8x128xf32>
    %415 = math.exp %414 : vector<8x128xf32>
    %cst_98 = arith.constant 1.000000e+00 : f32
    %416 = vector.broadcast %cst_98 : f32 to vector<8x128xf32>
    %417 = arith.addf %416, %415 : vector<8x128xf32>
    %418 = arith.divf %416, %417 : vector<8x128xf32>
    %419 = arith.mulf %410, %361 : vector<8x128xf32>
    %420 = arith.mulf %404, %412 : vector<8x128xf32>
    %421 = arith.addf %419, %420 : vector<8x128xf32>
    %422 = math.tanh %421 : vector<8x128xf32>
    %423 = arith.mulf %418, %422 : vector<8x128xf32>
    %c7_i32 = arith.constant 7 : i32
    %424 = arith.index_cast %c7_i32 : i32 to index
    %c0_99 = arith.constant 0 : index
    %c0_100 = arith.constant 0 : index
    %425 = vector.load %arg0[%424, %c0_99, %c0_100] : memref<8x8x512xf32, #tpu.memory_space<vmem>>, vector<1x8x512xf32>
    %426 = vector.shape_cast %425 : vector<1x8x512xf32> to vector<8x512xf32>
    %c0_101 = arith.constant 0 : index
    %c0_102 = arith.constant 0 : index
    %427 = vector.load %arg1[%c0_101, %c0_102] : memref<128x512xf32, #tpu.memory_space<vmem>>, vector<128x512xf32>
    %cst_103 = arith.constant dense<0.000000e+00> : vector<8x512xf32>
    %428 = tpu.matmul %394, %427, %cst_103 {dimension_numbers = #tpu.dot_dimension_numbers<[1], [0], [0], [1], [0, 0, 1, 1], [], []>} : vector<8x128xf32>, vector<128x512xf32>, vector<8x512xf32> -> vector<8x512xf32>
    %429 = arith.addf %426, %428 : vector<8x512xf32>
    %430 = vector.extract_strided_slice %429 {offsets = [0, 0], sizes = [8, 128], strides = [1, 1]} : vector<8x512xf32> to vector<8x128xf32>
    %431 = arith.negf %430 : vector<8x128xf32>
    %432 = math.exp %431 : vector<8x128xf32>
    %cst_104 = arith.constant 1.000000e+00 : f32
    %433 = vector.broadcast %cst_104 : f32 to vector<8x128xf32>
    %434 = arith.addf %433, %432 : vector<8x128xf32>
    %435 = arith.divf %433, %434 : vector<8x128xf32>
    %436 = vector.extract_strided_slice %429 {offsets = [0, 128], sizes = [8, 128], strides = [1, 1]} : vector<8x512xf32> to vector<8x128xf32>
    %437 = arith.negf %436 : vector<8x128xf32>
    %438 = math.exp %437 : vector<8x128xf32>
    %cst_105 = arith.constant 1.000000e+00 : f32
    %439 = vector.broadcast %cst_105 : f32 to vector<8x128xf32>
    %440 = arith.addf %439, %438 : vector<8x128xf32>
    %441 = arith.divf %439, %440 : vector<8x128xf32>
    %442 = vector.extract_strided_slice %429 {offsets = [0, 256], sizes = [8, 128], strides = [1, 1]} : vector<8x512xf32> to vector<8x128xf32>
    %443 = math.tanh %442 : vector<8x128xf32>
    %444 = vector.extract_strided_slice %429 {offsets = [0, 384], sizes = [8, 128], strides = [1, 1]} : vector<8x512xf32> to vector<8x128xf32>
    %445 = arith.negf %444 : vector<8x128xf32>
    %446 = math.exp %445 : vector<8x128xf32>
    %cst_106 = arith.constant 1.000000e+00 : f32
    %447 = vector.broadcast %cst_106 : f32 to vector<8x128xf32>
    %448 = arith.addf %447, %446 : vector<8x128xf32>
    %449 = arith.divf %447, %448 : vector<8x128xf32>
    %450 = arith.mulf %441, %392 : vector<8x128xf32>
    %451 = arith.mulf %435, %443 : vector<8x128xf32>
    %452 = arith.addf %450, %451 : vector<8x128xf32>
    %453 = math.tanh %452 : vector<8x128xf32>
    %454 = arith.mulf %449, %453 : vector<8x128xf32>
    %455 = tpu.concatenate %454, %423 in 1 : vector<8x128xf32>, vector<8x128xf32> -> vector<8x256xf32>
    %c0_107 = arith.constant 0 : index
    %c0_108 = arith.constant 0 : index
    %456 = vector.load %arg2[%c0_107, %c0_108] : memref<256x512xf32, #tpu.memory_space<vmem>>, vector<256x512xf32>
    %cst_109 = arith.constant dense<0.000000e+00> : vector<8x512xf32>
    %457 = tpu.matmul %455, %456, %cst_109 {dimension_numbers = #tpu.dot_dimension_numbers<[1], [0], [0], [1], [0, 0, 1, 1], [], []>} : vector<8x256xf32>, vector<256x512xf32>, vector<8x512xf32> -> vector<8x512xf32>
    %458 = arith.addf %457, %2 : vector<8x512xf32>
    %459 = vector.extract_strided_slice %458 {offsets = [0, 0], sizes = [8, 128], strides = [1, 1]} : vector<8x512xf32> to vector<8x128xf32>
    %460 = arith.negf %459 : vector<8x128xf32>
    %461 = math.exp %460 : vector<8x128xf32>
    %cst_110 = arith.constant 1.000000e+00 : f32
    %462 = vector.broadcast %cst_110 : f32 to vector<8x128xf32>
    %463 = arith.addf %462, %461 : vector<8x128xf32>
    %464 = arith.divf %462, %463 : vector<8x128xf32>
    %465 = vector.extract_strided_slice %458 {offsets = [0, 128], sizes = [8, 128], strides = [1, 1]} : vector<8x512xf32> to vector<8x128xf32>
    %466 = arith.negf %465 : vector<8x128xf32>
    %467 = math.exp %466 : vector<8x128xf32>
    %cst_111 = arith.constant 1.000000e+00 : f32
    %468 = vector.broadcast %cst_111 : f32 to vector<8x128xf32>
    %469 = arith.addf %468, %467 : vector<8x128xf32>
    %470 = arith.divf %468, %469 : vector<8x128xf32>
    %471 = vector.extract_strided_slice %458 {offsets = [0, 256], sizes = [8, 128], strides = [1, 1]} : vector<8x512xf32> to vector<8x128xf32>
    %472 = math.tanh %471 : vector<8x128xf32>
    %473 = vector.extract_strided_slice %458 {offsets = [0, 384], sizes = [8, 128], strides = [1, 1]} : vector<8x512xf32> to vector<8x128xf32>
    %474 = arith.negf %473 : vector<8x128xf32>
    %475 = math.exp %474 : vector<8x128xf32>
    %cst_112 = arith.constant 1.000000e+00 : f32
    %476 = vector.broadcast %cst_112 : f32 to vector<8x128xf32>
    %477 = arith.addf %476, %475 : vector<8x128xf32>
    %478 = arith.divf %476, %477 : vector<8x128xf32>
    %479 = arith.mulf %470, %421 : vector<8x128xf32>
    %480 = arith.mulf %464, %472 : vector<8x128xf32>
    %481 = arith.addf %479, %480 : vector<8x128xf32>
    %482 = math.tanh %481 : vector<8x128xf32>
    %483 = arith.mulf %478, %482 : vector<8x128xf32>
    %c8_i32 = arith.constant 8 : i32
    %c0_113 = arith.constant 0 : index
    %c0_114 = arith.constant 0 : index
    %484 = vector.load %arg4[%c0_113, %c0_114] : memref<128x128xf32, #tpu.memory_space<vmem>>, vector<128x128xf32>
    %cst_115 = arith.constant dense<0.000000e+00> : vector<8x128xf32>
    %485 = tpu.matmul %483, %484, %cst_115 {dimension_numbers = #tpu.dot_dimension_numbers<[1], [0], [0], [1], [0, 0, 1, 1], [], []>} : vector<8x128xf32>, vector<128x128xf32>, vector<8x128xf32> -> vector<8x128xf32>
    %c0_116 = arith.constant 0 : index
    %c0_117 = arith.constant 0 : index
    %486 = vector.load %arg5[%c0_116, %c0_117] : memref<1x128xf32, #tpu.memory_space<vmem>>, vector<1x128xf32>
    %487 = vector.broadcast %486 : vector<1x128xf32> to vector<8x128xf32>
    %488 = arith.addf %485, %487 : vector<8x128xf32>
    %cst_118 = arith.constant 0.000000e+00 : f32
    %489 = vector.broadcast %cst_118 : f32 to vector<8x128xf32>
    %490 = arith.maximumf %488, %489 : vector<8x128xf32>
    %c0_119 = arith.constant 0 : index
    %c0_120 = arith.constant 0 : index
    %491 = vector.load %arg6[%c0_119, %c0_120] : memref<1x128xf32, #tpu.memory_space<vmem>>, vector<1x128xf32>
    %492 = vector.broadcast %491 : vector<1x128xf32> to vector<8x128xf32>
    %493 = arith.mulf %490, %492 : vector<8x128xf32>
    %cst_121 = arith.constant dense<0.000000e+00> : vector<8xf32>
    %494 = vector.multi_reduction <add>, %493, %cst_121 [1] : vector<8x128xf32> to vector<8xf32>
    %495 = vector.shape_cast %494 : vector<8xf32> to vector<8x1xf32>
    %c0_122 = arith.constant 0 : index
    %c0_123 = arith.constant 0 : index
    %496 = vector.load %arg7[%c0_122, %c0_123] : memref<1x1xf32, #tpu.memory_space<vmem>>, vector<1x1xf32>
    %497 = vector.broadcast %496 : vector<1x1xf32> to vector<8x1xf32>
    %498 = arith.addf %495, %497 : vector<8x1xf32>
    %c0_124 = arith.constant 0 : index
    %c0_125 = arith.constant 0 : index
    %499 = vector.load %arg8[%c0_124, %c0_125] : memref<8x1xf32, #tpu.memory_space<vmem>>, vector<8x1xf32>
    tpu.vector_store %arg8[%c0_124, %c0_125], %498 {strides = array<i32>} : memref<8x1xf32, #tpu.memory_space<vmem>>, vector<8x1xf32>,
    return
  }
}

</mosaic_0001>

<llo_original>
// kernel: lstm_model_forward.1
$region0: #{lstm_model_forward.1}
  #allocation0 [shape = 'u32[]', space=smem, size = 0x4, offset = 0x4, fixed_abs, tag = 'smem constant byte address 0x4 - core index']
  #allocation1 [shape = 'u32[144,128]{1,0:T(1,128)}', space=vmem, size = 0x12000, scoped, tag = 'internal scratch']
  #allocation2 [shape = 'f32[1,1]{1,0:T(1,128)S(1)}', space=vmem, size = 0x200, scoped, tag = 'scoped memory for lstm_model_forward.1']
  %s0 = inlined_call_operand.vmem [shape: f32[8,8,512], index: 0, kind: input, shape index: {}]
  %s1 = inlined_call_operand.hbm [shape: f32[128,512], index: 1, kind: input, shape index: {}]
  %s2 = inlined_call_operand.hbm [shape: f32[256,512], index: 2, kind: input, shape index: {}]
  %s3 = inlined_call_operand.vmem [shape: f32[1,512], index: 3, kind: input, shape index: {}]
  %s4 = inlined_call_operand.vmem [shape: f32[128,128], index: 4, kind: input, shape index: {}]
  %s5 = inlined_call_operand.vmem [shape: f32[1,128], index: 5, kind: input, shape index: {}]
  %s6 = inlined_call_operand.vmem [shape: f32[1,128], index: 6, kind: input, shape index: {}]
  %s7 = inlined_call_operand.<no memory space> [shape: f32[1,1], index: 7, kind: input, shape index: {}]
  %s8 = inlined_call_operand.vmem [shape: f32[8,1], index: 8, kind: output, shape index: {}]
  %s9 = sld [smem:[#allocation0]]
  $region50: #{lstm_model_forward.1} parent=0
    _
  %s11 = ssub.s32 1, %s9
  %s12 = scalar_select 0, %s11, %s9
  %v13 = vstv %s7
  %14 = vst [vmem:[#allocation2] sm:$0x1] %v13
  $region1: #{lstm_model_forward.1} parent=0
    #allocation3 [shape = 'u8[262144]{0}', space=vmem, size = 0x40000, scoped, tag = 'input window, operand 1, single buffered']
    #allocation4 [shape = 's32[1]{0}', space=sflag, size = 0x4, scoped, tag = 'scoped memory for lstm_model_forward.1']
    #allocation5 [shape = 'u8[524288]{0}', space=vmem, size = 0x80000, scoped, tag = 'input window, operand 2, single buffered']
    #allocation6 [shape = 's32[1]{0}', space=sflag, size = 0x4, scoped, tag = 'scoped memory for lstm_model_forward.1']
    %15 = vsyncpa [#allocation4], 0
    %16 = vsyncpa [#allocation6], 0
    // Predicated region
    $region2: #{lstm_model_forward.1} parent=1 // pred_check
      _
    $region3: #{lstm_model_forward.1} parent=1 // pred_check_branch
      %18 = sbr.rel (0) target = $region5
    $region4: #{lstm_model_forward.1} parent=1 // pred_region
      _
    $region5: #{lstm_model_forward.1} parent=1 // pred_fallthru
      _
    // Predicated region
    $region6: #{lstm_model_forward.1} parent=1 // pred_check
      _
    $region7: #{lstm_model_forward.1} parent=1 // pred_check_branch
      %20 = sbr.rel (0) target = $region9
    $region8: #{lstm_model_forward.1} parent=1 // pred_region
      %s22 = ssub.s32 8192, 8192
      %23 = vsyncadd [#allocation4], %s22
      %s24 = sshll.u32 [#allocation3], 4
      %s25 = int_to_ptr.vmem [resolvable:$true] %s24
      %30 = dma.hbm_to_vmem [thread:$0]  %s1, 8192, %s25, [#allocation4], 512, 512, 32
    $region9: #{lstm_model_forward.1} parent=1 // pred_fallthru
      _
    // Predicated region
    $region10: #{lstm_model_forward.1} parent=1 // pred_check
      _
    $region11: #{lstm_model_forward.1} parent=1 // pred_check_branch
      %32 = sbr.rel (0) target = $region13
    $region12: #{lstm_model_forward.1} parent=1 // pred_region
      %s34 = ssub.s32 16384, 16384
      %35 = vsyncadd [#allocation6], %s34
      %s36 = sshll.u32 [#allocation5], 4
      %s37 = int_to_ptr.vmem [resolvable:$true] %s36
      %42 = dma.hbm_to_vmem [thread:$0]  %s2, 16384, %s37, [#allocation6], 512, 512, 32
    $region13: #{lstm_model_forward.1} parent=1 // pred_fallthru
      _
    // Predicated region
    $region14: #{lstm_model_forward.1} parent=1 // pred_check
      _
    $region15: #{lstm_model_forward.1} parent=1 // pred_check_branch
      %44 = sbr.rel (0) target = $region17
    $region16: #{lstm_model_forward.1} parent=1 // pred_region
      _
    $region17: #{lstm_model_forward.1} parent=1 // pred_fallthru
      _
    // Predicated region
    $region18: #{lstm_model_forward.1} parent=1 // pred_check
      _
    $region19: #{lstm_model_forward.1} parent=1 // pred_check_branch
      %46 = sbr.rel (0) target = $region21
    $region20: #{lstm_model_forward.1} parent=1 // pred_region
      _
    $region21: #{lstm_model_forward.1} parent=1 // pred_fallthru
      _
    // Predicated region
    $region22: #{lstm_model_forward.1} parent=1 // pred_check
      _
    $region23: #{lstm_model_forward.1} parent=1 // pred_check_branch
      %48 = sbr.rel (0) target = $region25
    $region24: #{lstm_model_forward.1} parent=1 // pred_region
      _
    $region25: #{lstm_model_forward.1} parent=1 // pred_fallthru
      _
    // Predicated region
    $region26: #{lstm_model_forward.1} parent=1 // pred_check
      _
    $region27: #{lstm_model_forward.1} parent=1 // pred_check_branch
      %50 = sbr.rel (0) target = $region29
    $region28: #{lstm_model_forward.1} parent=1 // pred_region
      _
    $region29: #{lstm_model_forward.1} parent=1 // pred_fallthru
      _
    // Predicated region
    $region30: #{lstm_model_forward.1} parent=1 // pred_check
      _
    $region31: #{lstm_model_forward.1} parent=1 // pred_check_branch
      %52 = sbr.rel (0) target = $region33
    $region32: #{lstm_model_forward.1} parent=1 // pred_region
      _
    $region33: #{lstm_model_forward.1} parent=1 // pred_fallthru
      _
    // Predicated region
    $region34: #{lstm_model_forward.1} parent=1 // pred_check
      _
    $region35: #{lstm_model_forward.1} parent=1 // pred_check_branch
      %54 = sbr.rel (0) target = $region37
    $region36: #{lstm_model_forward.1} parent=1 // pred_region
      %55 = dma.done [#allocation4], 8192
    $region37: #{lstm_model_forward.1} parent=1 // pred_fallthru
      _
    // Predicated region
    $region38: #{lstm_model_forward.1} parent=1 // pred_check
      _
    $region39: #{lstm_model_forward.1} parent=1 // pred_check_branch
      %57 = sbr.rel (0) target = $region41
    $region40: #{lstm_model_forward.1} parent=1 // pred_region
      %58 = dma.done [#allocation6], 16384
    $region41: #{lstm_model_forward.1} parent=1 // pred_fallthru
      _
    %v59 = vld [vmem:[%s3] sm:$0xf]
    %v61 = vlaneseq
    %v62 = vshrl.u32 %v61, 7
    %v63 = vsub.s32 0, %v62
    %v64 = vrot.slane %v59, %v63
    %v65 = vlaneseq
    %v66 = vshrl.u32 %v65, 7
    %v67 = vsub.s32 1, %v66
    %v68 = vrot.slane %v59, %v67
    %v69 = vlaneseq
    %v70 = vshrl.u32 %v69, 7
    %v71 = vsub.s32 2, %v70
    %v72 = vrot.slane %v59, %v71
    %v73 = vlaneseq
    %v74 = vshrl.u32 %v73, 7
    %v75 = vsub.s32 3, %v74
    %v76 = vrot.slane %v59, %v75
    %v81 = vld [vmem:[%s0] sm:$0xff]
    %v82 = vld [vmem:[%s0 + $0x8] sm:$0xff]
    %v83 = vld [vmem:[%s0 + $0x10] sm:$0xff]
    %v84 = vld [vmem:[%s0 + $0x18] sm:$0xff]
    %v85 = vld [vmem:[#allocation3] sm:$0xff]
    %v86 = vld [vmem:[#allocation3 + $0x8] sm:$0xff]
    %v87 = vld [vmem:[#allocation3 + $0x10] sm:$0xff]
    %v88 = vld [vmem:[#allocation3 + $0x18] sm:$0xff]
    %v89 = vld [vmem:[#allocation3 + $0x20] sm:$0xff]
    %v90 = vld [vmem:[#allocation3 + $0x28] sm:$0xff]
    %v91 = vld [vmem:[#allocation3 + $0x30] sm:$0xff]
    %v92 = vld [vmem:[#allocation3 + $0x38] sm:$0xff]
    %v93 = vld [vmem:[#allocation3 + $0x40] sm:$0xff]
    %v94 = vld [vmem:[#allocation3 + $0x48] sm:$0xff]
    %v95 = vld [vmem:[#allocation3 + $0x50] sm:$0xff]
    %v96 = vld [vmem:[#allocation3 + $0x58] sm:$0xff]
    %v97 = vld [vmem:[#allocation3 + $0x60] sm:$0xff]
    %v98 = vld [vmem:[#allocation3 + $0x68] sm:$0xff]
    %v99 = vld [vmem:[#allocation3 + $0x70] sm:$0xff]
    %v100 = vld [vmem:[#allocation3 + $0x78] sm:$0xff]
    %v101 = vld [vmem:[#allocation3 + $0x80] sm:$0xff]
    %v102 = vld [vmem:[#allocation3 + $0x88] sm:$0xff]
    %v103 = vld [vmem:[#allocation3 + $0x90] sm:$0xff]
    %v104 = vld [vmem:[#allocation3 + $0x98] sm:$0xff]
    %v105 = vld [vmem:[#allocation3 + $0xa0] sm:$0xff]
    %v106 = vld [vmem:[#allocation3 + $0xa8] sm:$0xff]
    %v107 = vld [vmem:[#allocation3 + $0xb0] sm:$0xff]
    %v108 = vld [vmem:[#allocation3 + $0xb8] sm:$0xff]
    %v109 = vld [vmem:[#allocation3 + $0xc0] sm:$0xff]
    %v110 = vld [vmem:[#allocation3 + $0xc8] sm:$0xff]
    %v111 = vld [vmem:[#allocation3 + $0xd0] sm:$0xff]
    %v112 = vld [vmem:[#allocation3 + $0xd8] sm:$0xff]
    %v113 = vld [vmem:[#allocation3 + $0xe0] sm:$0xff]
    %v114 = vld [vmem:[#allocation3 + $0xe8] sm:$0xff]
    %v115 = vld [vmem:[#allocation3 + $0xf0] sm:$0xff]
    %v116 = vld [vmem:[#allocation3 + $0xf8] sm:$0xff]
    %v117 = vld [vmem:[#allocation3 + $0x100] sm:$0xff]
    %v118 = vld [vmem:[#allocation3 + $0x108] sm:$0xff]
    %v119 = vld [vmem:[#allocation3 + $0x110] sm:$0xff]
    %v120 = vld [vmem:[#allocation3 + $0x118] sm:$0xff]
    %v121 = vld [vmem:[#allocation3 + $0x120] sm:$0xff]
    %v122 = vld [vmem:[#allocation3 + $0x128] sm:$0xff]
    %v123 = vld [vmem:[#allocation3 + $0x130] sm:$0xff]
    %v124 = vld [vmem:[#allocation3 + $0x138] sm:$0xff]
    %v125 = vld [vmem:[#allocation3 + $0x140] sm:$0xff]
    %v126 = vld [vmem:[#allocation3 + $0x148] sm:$0xff]
    %v127 = vld [vmem:[#allocation3 + $0x150] sm:$0xff]
    %v128 = vld [vmem:[#allocation3 + $0x158] sm:$0xff]
    %v129 = vld [vmem:[#allocation3 + $0x160] sm:$0xff]
    %v130 = vld [vmem:[#allocation3 + $0x168] sm:$0xff]
    %v131 = vld [vmem:[#allocation3 + $0x170] sm:$0xff]
    %v132 = vld [vmem:[#allocation3 + $0x178] sm:$0xff]
    %v133 = vld [vmem:[#allocation3 + $0x180] sm:$0xff]
    %v134 = vld [vmem:[#allocation3 + $0x188] sm:$0xff]
    %v135 = vld [vmem:[#allocation3 + $0x190] sm:$0xff]
    %v136 = vld [vmem:[#allocation3 + $0x198] sm:$0xff]
    %v137 = vld [vmem:[#allocation3 + $0x1a0] sm:$0xff]
    %v138 = vld [vmem:[#allocation3 + $0x1a8] sm:$0xff]
    %v139 = vld [vmem:[#allocation3 + $0x1b0] sm:$0xff]
    %v140 = vld [vmem:[#allocation3 + $0x1b8] sm:$0xff]
    %v141 = vld [vmem:[#allocation3 + $0x1c0] sm:$0xff]
    %v142 = vld [vmem:[#allocation3 + $0x1c8] sm:$0xff]
    %v143 = vld [vmem:[#allocation3 + $0x1d0] sm:$0xff]
    %v144 = vld [vmem:[#allocation3 + $0x1d8] sm:$0xff]
    %v145 = vld [vmem:[#allocation3 + $0x1e0] sm:$0xff]
    %v146 = vld [vmem:[#allocation3 + $0x1e8] sm:$0xff]
    %v147 = vld [vmem:[#allocation3 + $0x1f0] sm:$0xff]
    %v148 = vld [vmem:[#allocation3 + $0x1f8] sm:$0xff]
    %149 = vmatprep.subr.mxu0 %v146
    %150 = vmatpush1.msra.mxu0 %v145
    %151 = vmatprep.subr.mxu0 %v142
    %152 = vmatpush1.msra.mxu0 %v141
    %153 = vmatprep.subr.mxu0 %v138
    %154 = vmatpush1.msra.mxu0 %v137
    %155 = vmatprep.subr.mxu0 %v134
    %156 = vmatpush1.msra.mxu0 %v133
    %157 = vmatprep.subr.mxu0 %v130
    %158 = vmatpush1.msra.mxu0 %v129
    %159 = vmatprep.subr.mxu0 %v126
    %160 = vmatpush1.msra.mxu0 %v125
    %161 = vmatprep.subr.mxu0 %v122
    %162 = vmatpush1.msra.mxu0 %v121
    %163 = vmatprep.subr.mxu0 %v118
    %164 = vmatpush1.msra.mxu0 %v117
    %165 = vmatprep.subr.mxu0 %v114
    %166 = vmatpush1.msra.mxu0 %v113
    %167 = vmatprep.subr.mxu0 %v110
    %168 = vmatpush1.msra.mxu0 %v109
    %169 = vmatprep.subr.mxu0 %v106
    %170 = vmatpush1.msra.mxu0 %v105
    %171 = vmatprep.subr.mxu0 %v102
    %172 = vmatpush1.msra.mxu0 %v101
    %173 = vmatprep.subr.mxu0 %v98
    %174 = vmatpush1.msra.mxu0 %v97
    %175 = vmatprep.subr.mxu0 %v94
    %176 = vmatpush1.msra.mxu0 %v93
    %177 = vmatprep.subr.mxu0 %v90
    %178 = vmatpush1.msra.mxu0 %v89
    %179 = vmatprep.subr.mxu0 %v86
    %180 = vmatpush1.msra.mxu0 %v85
    %181 = vmatprep.subr.mxu0 0.0
    %182 = vmatpush2.msra.mxu0 0.0
    %183 = vmatprep.subr.mxu0 0.0
    %184 = vmatpush2.msra.mxu0 0.0
    %185 = vmatprep.subr.mxu0 0.0
    %186 = vmatpush2.msra.mxu0 0.0
    %187 = vmatprep.subr.mxu0 0.0
    %188 = vmatpush2.msra.mxu0 0.0
    %189 = vmatprep.subr.mxu0 0.0
    %190 = vmatpush2.msra.mxu0 0.0
    %191 = vmatprep.subr.mxu0 0.0
    %192 = vmatpush2.msra.mxu0 0.0
    %193 = vmatprep.subr.mxu0 0.0
    %194 = vmatpush2.msra.mxu0 0.0
    %195 = vmatprep.subr.mxu0 0.0
    %196 = vmatpush2.msra.mxu0 0.0
    %197 = vmatprep.subr.mxu0 0.0
    %198 = vmatpush2.msra.mxu0 0.0
    %199 = vmatprep.subr.mxu0 0.0
    %200 = vmatpush2.msra.mxu0 0.0
    %201 = vmatprep.subr.mxu0 0.0
    %202 = vmatpush2.msra.mxu0 0.0
    %203 = vmatprep.subr.mxu0 0.0
    %204 = vmatpush2.msra.mxu0 0.0
    %205 = vmatprep.subr.mxu0 0.0
    %206 = vmatpush2.msra.mxu0 0.0
    %207 = vmatprep.subr.mxu0 0.0
    %208 = vmatpush2.msra.mxu0 0.0
    %209 = vmatprep.subr.mxu0 0.0
    %210 = vmatpush2.msra.mxu0 0.0
    %211 = vmatprep.subr.mxu0 0.0
    %212 = vmatpush2.msra.mxu0 0.0
    %213 = vmatprep.mubr.f32.mxu0 0.0
    %214 = vmatmul.mubr.f32.gmra.mxu0 0.0
    %v215 = vpop.f32.mrf.mxu0
    %v216 = vadd.f32 0.0, %v215
    %v217 = vpop.f32.mrf.mxu0
    %v218 = vadd.f32 0.0, %v217
    %219 = vdwg.mxu0
    %220 = vmatprep.subr.mxu0 %v148
    %221 = vmatpush1.msra.mxu0 %v147
    %222 = vmatprep.subr.mxu0 %v144
    %223 = vmatpush1.msra.mxu0 %v143
    %224 = vmatprep.subr.mxu0 %v140
    %225 = vmatpush1.msra.mxu0 %v139
    %226 = vmatprep.subr.mxu0 %v136
    %227 = vmatpush1.msra.mxu0 %v135
    %228 = vmatprep.subr.mxu0 %v132
    %229 = vmatpush1.msra.mxu0 %v131
    %230 = vmatprep.subr.mxu0 %v128
    %231 = vmatpush1.msra.mxu0 %v127
    %232 = vmatprep.subr.mxu0 %v124
    %233 = vmatpush1.msra.mxu0 %v123
    %234 = vmatprep.subr.mxu0 %v120
    %235 = vmatpush1.msra.mxu0 %v119
    %236 = vmatprep.subr.mxu0 %v116
    %237 = vmatpush1.msra.mxu0 %v115
    %238 = vmatprep.subr.mxu0 %v112
    %239 = vmatpush1.msra.mxu0 %v111
    %240 = vmatprep.subr.mxu0 %v108
    %241 = vmatpush1.msra.mxu0 %v107
    %242 = vmatprep.subr.mxu0 %v104
    %243 = vmatpush1.msra.mxu0 %v103
    %244 = vmatprep.subr.mxu0 %v100
    %245 = vmatpush1.msra.mxu0 %v99
    %246 = vmatprep.subr.mxu0 %v96
    %247 = vmatpush1.msra.mxu0 %v95
    %248 = vmatprep.subr.mxu0 %v92
    %249 = vmatpush1.msra.mxu0 %v91
    %250 = vmatprep.subr.mxu0 %v88
    %251 = vmatpush1.msra.mxu0 %v87
    %252 = vmatprep.subr.mxu0 0.0
    %253 = vmatpush2.msra.mxu0 0.0
    %254 = vmatprep.subr.mxu0 0.0
    %255 = vmatpush2.msra.mxu0 0.0
    %256 = vmatprep.subr.mxu0 0.0
    %257 = vmatpush2.msra.mxu0 0.0
    %258 = vmatprep.subr.mxu0 0.0
    %259 = vmatpush2.msra.mxu0 0.0
    %260 = vmatprep.subr.mxu0 0.0
    %261 = vmatpush2.msra.mxu0 0.0
    %262 = vmatprep.subr.mxu0 0.0
    %263 = vmatpush2.msra.mxu0 0.0
    %264 = vmatprep.subr.mxu0 0.0
    %265 = vmatpush2.msra.mxu0 0.0
    %266 = vmatprep.subr.mxu0 0.0
    %267 = vmatpush2.msra.mxu0 0.0
    %268 = vmatprep.subr.mxu0 0.0
    %269 = vmatpush2.msra.mxu0 0.0
    %270 = vmatprep.subr.mxu0 0.0
    %271 = vmatpush2.msra.mxu0 0.0
    %272 = vmatprep.subr.mxu0 0.0
    %273 = vmatpush2.msra.mxu0 0.0
    %274 = vmatprep.subr.mxu0 0.0
    %275 = vmatpush2.msra.mxu0 0.0
    %276 = vmatprep.subr.mxu0 0.0
    %277 = vmatpush2.msra.mxu0 0.0
    %278 = vmatprep.subr.mxu0 0.0
    %279 = vmatpush2.msra.mxu0 0.0
    %280 = vmatprep.subr.mxu0 0.0
    %281 = vmatpush2.msra.mxu0 0.0
    %282 = vmatprep.subr.mxu0 0.0
    %283 = vmatpush2.msra.mxu0 0.0
    %284 = vmatprep.mubr.f32.mxu0 0.0
    %285 = vmatmul.mubr.f32.gmra.mxu0 0.0
    %v286 = vpop.f32.mrf.mxu0
    %v287 = vadd.f32 0.0, %v286
    %v288 = vpop.f32.mrf.mxu0
    %v289 = vadd.f32 0.0, %v288
    %290 = vdwg.mxu0
    %v291 = vadd.f32 %v81, %v216
    %v292 = vadd.f32 %v82, %v218
    %v293 = vadd.f32 %v83, %v287
    %v294 = vadd.f32 %v84, %v289
    %v295 = vxor.u32 %v291, 2147483648
    %v296 = vmul.f32 %v295, 1.442695
    %v297 = vpow.pop %v296
    %v298 = vadd.f32 %v297, 1.0
    %v299 = vrcp.pop %v298
    %v300 = vmul.f32 1.0, %v299
    %v301 = vxor.u32 %v292, 2147483648
    %v302 = vmul.f32 %v301, 1.442695
    %v303 = vpow.pop %v302
    %v304 = vadd.f32 %v303, 1.0
    %v305 = vrcp.pop %v304
    %v306 = vmul.f32 1.0, %v305
    %v307 = vtanh.pop %v293
    %v308 = vxor.u32 %v294, 2147483648
    %v309 = vmul.f32 %v308, 1.442695
    %v310 = vpow.pop %v309
    %v311 = vadd.f32 %v310, 1.0
    %v312 = vrcp.pop %v311
    %v313 = vmul.f32 1.0, %v312
    %v314 = vmul.f32 %v306, 0.0
    %v315 = vmul.f32 %v300, %v307
    %v316 = vadd.f32 %v314, %v315
    %v317 = vtanh.pop %v316
    %v318 = vmul.f32 %v313, %v317
    %v319 = vld [vmem:[#allocation5] sm:$0xff]
    %v320 = vld [vmem:[#allocation5 + $0x8] sm:$0xff]
    %v321 = vld [vmem:[#allocation5 + $0x10] sm:$0xff]
    %v322 = vld [vmem:[#allocation5 + $0x18] sm:$0xff]
    %v323 = vld [vmem:[#allocation5 + $0x20] sm:$0xff]
    %v324 = vld [vmem:[#allocation5 + $0x28] sm:$0xff]
    %v325 = vld [vmem:[#allocation5 + $0x30] sm:$0xff]
    %v326 = vld [vmem:[#allocation5 + $0x38] sm:$0xff]
    %v327 = vld [vmem:[#allocation5 + $0x40] sm:$0xff]
    %v328 = vld [vmem:[#allocation5 + $0x48] sm:$0xff]
    %v329 = vld [vmem:[#allocation5 + $0x50] sm:$0xff]
    %v330 = vld [vmem:[#allocation5 + $0x58] sm:$0xff]
    %v331 = vld [vmem:[#allocation5 + $0x60] sm:$0xff]
    %v332 = vld [vmem:[#allocation5 + $0x68] sm:$0xff]
    %v333 = vld [vmem:[#allocation5 + $0x70] sm:$0xff]
    %v334 = vld [vmem:[#allocation5 + $0x78] sm:$0xff]
    %v335 = vld [vmem:[#allocation5 + $0x80] sm:$0xff]
    %v336 = vld [vmem:[#allocation5 + $0x88] sm:$0xff]
    %v337 = vld [vmem:[#allocation5 + $0x90] sm:$0xff]
    %v338 = vld [vmem:[#allocation5 + $0x98] sm:$0xff]
    %v339 = vld [vmem:[#allocation5 + $0xa0] sm:$0xff]
    %v340 = vld [vmem:[#allocation5 + $0xa8] sm:$0xff]
    %v341 = vld [vmem:[#allocation5 + $0xb0] sm:$0xff]
    %v342 = vld [vmem:[#allocation5 + $0xb8] sm:$0xff]
    %v343 = vld [vmem:[#allocation5 + $0xc0] sm:$0xff]
    %v344 = vld [vmem:[#allocation5 + $0xc8] sm:$0xff]
    %v345 = vld [vmem:[#allocation5 + $0xd0] sm:$0xff]
    %v346 = vld [vmem:[#allocation5 + $0xd8] sm:$0xff]
    %v347 = vld [vmem:[#allocation5 + $0xe0] sm:$0xff]
    %v348 = vld [vmem:[#allocation5 + $0xe8] sm:$0xff]
    %v349 = vld [vmem:[#allocation5 + $0xf0] sm:$0xff]
    %v350 = vld [vmem:[#allocation5 + $0xf8] sm:$0xff]
    %v351 = vld [vmem:[#allocation5 + $0x100] sm:$0xff]
    %v352 = vld [vmem:[#allocation5 + $0x108] sm:$0xff]
    %v353 = vld [vmem:[#allocation5 + $0x110] sm:$0xff]
    %v354 = vld [vmem:[#allocation5 + $0x118] sm:$0xff]
    %v355 = vld [vmem:[#allocation5 + $0x120] sm:$0xff]
    %v356 = vld [vmem:[#allocation5 + $0x128] sm:$0xff]
    %v357 = vld [vmem:[#allocation5 + $0x130] sm:$0xff]
    %v358 = vld [vmem:[#allocation5 + $0x138] sm:$0xff]
    %v359 = vld [vmem:[#allocation5 + $0x140] sm:$0xff]
    %v360 = vld [vmem:[#allocation5 + $0x148] sm:$0xff]
    %v361 = vld [vmem:[#allocation5 + $0x150] sm:$0xff]
    %v362 = vld [vmem:[#allocation5 + $0x158] sm:$0xff]
    %v363 = vld [vmem:[#allocation5 + $0x160] sm:$0xff]
    %v364 = vld [vmem:[#allocation5 + $0x168] sm:$0xff]
    %v365 = vld [vmem:[#allocation5 + $0x170] sm:$0xff]
    %v366 = vld [vmem:[#allocation5 + $0x178] sm:$0xff]
    %v367 = vld [vmem:[#allocation5 + $0x180] sm:$0xff]
    %v368 = vld [vmem:[#allocation5 + $0x188] sm:$0xff]
    %v369 = vld [vmem:[#allocation5 + $0x190] sm:$0xff]
    %v370 = vld [vmem:[#allocation5 + $0x198] sm:$0xff]
    %v371 = vld [vmem:[#allocation5 + $0x1a0] sm:$0xff]
    %v372 = vld [vmem:[#allocation5 + $0x1a8] sm:$0xff]
    %v373 = vld [vmem:[#allocation5 + $0x1b0] sm:$0xff]
    %v374 = vld [vmem:[#allocation5 + $0x1b8] sm:$0xff]
    %v375 = vld [vmem:[#allocation5 + $0x1c0] sm:$0xff]
    %v376 = vld [vmem:[#allocation5 + $0x1c8] sm:$0xff]
    %v377 = vld [vmem:[#allocation5 + $0x1d0] sm:$0xff]
    %v378 = vld [vmem:[#allocation5 + $0x1d8] sm:$0xff]
    %v379 = vld [vmem:[#allocation5 + $0x1e0] sm:$0xff]
    %v380 = vld [vmem:[#allocation5 + $0x1e8] sm:$0xff]
    %v381 = vld [vmem:[#allocation5 + $0x1f0] sm:$0xff]
    %v382 = vld [vmem:[#allocation5 + $0x1f8] sm:$0xff]
    %v383 = vld [vmem:[#allocation5 + $0x200] sm:$0xff]
    %v384 = vld [vmem:[#allocation5 + $0x208] sm:$0xff]
    %v385 = vld [vmem:[#allocation5 + $0x210] sm:$0xff]
    %v386 = vld [vmem:[#allocation5 + $0x218] sm:$0xff]
    %v387 = vld [vmem:[#allocation5 + $0x220] sm:$0xff]
    %v388 = vld [vmem:[#allocation5 + $0x228] sm:$0xff]
    %v389 = vld [vmem:[#allocation5 + $0x230] sm:$0xff]
    %v390 = vld [vmem:[#allocation5 + $0x238] sm:$0xff]
    %v391 = vld [vmem:[#allocation5 + $0x240] sm:$0xff]
    %v392 = vld [vmem:[#allocation5 + $0x248] sm:$0xff]
    %v393 = vld [vmem:[#allocation5 + $0x250] sm:$0xff]
    %v394 = vld [vmem:[#allocation5 + $0x258] sm:$0xff]
    %v395 = vld [vmem:[#allocation5 + $0x260] sm:$0xff]
    %v396 = vld [vmem:[#allocation5 + $0x268] sm:$0xff]
    %v397 = vld [vmem:[#allocation5 + $0x270] sm:$0xff]
    %v398 = vld [vmem:[#allocation5 + $0x278] sm:$0xff]
    %v399 = vld [vmem:[#allocation5 + $0x280] sm:$0xff]
    %v400 = vld [vmem:[#allocation5 + $0x288] sm:$0xff]
    %v401 = vld [vmem:[#allocation5 + $0x290] sm:$0xff]
    %v402 = vld [vmem:[#allocation5 + $0x298] sm:$0xff]
    %v403 = vld [vmem:[#allocation5 + $0x2a0] sm:$0xff]
    %v404 = vld [vmem:[#allocation5 + $0x2a8] sm:$0xff]
    %v405 = vld [vmem:[#allocation5 + $0x2b0] sm:$0xff]
    %v406 = vld [vmem:[#allocation5 + $0x2b8] sm:$0xff]
    %v407 = vld [vmem:[#allocation5 + $0x2c0] sm:$0xff]
    %v408 = vld [vmem:[#allocation5 + $0x2c8] sm:$0xff]
    %v409 = vld [vmem:[#allocation5 + $0x2d0] sm:$0xff]
    %v410 = vld [vmem:[#allocation5 + $0x2d8] sm:$0xff]
    %v411 = vld [vmem:[#allocation5 + $0x2e0] sm:$0xff]
    %v412 = vld [vmem:[#allocation5 + $0x2e8] sm:$0xff]
    %v413 = vld [vmem:[#allocation5 + $0x2f0] sm:$0xff]
    %v414 = vld [vmem:[#allocation5 + $0x2f8] sm:$0xff]
    %v415 = vld [vmem:[#allocation5 + $0x300] sm:$0xff]
    %v416 = vld [vmem:[#allocation5 + $0x308] sm:$0xff]
    %v417 = vld [vmem:[#allocation5 + $0x310] sm:$0xff]
    %v418 = vld [vmem:[#allocation5 + $0x318] sm:$0xff]
    %v419 = vld [vmem:[#allocation5 + $0x320] sm:$0xff]
    %v420 = vld [vmem:[#allocation5 + $0x328] sm:$0xff]
    %v421 = vld [vmem:[#allocation5 + $0x330] sm:$0xff]
    %v422 = vld [vmem:[#allocation5 + $0x338] sm:$0xff]
    %v423 = vld [vmem:[#allocation5 + $0x340] sm:$0xff]
    %v424 = vld [vmem:[#allocation5 + $0x348] sm:$0xff]
    %v425 = vld [vmem:[#allocation5 + $0x350] sm:$0xff]
    %v426 = vld [vmem:[#allocation5 + $0x358] sm:$0xff]
    %v427 = vld [vmem:[#allocation5 + $0x360] sm:$0xff]
    %v428 = vld [vmem:[#allocation5 + $0x368] sm:$0xff]
    %v429 = vld [vmem:[#allocation5 + $0x370] sm:$0xff]
    %v430 = vld [vmem:[#allocation5 + $0x378] sm:$0xff]
    %v431 = vld [vmem:[#allocation5 + $0x380] sm:$0xff]
    %v432 = vld [vmem:[#allocation5 + $0x388] sm:$0xff]
    %v433 = vld [vmem:[#allocation5 + $0x390] sm:$0xff]
    %v434 = vld [vmem:[#allocation5 + $0x398] sm:$0xff]
    %v435 = vld [vmem:[#allocation5 + $0x3a0] sm:$0xff]
    %v436 = vld [vmem:[#allocation5 + $0x3a8] sm:$0xff]
    %v437 = vld [vmem:[#allocation5 + $0x3b0] sm:$0xff]
    %v438 = vld [vmem:[#allocation5 + $0x3b8] sm:$0xff]
    %v439 = vld [vmem:[#allocation5 + $0x3c0] sm:$0xff]
    %v440 = vld [vmem:[#allocation5 + $0x3c8] sm:$0xff]
    %v441 = vld [vmem:[#allocation5 + $0x3d0] sm:$0xff]
    %v442 = vld [vmem:[#allocation5 + $0x3d8] sm:$0xff]
    %v443 = vld [vmem:[#allocation5 + $0x3e0] sm:$0xff]
    %v444 = vld [vmem:[#allocation5 + $0x3e8] sm:$0xff]
    %v445 = vld [vmem:[#allocation5 + $0x3f0] sm:$0xff]
    %v446 = vld [vmem:[#allocation5 + $0x3f8] sm:$0xff]
    %447 = vmatprep.subr.mxu0 %v380
    %448 = vmatpush1.msra.mxu0 %v379
    %449 = vmatprep.subr.mxu0 %v376
    %450 = vmatpush1.msra.mxu0 %v375
    %451 = vmatprep.subr.mxu0 %v372
    %452 = vmatpush1.msra.mxu0 %v371
    %453 = vmatprep.subr.mxu0 %v368
    %454 = vmatpush1.msra.mxu0 %v367
    %455 = vmatprep.subr.mxu0 %v364
    %456 = vmatpush1.msra.mxu0 %v363
    %457 = vmatprep.subr.mxu0 %v360
    %458 = vmatpush1.msra.mxu0 %v359
    %459 = vmatprep.subr.mxu0 %v356
    %460 = vmatpush1.msra.mxu0 %v355
    %461 = vmatprep.subr.mxu0 %v352
    %462 = vmatpush1.msra.mxu0 %v351
    %463 = vmatprep.subr.mxu0 %v348
    %464 = vmatpush1.msra.mxu0 %v347
    %465 = vmatprep.subr.mxu0 %v344
    %466 = vmatpush1.msra.mxu0 %v343
    %467 = vmatprep.subr.mxu0 %v340
    %468 = vmatpush1.msra.mxu0 %v339
    %469 = vmatprep.subr.mxu0 %v336
    %470 = vmatpush1.msra.mxu0 %v335
    %471 = vmatprep.subr.mxu0 %v332
    %472 = vmatpush1.msra.mxu0 %v331
    %473 = vmatprep.subr.mxu0 %v328
    %474 = vmatpush1.msra.mxu0 %v327
    %475 = vmatprep.subr.mxu0 %v324
    %476 = vmatpush1.msra.mxu0 %v323
    %477 = vmatprep.subr.mxu0 %v320
    %478 = vmatpush1.msra.mxu0 %v319
    %479 = vmatprep.subr.mxu0 %v444
    %480 = vmatpush2.msra.mxu0 %v443
    %481 = vmatprep.subr.mxu0 %v440
    %482 = vmatpush2.msra.mxu0 %v439
    %483 = vmatprep.subr.mxu0 %v436
    %484 = vmatpush2.msra.mxu0 %v435
    %485 = vmatprep.subr.mxu0 %v432
    %486 = vmatpush2.msra.mxu0 %v431
    %487 = vmatprep.subr.mxu0 %v428
    %488 = vmatpush2.msra.mxu0 %v427
    %489 = vmatprep.subr.mxu0 %v424
    %490 = vmatpush2.msra.mxu0 %v423
    %491 = vmatprep.subr.mxu0 %v420
    %492 = vmatpush2.msra.mxu0 %v419
    %493 = vmatprep.subr.mxu0 %v416
    %494 = vmatpush2.msra.mxu0 %v415
    %495 = vmatprep.subr.mxu0 %v412
    %496 = vmatpush2.msra.mxu0 %v411
    %497 = vmatprep.subr.mxu0 %v408
    %498 = vmatpush2.msra.mxu0 %v407
    %499 = vmatprep.subr.mxu0 %v404
    %500 = vmatpush2.msra.mxu0 %v403
    %501 = vmatprep.subr.mxu0 %v400
    %502 = vmatpush2.msra.mxu0 %v399
    %503 = vmatprep.subr.mxu0 %v396
    %504 = vmatpush2.msra.mxu0 %v395
    %505 = vmatprep.subr.mxu0 %v392
    %506 = vmatpush2.msra.mxu0 %v391
    %507 = vmatprep.subr.mxu0 %v388
    %508 = vmatpush2.msra.mxu0 %v387
    %509 = vmatprep.subr.mxu0 %v384
    %510 = vmatpush2.msra.mxu0 %v383
    %511 = vmatprep.mubr.f32.mxu0 0.0
    %512 = vmatmul.mubr.f32.gmra.mxu0 %v318
    %v513 = vpop.f32.mrf.mxu0
    %v514 = vadd.f32 %v64, %v513
    %v515 = vpop.f32.mrf.mxu0
    %v516 = vadd.f32 %v68, %v515
    %517 = vdwg.mxu0
    %518 = vmatprep.subr.mxu0 %v382
    %519 = vmatpush1.msra.mxu0 %v381
    %520 = vmatprep.subr.mxu0 %v378
    %521 = vmatpush1.msra.mxu0 %v377
    %522 = vmatprep.subr.mxu0 %v374
    %523 = vmatpush1.msra.mxu0 %v373
    %524 = vmatprep.subr.mxu0 %v370
    %525 = vmatpush1.msra.mxu0 %v369
    %526 = vmatprep.subr.mxu0 %v366
    %527 = vmatpush1.msra.mxu0 %v365
    %528 = vmatprep.subr.mxu0 %v362
    %529 = vmatpush1.msra.mxu0 %v361
    %530 = vmatprep.subr.mxu0 %v358
    %531 = vmatpush1.msra.mxu0 %v357
    %532 = vmatprep.subr.mxu0 %v354
    %533 = vmatpush1.msra.mxu0 %v353
    %534 = vmatprep.subr.mxu0 %v350
    %535 = vmatpush1.msra.mxu0 %v349
    %536 = vmatprep.subr.mxu0 %v346
    %537 = vmatpush1.msra.mxu0 %v345
    %538 = vmatprep.subr.mxu0 %v342
    %539 = vmatpush1.msra.mxu0 %v341
    %540 = vmatprep.subr.mxu0 %v338
    %541 = vmatpush1.msra.mxu0 %v337
    %542 = vmatprep.subr.mxu0 %v334
    %543 = vmatpush1.msra.mxu0 %v333
    %544 = vmatprep.subr.mxu0 %v330
    %545 = vmatpush1.msra.mxu0 %v329
    %546 = vmatprep.subr.mxu0 %v326
    %547 = vmatpush1.msra.mxu0 %v325
    %548 = vmatprep.subr.mxu0 %v322
    %549 = vmatpush1.msra.mxu0 %v321
    %550 = vmatprep.subr.mxu0 %v446
    %551 = vmatpush2.msra.mxu0 %v445
    %552 = vmatprep.subr.mxu0 %v442
    %553 = vmatpush2.msra.mxu0 %v441
    %554 = vmatprep.subr.mxu0 %v438
    %555 = vmatpush2.msra.mxu0 %v437
    %556 = vmatprep.subr.mxu0 %v434
    %557 = vmatpush2.msra.mxu0 %v433
    %558 = vmatprep.subr.mxu0 %v430
    %559 = vmatpush2.msra.mxu0 %v429
    %560 = vmatprep.subr.mxu0 %v426
    %561 = vmatpush2.msra.mxu0 %v425
    %562 = vmatprep.subr.mxu0 %v422
    %563 = vmatpush2.msra.mxu0 %v421
    %564 = vmatprep.subr.mxu0 %v418
    %565 = vmatpush2.msra.mxu0 %v417
    %566 = vmatprep.subr.mxu0 %v414
    %567 = vmatpush2.msra.mxu0 %v413
    %568 = vmatprep.subr.mxu0 %v410
    %569 = vmatpush2.msra.mxu0 %v409
    %570 = vmatprep.subr.mxu0 %v406
    %571 = vmatpush2.msra.mxu0 %v405
    %572 = vmatprep.subr.mxu0 %v402
    %573 = vmatpush2.msra.mxu0 %v401
    %574 = vmatprep.subr.mxu0 %v398
    %575 = vmatpush2.msra.mxu0 %v397
    %576 = vmatprep.subr.mxu0 %v394
    %577 = vmatpush2.msra.mxu0 %v393
    %578 = vmatprep.subr.mxu0 %v390
    %579 = vmatpush2.msra.mxu0 %v389
    %580 = vmatprep.subr.mxu0 %v386
    %581 = vmatpush2.msra.mxu0 %v385
    %582 = vmatprep.mubr.f32.mxu0 0.0
    %583 = vmatmul.mubr.f32.gmra.mxu0 %v318
    %v584 = vpop.f32.mrf.mxu0
    %v585 = vadd.f32 %v72, %v584
    %v586 = vpop.f32.mrf.mxu0
    %v587 = vadd.f32 %v76, %v586
    %588 = vdwg.mxu0
    %v589 = vxor.u32 %v514, 2147483648
    %v590 = vmul.f32 %v589, 1.442695
    %v591 = vpow.pop %v590
    %v592 = vadd.f32 %v591, 1.0
    %v593 = vrcp.pop %v592
    %v594 = vmul.f32 1.0, %v593
    %v595 = vxor.u32 %v516, 2147483648
    %v596 = vmul.f32 %v595, 1.442695
    %v597 = vpow.pop %v596
    %v598 = vadd.f32 %v597, 1.0
    %v599 = vrcp.pop %v598
    %v600 = vmul.f32 1.0, %v599
    %v601 = vtanh.pop %v585
    %v602 = vxor.u32 %v587, 2147483648
    %v603 = vmul.f32 %v602, 1.442695
    %v604 = vpow.pop %v603
    %v605 = vadd.f32 %v604, 1.0
    %v606 = vrcp.pop %v605
    %v607 = vmul.f32 1.0, %v606
    %v608 = vmul.f32 %v600, 0.0
    %v609 = vmul.f32 %v594, %v601
    %v610 = vadd.f32 %v608, %v609
    %v611 = vtanh.pop %v610
    %v612 = vmul.f32 %v607, %v611
    %s613 = scalar_lea.vmem %s0, 32
    %v614 = vld [vmem:[%s613] sm:$0xff]
    %v615 = vld [vmem:[%s613 + $0x8] sm:$0xff]
    %v616 = vld [vmem:[%s613 + $0x10] sm:$0xff]
    %v617 = vld [vmem:[%s613 + $0x18] sm:$0xff]
    %618 = vmatprep.subr.mxu0 %v146
    %619 = vmatpush1.msra.mxu0 %v145
    %620 = vmatprep.subr.mxu0 %v142
    %621 = vmatpush1.msra.mxu0 %v141
    %622 = vmatprep.subr.mxu0 %v138
    %623 = vmatpush1.msra.mxu0 %v137
    %624 = vmatprep.subr.mxu0 %v134
    %625 = vmatpush1.msra.mxu0 %v133
    %626 = vmatprep.subr.mxu0 %v130
    %627 = vmatpush1.msra.mxu0 %v129
    %628 = vmatprep.subr.mxu0 %v126
    %629 = vmatpush1.msra.mxu0 %v125
    %630 = vmatprep.subr.mxu0 %v122
    %631 = vmatpush1.msra.mxu0 %v121
    %632 = vmatprep.subr.mxu0 %v118
    %633 = vmatpush1.msra.mxu0 %v117
    %634 = vmatprep.subr.mxu0 %v114
    %635 = vmatpush1.msra.mxu0 %v113
    %636 = vmatprep.subr.mxu0 %v110
    %637 = vmatpush1.msra.mxu0 %v109
    %638 = vmatprep.subr.mxu0 %v106
    %639 = vmatpush1.msra.mxu0 %v105
    %640 = vmatprep.subr.mxu0 %v102
    %641 = vmatpush1.msra.mxu0 %v101
    %642 = vmatprep.subr.mxu0 %v98
    %643 = vmatpush1.msra.mxu0 %v97
    %644 = vmatprep.subr.mxu0 %v94
    %645 = vmatpush1.msra.mxu0 %v93
    %646 = vmatprep.subr.mxu0 %v90
    %647 = vmatpush1.msra.mxu0 %v89
    %648 = vmatprep.subr.mxu0 %v86
    %649 = vmatpush1.msra.mxu0 %v85
    %650 = vmatprep.subr.mxu0 0.0
    %651 = vmatpush2.msra.mxu0 0.0
    %652 = vmatprep.subr.mxu0 0.0
    %653 = vmatpush2.msra.mxu0 0.0
    %654 = vmatprep.subr.mxu0 0.0
    %655 = vmatpush2.msra.mxu0 0.0
    %656 = vmatprep.subr.mxu0 0.0
    %657 = vmatpush2.msra.mxu0 0.0
    %658 = vmatprep.subr.mxu0 0.0
    %659 = vmatpush2.msra.mxu0 0.0
    %660 = vmatprep.subr.mxu0 0.0
    %661 = vmatpush2.msra.mxu0 0.0
    %662 = vmatprep.subr.mxu0 0.0
    %663 = vmatpush2.msra.mxu0 0.0
    %664 = vmatprep.subr.mxu0 0.0
    %665 = vmatpush2.msra.mxu0 0.0
    %666 = vmatprep.subr.mxu0 0.0
    %667 = vmatpush2.msra.mxu0 0.0
    %668 = vmatprep.subr.mxu0 0.0
    %669 = vmatpush2.msra.mxu0 0.0
    %670 = vmatprep.subr.mxu0 0.0
    %671 = vmatpush2.msra.mxu0 0.0
    %672 = vmatprep.subr.mxu0 0.0
    %673 = vmatpush2.msra.mxu0 0.0
    %674 = vmatprep.subr.mxu0 0.0
    %675 = vmatpush2.msra.mxu0 0.0
    %676 = vmatprep.subr.mxu0 0.0
    %677 = vmatpush2.msra.mxu0 0.0
    %678 = vmatprep.subr.mxu0 0.0
    %679 = vmatpush2.msra.mxu0 0.0
    %680 = vmatprep.subr.mxu0 0.0
    %681 = vmatpush2.msra.mxu0 0.0
    %682 = vmatprep.mubr.f32.mxu0 0.0
    %683 = vmatmul.mubr.f32.gmra.mxu0 %v318
    %v684 = vpop.f32.mrf.mxu0
    %v685 = vadd.f32 0.0, %v684
    %v686 = vpop.f32.mrf.mxu0
    %v687 = vadd.f32 0.0, %v686
    %688 = vdwg.mxu0
    %689 = vmatprep.subr.mxu0 %v148
    %690 = vmatpush1.msra.mxu0 %v147
    %691 = vmatprep.subr.mxu0 %v144
    %692 = vmatpush1.msra.mxu0 %v143
    %693 = vmatprep.subr.mxu0 %v140
    %694 = vmatpush1.msra.mxu0 %v139
    %695 = vmatprep.subr.mxu0 %v136
    %696 = vmatpush1.msra.mxu0 %v135
    %697 = vmatprep.subr.mxu0 %v132
    %698 = vmatpush1.msra.mxu0 %v131
    %699 = vmatprep.subr.mxu0 %v128
    %700 = vmatpush1.msra.mxu0 %v127
    %701 = vmatprep.subr.mxu0 %v124
    %702 = vmatpush1.msra.mxu0 %v123
    %703 = vmatprep.subr.mxu0 %v120
    %704 = vmatpush1.msra.mxu0 %v119
    %705 = vmatprep.subr.mxu0 %v116
    %706 = vmatpush1.msra.mxu0 %v115
    %707 = vmatprep.subr.mxu0 %v112
    %708 = vmatpush1.msra.mxu0 %v111
    %709 = vmatprep.subr.mxu0 %v108
    %710 = vmatpush1.msra.mxu0 %v107
    %711 = vmatprep.subr.mxu0 %v104
    %712 = vmatpush1.msra.mxu0 %v103
    %713 = vmatprep.subr.mxu0 %v100
    %714 = vmatpush1.msra.mxu0 %v99
    %715 = vmatprep.subr.mxu0 %v96
    %716 = vmatpush1.msra.mxu0 %v95
    %717 = vmatprep.subr.mxu0 %v92
    %718 = vmatpush1.msra.mxu0 %v91
    %719 = vmatprep.subr.mxu0 %v88
    %720 = vmatpush1.msra.mxu0 %v87
    %721 = vmatprep.subr.mxu0 0.0
    %722 = vmatpush2.msra.mxu0 0.0
    %723 = vmatprep.subr.mxu0 0.0
    %724 = vmatpush2.msra.mxu0 0.0
    %725 = vmatprep.subr.mxu0 0.0
    %726 = vmatpush2.msra.mxu0 0.0
    %727 = vmatprep.subr.mxu0 0.0
    %728 = vmatpush2.msra.mxu0 0.0
    %729 = vmatprep.subr.mxu0 0.0
    %730 = vmatpush2.msra.mxu0 0.0
    %731 = vmatprep.subr.mxu0 0.0
    %732 = vmatpush2.msra.mxu0 0.0
    %733 = vmatprep.subr.mxu0 0.0
    %734 = vmatpush2.msra.mxu0 0.0
    %735 = vmatprep.subr.mxu0 0.0
    %736 = vmatpush2.msra.mxu0 0.0
    %737 = vmatprep.subr.mxu0 0.0
    %738 = vmatpush2.msra.mxu0 0.0
    %739 = vmatprep.subr.mxu0 0.0
    %740 = vmatpush2.msra.mxu0 0.0
    %741 = vmatprep.subr.mxu0 0.0
    %742 = vmatpush2.msra.mxu0 0.0
    %743 = vmatprep.subr.mxu0 0.0
    %744 = vmatpush2.msra.mxu0 0.0
    %745 = vmatprep.subr.mxu0 0.0
    %746 = vmatpush2.msra.mxu0 0.0
    %747 = vmatprep.subr.mxu0 0.0
    %748 = vmatpush2.msra.mxu0 0.0
    %749 = vmatprep.subr.mxu0 0.0
    %750 = vmatpush2.msra.mxu0 0.0
    %751 = vmatprep.subr.mxu0 0.0
    %752 = vmatpush2.msra.mxu0 0.0
    %753 = vmatprep.mubr.f32.mxu0 0.0
    %754 = vmatmul.mubr.f32.gmra.mxu0 %v318
    %v755 = vpop.f32.mrf.mxu0
    %v756 = vadd.f32 0.0, %v755
    %v757 = vpop.f32.mrf.mxu0
    %v758 = vadd.f32 0.0, %v757
    %759 = vdwg.mxu0
    %v760 = vadd.f32 %v614, %v685
    %v761 = vadd.f32 %v615, %v687
    %v762 = vadd.f32 %v616, %v756
    %v763 = vadd.f32 %v617, %v758
    %v764 = vxor.u32 %v760, 2147483648
    %v765 = vmul.f32 %v764, 1.442695
    %v766 = vpow.pop %v765
    %v767 = vadd.f32 %v766, 1.0
    %v768 = vrcp.pop %v767
    %v769 = vmul.f32 1.0, %v768
    %v770 = vxor.u32 %v761, 2147483648
    %v771 = vmul.f32 %v770, 1.442695
    %v772 = vpow.pop %v771
    %v773 = vadd.f32 %v772, 1.0
    %v774 = vrcp.pop %v773
    %v775 = vmul.f32 1.0, %v774
    %v776 = vtanh.pop %v762
    %v777 = vxor.u32 %v763, 2147483648
    %v778 = vmul.f32 %v777, 1.442695
    %v779 = vpow.pop %v778
    %v780 = vadd.f32 %v779, 1.0
    %v781 = vrcp.pop %v780
    %v782 = vmul.f32 1.0, %v781
    %v783 = vmul.f32 %v775, %v316
    %v784 = vmul.f32 %v769, %v776
    %v785 = vadd.f32 %v783, %v784
    %v786 = vtanh.pop %v785
    %v787 = vmul.f32 %v782, %v786
    %788 = vmatprep.subr.mxu0 %v380
    %789 = vmatpush1.msra.mxu0 %v379
    %790 = vmatprep.subr.mxu0 %v376
    %791 = vmatpush1.msra.mxu0 %v375
    %792 = vmatprep.subr.mxu0 %v372
    %793 = vmatpush1.msra.mxu0 %v371
    %794 = vmatprep.subr.mxu0 %v368
    %795 = vmatpush1.msra.mxu0 %v367
    %796 = vmatprep.subr.mxu0 %v364
    %797 = vmatpush1.msra.mxu0 %v363
    %798 = vmatprep.subr.mxu0 %v360
    %799 = vmatpush1.msra.mxu0 %v359
    %800 = vmatprep.subr.mxu0 %v356
    %801 = vmatpush1.msra.mxu0 %v355
    %802 = vmatprep.subr.mxu0 %v352
    %803 = vmatpush1.msra.mxu0 %v351
    %804 = vmatprep.subr.mxu0 %v348
    %805 = vmatpush1.msra.mxu0 %v347
    %806 = vmatprep.subr.mxu0 %v344
    %807 = vmatpush1.msra.mxu0 %v343
    %808 = vmatprep.subr.mxu0 %v340
    %809 = vmatpush1.msra.mxu0 %v339
    %810 = vmatprep.subr.mxu0 %v336
    %811 = vmatpush1.msra.mxu0 %v335
    %812 = vmatprep.subr.mxu0 %v332
    %813 = vmatpush1.msra.mxu0 %v331
    %814 = vmatprep.subr.mxu0 %v328
    %815 = vmatpush1.msra.mxu0 %v327
    %816 = vmatprep.subr.mxu0 %v324
    %817 = vmatpush1.msra.mxu0 %v323
    %818 = vmatprep.subr.mxu0 %v320
    %819 = vmatpush1.msra.mxu0 %v319
    %820 = vmatprep.subr.mxu0 %v444
    %821 = vmatpush2.msra.mxu0 %v443
    %822 = vmatprep.subr.mxu0 %v440
    %823 = vmatpush2.msra.mxu0 %v439
    %824 = vmatprep.subr.mxu0 %v436
    %825 = vmatpush2.msra.mxu0 %v435
    %826 = vmatprep.subr.mxu0 %v432
    %827 = vmatpush2.msra.mxu0 %v431
    %828 = vmatprep.subr.mxu0 %v428
    %829 = vmatpush2.msra.mxu0 %v427
    %830 = vmatprep.subr.mxu0 %v424
    %831 = vmatpush2.msra.mxu0 %v423
    %832 = vmatprep.subr.mxu0 %v420
    %833 = vmatpush2.msra.mxu0 %v419
    %834 = vmatprep.subr.mxu0 %v416
    %835 = vmatpush2.msra.mxu0 %v415
    %836 = vmatprep.subr.mxu0 %v412
    %837 = vmatpush2.msra.mxu0 %v411
    %838 = vmatprep.subr.mxu0 %v408
    %839 = vmatpush2.msra.mxu0 %v407
    %840 = vmatprep.subr.mxu0 %v404
    %841 = vmatpush2.msra.mxu0 %v403
    %842 = vmatprep.subr.mxu0 %v400
    %843 = vmatpush2.msra.mxu0 %v399
    %844 = vmatprep.subr.mxu0 %v396
    %845 = vmatpush2.msra.mxu0 %v395
    %846 = vmatprep.subr.mxu0 %v392
    %847 = vmatpush2.msra.mxu0 %v391
    %848 = vmatprep.subr.mxu0 %v388
    %849 = vmatpush2.msra.mxu0 %v387
    %850 = vmatprep.subr.mxu0 %v384
    %851 = vmatpush2.msra.mxu0 %v383
    %852 = vmatprep.mubr.f32.mxu0 %v612
    %853 = vmatmul.mubr.f32.gmra.mxu0 %v787
    %v854 = vpop.f32.mrf.mxu0
    %v855 = vadd.f32 %v64, %v854
    %v856 = vpop.f32.mrf.mxu0
    %v857 = vadd.f32 %v68, %v856
    %858 = vdwg.mxu0
    %859 = vmatprep.subr.mxu0 %v382
    %860 = vmatpush1.msra.mxu0 %v381
    %861 = vmatprep.subr.mxu0 %v378
    %862 = vmatpush1.msra.mxu0 %v377
    %863 = vmatprep.subr.mxu0 %v374
    %864 = vmatpush1.msra.mxu0 %v373
    %865 = vmatprep.subr.mxu0 %v370
    %866 = vmatpush1.msra.mxu0 %v369
    %867 = vmatprep.subr.mxu0 %v366
    %868 = vmatpush1.msra.mxu0 %v365
    %869 = vmatprep.subr.mxu0 %v362
    %870 = vmatpush1.msra.mxu0 %v361
    %871 = vmatprep.subr.mxu0 %v358
    %872 = vmatpush1.msra.mxu0 %v357
    %873 = vmatprep.subr.mxu0 %v354
    %874 = vmatpush1.msra.mxu0 %v353
    %875 = vmatprep.subr.mxu0 %v350
    %876 = vmatpush1.msra.mxu0 %v349
    %877 = vmatprep.subr.mxu0 %v346
    %878 = vmatpush1.msra.mxu0 %v345
    %879 = vmatprep.subr.mxu0 %v342
    %880 = vmatpush1.msra.mxu0 %v341
    %881 = vmatprep.subr.mxu0 %v338
    %882 = vmatpush1.msra.mxu0 %v337
    %883 = vmatprep.subr.mxu0 %v334
    %884 = vmatpush1.msra.mxu0 %v333
    %885 = vmatprep.subr.mxu0 %v330
    %886 = vmatpush1.msra.mxu0 %v329
    %887 = vmatprep.subr.mxu0 %v326
    %888 = vmatpush1.msra.mxu0 %v325
    %889 = vmatprep.subr.mxu0 %v322
    %890 = vmatpush1.msra.mxu0 %v321
    %891 = vmatprep.subr.mxu0 %v446
    %892 = vmatpush2.msra.mxu0 %v445
    %893 = vmatprep.subr.mxu0 %v442
    %894 = vmatpush2.msra.mxu0 %v441
    %895 = vmatprep.subr.mxu0 %v438
    %896 = vmatpush2.msra.mxu0 %v437
    %897 = vmatprep.subr.mxu0 %v434
    %898 = vmatpush2.msra.mxu0 %v433
    %899 = vmatprep.subr.mxu0 %v430
    %900 = vmatpush2.msra.mxu0 %v429
    %901 = vmatprep.subr.mxu0 %v426
    %902 = vmatpush2.msra.mxu0 %v425
    %903 = vmatprep.subr.mxu0 %v422
    %904 = vmatpush2.msra.mxu0 %v421
    %905 = vmatprep.subr.mxu0 %v418
    %906 = vmatpush2.msra.mxu0 %v417
    %907 = vmatprep.subr.mxu0 %v414
    %908 = vmatpush2.msra.mxu0 %v413
    %909 = vmatprep.subr.mxu0 %v410
    %910 = vmatpush2.msra.mxu0 %v409
    %911 = vmatprep.subr.mxu0 %v406
    %912 = vmatpush2.msra.mxu0 %v405
    %913 = vmatprep.subr.mxu0 %v402
    %914 = vmatpush2.msra.mxu0 %v401
    %915 = vmatprep.subr.mxu0 %v398
    %916 = vmatpush2.msra.mxu0 %v397
    %917 = vmatprep.subr.mxu0 %v394
    %918 = vmatpush2.msra.mxu0 %v393
    %919 = vmatprep.subr.mxu0 %v390
    %920 = vmatpush2.msra.mxu0 %v389
    %921 = vmatprep.subr.mxu0 %v386
    %922 = vmatpush2.msra.mxu0 %v385
    %923 = vmatprep.mubr.f32.mxu0 %v612
    %924 = vmatmul.mubr.f32.gmra.mxu0 %v787
    %v925 = vpop.f32.mrf.mxu0
    %v926 = vadd.f32 %v72, %v925
    %v927 = vpop.f32.mrf.mxu0
    %v928 = vadd.f32 %v76, %v927
    %929 = vdwg.mxu0
    %v930 = vxor.u32 %v855, 2147483648
    %v931 = vmul.f32 %v930, 1.442695
    %v932 = vpow.pop %v931
    %v933 = vadd.f32 %v932, 1.0
    %v934 = vrcp.pop %v933
    %v935 = vmul.f32 1.0, %v934
    %v936 = vxor.u32 %v857, 2147483648
    %v937 = vmul.f32 %v936, 1.442695
    %v938 = vpow.pop %v937
    %v939 = vadd.f32 %v938, 1.0
    %v940 = vrcp.pop %v939
    %v941 = vmul.f32 1.0, %v940
    %v942 = vtanh.pop %v926
    %v943 = vxor.u32 %v928, 2147483648
    %v944 = vmul.f32 %v943, 1.442695
    %v945 = vpow.pop %v944
    %v946 = vadd.f32 %v945, 1.0
    %v947 = vrcp.pop %v946
    %v948 = vmul.f32 1.0, %v947
    %v949 = vmul.f32 %v941, %v610
    %v950 = vmul.f32 %v935, %v942
    %v951 = vadd.f32 %v949, %v950
    %v952 = vtanh.pop %v951
    %v953 = vmul.f32 %v948, %v952
    %s954 = scalar_lea.vmem %s0, 64
    %v955 = vld [vmem:[%s954] sm:$0xff]
    %v956 = vld [vmem:[%s954 + $0x8] sm:$0xff]
    %v957 = vld [vmem:[%s954 + $0x10] sm:$0xff]
    %v958 = vld [vmem:[%s954 + $0x18] sm:$0xff]
    %959 = vmatprep.subr.mxu0 %v146
    %960 = vmatpush1.msra.mxu0 %v145
    %961 = vmatprep.subr.mxu0 %v142
    %962 = vmatpush1.msra.mxu0 %v141
    %963 = vmatprep.subr.mxu0 %v138
    %964 = vmatpush1.msra.mxu0 %v137
    %965 = vmatprep.subr.mxu0 %v134
    %966 = vmatpush1.msra.mxu0 %v133
    %967 = vmatprep.subr.mxu0 %v130
    %968 = vmatpush1.msra.mxu0 %v129
    %969 = vmatprep.subr.mxu0 %v126
    %970 = vmatpush1.msra.mxu0 %v125
    %971 = vmatprep.subr.mxu0 %v122
    %972 = vmatpush1.msra.mxu0 %v121
    %973 = vmatprep.subr.mxu0 %v118
    %974 = vmatpush1.msra.mxu0 %v117
    %975 = vmatprep.subr.mxu0 %v114
    %976 = vmatpush1.msra.mxu0 %v113
    %977 = vmatprep.subr.mxu0 %v110
    %978 = vmatpush1.msra.mxu0 %v109
    %979 = vmatprep.subr.mxu0 %v106
    %980 = vmatpush1.msra.mxu0 %v105
    %981 = vmatprep.subr.mxu0 %v102
    %982 = vmatpush1.msra.mxu0 %v101
    %983 = vmatprep.subr.mxu0 %v98
    %984 = vmatpush1.msra.mxu0 %v97
    %985 = vmatprep.subr.mxu0 %v94
    %986 = vmatpush1.msra.mxu0 %v93
    %987 = vmatprep.subr.mxu0 %v90
    %988 = vmatpush1.msra.mxu0 %v89
    %989 = vmatprep.subr.mxu0 %v86
    %990 = vmatpush1.msra.mxu0 %v85
    %991 = vmatprep.subr.mxu0 0.0
    %992 = vmatpush2.msra.mxu0 0.0
    %993 = vmatprep.subr.mxu0 0.0
    %994 = vmatpush2.msra.mxu0 0.0
    %995 = vmatprep.subr.mxu0 0.0
    %996 = vmatpush2.msra.mxu0 0.0
    %997 = vmatprep.subr.mxu0 0.0
    %998 = vmatpush2.msra.mxu0 0.0
    %999 = vmatprep.subr.mxu0 0.0
    %1000 = vmatpush2.msra.mxu0 0.0
    %1001 = vmatprep.subr.mxu0 0.0
    %1002 = vmatpush2.msra.mxu0 0.0
    %1003 = vmatprep.subr.mxu0 0.0
    %1004 = vmatpush2.msra.mxu0 0.0
    %1005 = vmatprep.subr.mxu0 0.0
    %1006 = vmatpush2.msra.mxu0 0.0
    %1007 = vmatprep.subr.mxu0 0.0
    %1008 = vmatpush2.msra.mxu0 0.0
    %1009 = vmatprep.subr.mxu0 0.0
    %1010 = vmatpush2.msra.mxu0 0.0
    %1011 = vmatprep.subr.mxu0 0.0
    %1012 = vmatpush2.msra.mxu0 0.0
    %1013 = vmatprep.subr.mxu0 0.0
    %1014 = vmatpush2.msra.mxu0 0.0
    %1015 = vmatprep.subr.mxu0 0.0
    %1016 = vmatpush2.msra.mxu0 0.0
    %1017 = vmatprep.subr.mxu0 0.0
    %1018 = vmatpush2.msra.mxu0 0.0
    %1019 = vmatprep.subr.mxu0 0.0
    %1020 = vmatpush2.msra.mxu0 0.0
    %1021 = vmatprep.subr.mxu0 0.0
    %1022 = vmatpush2.msra.mxu0 0.0
    %1023 = vmatprep.mubr.f32.mxu0 0.0
    %1024 = vmatmul.mubr.f32.gmra.mxu0 %v787
    %v1025 = vpop.f32.mrf.mxu0
    %v1026 = vadd.f32 0.0, %v1025
    %v1027 = vpop.f32.mrf.mxu0
    %v1028 = vadd.f32 0.0, %v1027
    %1029 = vdwg.mxu0
    %1030 = vmatprep.subr.mxu0 %v148
    %1031 = vmatpush1.msra.mxu0 %v147
    %1032 = vmatprep.subr.mxu0 %v144
    %1033 = vmatpush1.msra.mxu0 %v143
    %1034 = vmatprep.subr.mxu0 %v140
    %1035 = vmatpush1.msra.mxu0 %v139
    %1036 = vmatprep.subr.mxu0 %v136
    %1037 = vmatpush1.msra.mxu0 %v135
    %1038 = vmatprep.subr.mxu0 %v132
    %1039 = vmatpush1.msra.mxu0 %v131
    %1040 = vmatprep.subr.mxu0 %v128
    %1041 = vmatpush1.msra.mxu0 %v127
    %1042 = vmatprep.subr.mxu0 %v124
    %1043 = vmatpush1.msra.mxu0 %v123
    %1044 = vmatprep.subr.mxu0 %v120
    %1045 = vmatpush1.msra.mxu0 %v119
    %1046 = vmatprep.subr.mxu0 %v116
    %1047 = vmatpush1.msra.mxu0 %v115
    %1048 = vmatprep.subr.mxu0 %v112
    %1049 = vmatpush1.msra.mxu0 %v111
    %1050 = vmatprep.subr.mxu0 %v108
    %1051 = vmatpush1.msra.mxu0 %v107
    %1052 = vmatprep.subr.mxu0 %v104
    %1053 = vmatpush1.msra.mxu0 %v103
    %1054 = vmatprep.subr.mxu0 %v100
    %1055 = vmatpush1.msra.mxu0 %v99
    %1056 = vmatprep.subr.mxu0 %v96
    %1057 = vmatpush1.msra.mxu0 %v95
    %1058 = vmatprep.subr.mxu0 %v92
    %1059 = vmatpush1.msra.mxu0 %v91
    %1060 = vmatprep.subr.mxu0 %v88
    %1061 = vmatpush1.msra.mxu0 %v87
    %1062 = vmatprep.subr.mxu0 0.0
    %1063 = vmatpush2.msra.mxu0 0.0
    %1064 = vmatprep.subr.mxu0 0.0
    %1065 = vmatpush2.msra.mxu0 0.0
    %1066 = vmatprep.subr.mxu0 0.0
    %1067 = vmatpush2.msra.mxu0 0.0
    %1068 = vmatprep.subr.mxu0 0.0
    %1069 = vmatpush2.msra.mxu0 0.0
    %1070 = vmatprep.subr.mxu0 0.0
    %1071 = vmatpush2.msra.mxu0 0.0
    %1072 = vmatprep.subr.mxu0 0.0
    %1073 = vmatpush2.msra.mxu0 0.0
    %1074 = vmatprep.subr.mxu0 0.0
    %1075 = vmatpush2.msra.mxu0 0.0
    %1076 = vmatprep.subr.mxu0 0.0
    %1077 = vmatpush2.msra.mxu0 0.0
    %1078 = vmatprep.subr.mxu0 0.0
    %1079 = vmatpush2.msra.mxu0 0.0
    %1080 = vmatprep.subr.mxu0 0.0
    %1081 = vmatpush2.msra.mxu0 0.0
    %1082 = vmatprep.subr.mxu0 0.0
    %1083 = vmatpush2.msra.mxu0 0.0
    %1084 = vmatprep.subr.mxu0 0.0
    %1085 = vmatpush2.msra.mxu0 0.0
    %1086 = vmatprep.subr.mxu0 0.0
    %1087 = vmatpush2.msra.mxu0 0.0
    %1088 = vmatprep.subr.mxu0 0.0
    %1089 = vmatpush2.msra.mxu0 0.0
    %1090 = vmatprep.subr.mxu0 0.0
    %1091 = vmatpush2.msra.mxu0 0.0
    %1092 = vmatprep.subr.mxu0 0.0
    %1093 = vmatpush2.msra.mxu0 0.0
    %1094 = vmatprep.mubr.f32.mxu0 0.0
    %1095 = vmatmul.mubr.f32.gmra.mxu0 %v787
    %v1096 = vpop.f32.mrf.mxu0
    %v1097 = vadd.f32 0.0, %v1096
    %v1098 = vpop.f32.mrf.mxu0
    %v1099 = vadd.f32 0.0, %v1098
    %1100 = vdwg.mxu0
    %v1101 = vadd.f32 %v955, %v1026
    %v1102 = vadd.f32 %v956, %v1028
    %v1103 = vadd.f32 %v957, %v1097
    %v1104 = vadd.f32 %v958, %v1099
    %v1105 = vxor.u32 %v1101, 2147483648
    %v1106 = vmul.f32 %v1105, 1.442695
    %v1107 = vpow.pop %v1106
    %v1108 = vadd.f32 %v1107, 1.0
    %v1109 = vrcp.pop %v1108
    %v1110 = vmul.f32 1.0, %v1109
    %v1111 = vxor.u32 %v1102, 2147483648
    %v1112 = vmul.f32 %v1111, 1.442695
    %v1113 = vpow.pop %v1112
    %v1114 = vadd.f32 %v1113, 1.0
    %v1115 = vrcp.pop %v1114
    %v1116 = vmul.f32 1.0, %v1115
    %v1117 = vtanh.pop %v1103
    %v1118 = vxor.u32 %v1104, 2147483648
    %v1119 = vmul.f32 %v1118, 1.442695
    %v1120 = vpow.pop %v1119
    %v1121 = vadd.f32 %v1120, 1.0
    %v1122 = vrcp.pop %v1121
    %v1123 = vmul.f32 1.0, %v1122
    %v1124 = vmul.f32 %v1116, %v785
    %v1125 = vmul.f32 %v1110, %v1117
    %v1126 = vadd.f32 %v1124, %v1125
    %v1127 = vtanh.pop %v1126
    %v1128 = vmul.f32 %v1123, %v1127
    %1129 = vmatprep.subr.mxu0 %v380
    %1130 = vmatpush1.msra.mxu0 %v379
    %1131 = vmatprep.subr.mxu0 %v376
    %1132 = vmatpush1.msra.mxu0 %v375
    %1133 = vmatprep.subr.mxu0 %v372
    %1134 = vmatpush1.msra.mxu0 %v371
    %1135 = vmatprep.subr.mxu0 %v368
    %1136 = vmatpush1.msra.mxu0 %v367
    %1137 = vmatprep.subr.mxu0 %v364
    %1138 = vmatpush1.msra.mxu0 %v363
    %1139 = vmatprep.subr.mxu0 %v360
    %1140 = vmatpush1.msra.mxu0 %v359
    %1141 = vmatprep.subr.mxu0 %v356
    %1142 = vmatpush1.msra.mxu0 %v355
    %1143 = vmatprep.subr.mxu0 %v352
    %1144 = vmatpush1.msra.mxu0 %v351
    %1145 = vmatprep.subr.mxu0 %v348
    %1146 = vmatpush1.msra.mxu0 %v347
    %1147 = vmatprep.subr.mxu0 %v344
    %1148 = vmatpush1.msra.mxu0 %v343
    %1149 = vmatprep.subr.mxu0 %v340
    %1150 = vmatpush1.msra.mxu0 %v339
    %1151 = vmatprep.subr.mxu0 %v336
    %1152 = vmatpush1.msra.mxu0 %v335
    %1153 = vmatprep.subr.mxu0 %v332
    %1154 = vmatpush1.msra.mxu0 %v331
    %1155 = vmatprep.subr.mxu0 %v328
    %1156 = vmatpush1.msra.mxu0 %v327
    %1157 = vmatprep.subr.mxu0 %v324
    %1158 = vmatpush1.msra.mxu0 %v323
    %1159 = vmatprep.subr.mxu0 %v320
    %1160 = vmatpush1.msra.mxu0 %v319
    %1161 = vmatprep.subr.mxu0 %v444
    %1162 = vmatpush2.msra.mxu0 %v443
    %1163 = vmatprep.subr.mxu0 %v440
    %1164 = vmatpush2.msra.mxu0 %v439
    %1165 = vmatprep.subr.mxu0 %v436
    %1166 = vmatpush2.msra.mxu0 %v435
    %1167 = vmatprep.subr.mxu0 %v432
    %1168 = vmatpush2.msra.mxu0 %v431
    %1169 = vmatprep.subr.mxu0 %v428
    %1170 = vmatpush2.msra.mxu0 %v427
    %1171 = vmatprep.subr.mxu0 %v424
    %1172 = vmatpush2.msra.mxu0 %v423
    %1173 = vmatprep.subr.mxu0 %v420
    %1174 = vmatpush2.msra.mxu0 %v419
    %1175 = vmatprep.subr.mxu0 %v416
    %1176 = vmatpush2.msra.mxu0 %v415
    %1177 = vmatprep.subr.mxu0 %v412
    %1178 = vmatpush2.msra.mxu0 %v411
    %1179 = vmatprep.subr.mxu0 %v408
    %1180 = vmatpush2.msra.mxu0 %v407
    %1181 = vmatprep.subr.mxu0 %v404
    %1182 = vmatpush2.msra.mxu0 %v403
    %1183 = vmatprep.subr.mxu0 %v400
    %1184 = vmatpush2.msra.mxu0 %v399
    %1185 = vmatprep.subr.mxu0 %v396
    %1186 = vmatpush2.msra.mxu0 %v395
    %1187 = vmatprep.subr.mxu0 %v392
    %1188 = vmatpush2.msra.mxu0 %v391
    %1189 = vmatprep.subr.mxu0 %v388
    %1190 = vmatpush2.msra.mxu0 %v387
    %1191 = vmatprep.subr.mxu0 %v384
    %1192 = vmatpush2.msra.mxu0 %v383
    %1193 = vmatprep.mubr.f32.mxu0 %v953
    %1194 = vmatmul.mubr.f32.gmra.mxu0 %v1128
    %v1195 = vpop.f32.mrf.mxu0
    %v1196 = vadd.f32 %v64, %v1195
    %v1197 = vpop.f32.mrf.mxu0
    %v1198 = vadd.f32 %v68, %v1197
    %1199 = vdwg.mxu0
    %1200 = vmatprep.subr.mxu0 %v382
    %1201 = vmatpush1.msra.mxu0 %v381
    %1202 = vmatprep.subr.mxu0 %v378
    %1203 = vmatpush1.msra.mxu0 %v377
    %1204 = vmatprep.subr.mxu0 %v374
    %1205 = vmatpush1.msra.mxu0 %v373
    %1206 = vmatprep.subr.mxu0 %v370
    %1207 = vmatpush1.msra.mxu0 %v369
    %1208 = vmatprep.subr.mxu0 %v366
    %1209 = vmatpush1.msra.mxu0 %v365
    %1210 = vmatprep.subr.mxu0 %v362
    %1211 = vmatpush1.msra.mxu0 %v361
    %1212 = vmatprep.subr.mxu0 %v358
    %1213 = vmatpush1.msra.mxu0 %v357
    %1214 = vmatprep.subr.mxu0 %v354
    %1215 = vmatpush1.msra.mxu0 %v353
    %1216 = vmatprep.subr.mxu0 %v350
    %1217 = vmatpush1.msra.mxu0 %v349
    %1218 = vmatprep.subr.mxu0 %v346
    %1219 = vmatpush1.msra.mxu0 %v345
    %1220 = vmatprep.subr.mxu0 %v342
    %1221 = vmatpush1.msra.mxu0 %v341
    %1222 = vmatprep.subr.mxu0 %v338
    %1223 = vmatpush1.msra.mxu0 %v337
    %1224 = vmatprep.subr.mxu0 %v334
    %1225 = vmatpush1.msra.mxu0 %v333
    %1226 = vmatprep.subr.mxu0 %v330
    %1227 = vmatpush1.msra.mxu0 %v329
    %1228 = vmatprep.subr.mxu0 %v326
    %1229 = vmatpush1.msra.mxu0 %v325
    %1230 = vmatprep.subr.mxu0 %v322
    %1231 = vmatpush1.msra.mxu0 %v321
    %1232 = vmatprep.subr.mxu0 %v446
    %1233 = vmatpush2.msra.mxu0 %v445
    %1234 = vmatprep.subr.mxu0 %v442
    %1235 = vmatpush2.msra.mxu0 %v441
    %1236 = vmatprep.subr.mxu0 %v438
    %1237 = vmatpush2.msra.mxu0 %v437
    %1238 = vmatprep.subr.mxu0 %v434
    %1239 = vmatpush2.msra.mxu0 %v433
    %1240 = vmatprep.subr.mxu0 %v430
    %1241 = vmatpush2.msra.mxu0 %v429
    %1242 = vmatprep.subr.mxu0 %v426
    %1243 = vmatpush2.msra.mxu0 %v425
    %1244 = vmatprep.subr.mxu0 %v422
    %1245 = vmatpush2.msra.mxu0 %v421
    %1246 = vmatprep.subr.mxu0 %v418
    %1247 = vmatpush2.msra.mxu0 %v417
    %1248 = vmatprep.subr.mxu0 %v414
    %1249 = vmatpush2.msra.mxu0 %v413
    %1250 = vmatprep.subr.mxu0 %v410
    %1251 = vmatpush2.msra.mxu0 %v409
    %1252 = vmatprep.subr.mxu0 %v406
    %1253 = vmatpush2.msra.mxu0 %v405
    %1254 = vmatprep.subr.mxu0 %v402
    %1255 = vmatpush2.msra.mxu0 %v401
    %1256 = vmatprep.subr.mxu0 %v398
    %1257 = vmatpush2.msra.mxu0 %v397
    %1258 = vmatprep.subr.mxu0 %v394
    %1259 = vmatpush2.msra.mxu0 %v393
    %1260 = vmatprep.subr.mxu0 %v390
    %1261 = vmatpush2.msra.mxu0 %v389
    %1262 = vmatprep.subr.mxu0 %v386
    %1263 = vmatpush2.msra.mxu0 %v385
    %1264 = vmatprep.mubr.f32.mxu0 %v953
    %1265 = vmatmul.mubr.f32.gmra.mxu0 %v1128
    %v1266 = vpop.f32.mrf.mxu0
    %v1267 = vadd.f32 %v72, %v1266
    %v1268 = vpop.f32.mrf.mxu0
    %v1269 = vadd.f32 %v76, %v1268
    %1270 = vdwg.mxu0
    %v1271 = vxor.u32 %v1196, 2147483648
    %v1272 = vmul.f32 %v1271, 1.442695
    %v1273 = vpow.pop %v1272
    %v1274 = vadd.f32 %v1273, 1.0
    %v1275 = vrcp.pop %v1274
    %v1276 = vmul.f32 1.0, %v1275
    %v1277 = vxor.u32 %v1198, 2147483648
    %v1278 = vmul.f32 %v1277, 1.442695
    %v1279 = vpow.pop %v1278
    %v1280 = vadd.f32 %v1279, 1.0
    %v1281 = vrcp.pop %v1280
    %v1282 = vmul.f32 1.0, %v1281
    %v1283 = vtanh.pop %v1267
    %v1284 = vxor.u32 %v1269, 2147483648
    %v1285 = vmul.f32 %v1284, 1.442695
    %v1286 = vpow.pop %v1285
    %v1287 = vadd.f32 %v1286, 1.0
    %v1288 = vrcp.pop %v1287
    %v1289 = vmul.f32 1.0, %v1288
    %v1290 = vmul.f32 %v1282, %v951
    %v1291 = vmul.f32 %v1276, %v1283
    %v1292 = vadd.f32 %v1290, %v1291
    %v1293 = vtanh.pop %v1292
    %v1294 = vmul.f32 %v1289, %v1293
    %s1295 = scalar_lea.vmem %s0, 96
    %v1296 = vld [vmem:[%s1295] sm:$0xff]
    %v1297 = vld [vmem:[%s1295 + $0x8] sm:$0xff]
    %v1298 = vld [vmem:[%s1295 + $0x10] sm:$0xff]
    %v1299 = vld [vmem:[%s1295 + $0x18] sm:$0xff]
    %1300 = vmatprep.subr.mxu0 %v146
    %1301 = vmatpush1.msra.mxu0 %v145
    %1302 = vmatprep.subr.mxu0 %v142
    %1303 = vmatpush1.msra.mxu0 %v141
    %1304 = vmatprep.subr.mxu0 %v138
    %1305 = vmatpush1.msra.mxu0 %v137
    %1306 = vmatprep.subr.mxu0 %v134
    %1307 = vmatpush1.msra.mxu0 %v133
    %1308 = vmatprep.subr.mxu0 %v130
    %1309 = vmatpush1.msra.mxu0 %v129
    %1310 = vmatprep.subr.mxu0 %v126
    %1311 = vmatpush1.msra.mxu0 %v125
    %1312 = vmatprep.subr.mxu0 %v122
    %1313 = vmatpush1.msra.mxu0 %v121
    %1314 = vmatprep.subr.mxu0 %v118
    %1315 = vmatpush1.msra.mxu0 %v117
    %1316 = vmatprep.subr.mxu0 %v114
    %1317 = vmatpush1.msra.mxu0 %v113
    %1318 = vmatprep.subr.mxu0 %v110
    %1319 = vmatpush1.msra.mxu0 %v109
    %1320 = vmatprep.subr.mxu0 %v106
    %1321 = vmatpush1.msra.mxu0 %v105
    %1322 = vmatprep.subr.mxu0 %v102
    %1323 = vmatpush1.msra.mxu0 %v101
    %1324 = vmatprep.subr.mxu0 %v98
    %1325 = vmatpush1.msra.mxu0 %v97
    %1326 = vmatprep.subr.mxu0 %v94
    %1327 = vmatpush1.msra.mxu0 %v93
    %1328 = vmatprep.subr.mxu0 %v90
    %1329 = vmatpush1.msra.mxu0 %v89
    %1330 = vmatprep.subr.mxu0 %v86
    %1331 = vmatpush1.msra.mxu0 %v85
    %1332 = vmatprep.subr.mxu0 0.0
    %1333 = vmatpush2.msra.mxu0 0.0
    %1334 = vmatprep.subr.mxu0 0.0
    %1335 = vmatpush2.msra.mxu0 0.0
    %1336 = vmatprep.subr.mxu0 0.0
    %1337 = vmatpush2.msra.mxu0 0.0
    %1338 = vmatprep.subr.mxu0 0.0
    %1339 = vmatpush2.msra.mxu0 0.0
    %1340 = vmatprep.subr.mxu0 0.0
    %1341 = vmatpush2.msra.mxu0 0.0
    %1342 = vmatprep.subr.mxu0 0.0
    %1343 = vmatpush2.msra.mxu0 0.0
    %1344 = vmatprep.subr.mxu0 0.0
    %1345 = vmatpush2.msra.mxu0 0.0
    %1346 = vmatprep.subr.mxu0 0.0
    %1347 = vmatpush2.msra.mxu0 0.0
    %1348 = vmatprep.subr.mxu0 0.0
    %1349 = vmatpush2.msra.mxu0 0.0
    %1350 = vmatprep.subr.mxu0 0.0
    %1351 = vmatpush2.msra.mxu0 0.0
    %1352 = vmatprep.subr.mxu0 0.0
    %1353 = vmatpush2.msra.mxu0 0.0
    %1354 = vmatprep.subr.mxu0 0.0
    %1355 = vmatpush2.msra.mxu0 0.0
    %1356 = vmatprep.subr.mxu0 0.0
    %1357 = vmatpush2.msra.mxu0 0.0
    %1358 = vmatprep.subr.mxu0 0.0
    %1359 = vmatpush2.msra.mxu0 0.0
    %1360 = vmatprep.subr.mxu0 0.0
    %1361 = vmatpush2.msra.mxu0 0.0
    %1362 = vmatprep.subr.mxu0 0.0
    %1363 = vmatpush2.msra.mxu0 0.0
    %1364 = vmatprep.mubr.f32.mxu0 0.0
    %1365 = vmatmul.mubr.f32.gmra.mxu0 %v1128
    %v1366 = vpop.f32.mrf.mxu0
    %v1367 = vadd.f32 0.0, %v1366
    %v1368 = vpop.f32.mrf.mxu0
    %v1369 = vadd.f32 0.0, %v1368
    %1370 = vdwg.mxu0
    %1371 = vmatprep.subr.mxu0 %v148
    %1372 = vmatpush1.msra.mxu0 %v147
    %1373 = vmatprep.subr.mxu0 %v144
    %1374 = vmatpush1.msra.mxu0 %v143
    %1375 = vmatprep.subr.mxu0 %v140
    %1376 = vmatpush1.msra.mxu0 %v139
    %1377 = vmatprep.subr.mxu0 %v136
    %1378 = vmatpush1.msra.mxu0 %v135
    %1379 = vmatprep.subr.mxu0 %v132
    %1380 = vmatpush1.msra.mxu0 %v131
    %1381 = vmatprep.subr.mxu0 %v128
    %1382 = vmatpush1.msra.mxu0 %v127
    %1383 = vmatprep.subr.mxu0 %v124
    %1384 = vmatpush1.msra.mxu0 %v123
    %1385 = vmatprep.subr.mxu0 %v120
    %1386 = vmatpush1.msra.mxu0 %v119
    %1387 = vmatprep.subr.mxu0 %v116
    %1388 = vmatpush1.msra.mxu0 %v115
    %1389 = vmatprep.subr.mxu0 %v112
    %1390 = vmatpush1.msra.mxu0 %v111
    %1391 = vmatprep.subr.mxu0 %v108
    %1392 = vmatpush1.msra.mxu0 %v107
    %1393 = vmatprep.subr.mxu0 %v104
    %1394 = vmatpush1.msra.mxu0 %v103
    %1395 = vmatprep.subr.mxu0 %v100
    %1396 = vmatpush1.msra.mxu0 %v99
    %1397 = vmatprep.subr.mxu0 %v96
    %1398 = vmatpush1.msra.mxu0 %v95
    %1399 = vmatprep.subr.mxu0 %v92
    %1400 = vmatpush1.msra.mxu0 %v91
    %1401 = vmatprep.subr.mxu0 %v88
    %1402 = vmatpush1.msra.mxu0 %v87
    %1403 = vmatprep.subr.mxu0 0.0
    %1404 = vmatpush2.msra.mxu0 0.0
    %1405 = vmatprep.subr.mxu0 0.0
    %1406 = vmatpush2.msra.mxu0 0.0
    %1407 = vmatprep.subr.mxu0 0.0
    %1408 = vmatpush2.msra.mxu0 0.0
    %1409 = vmatprep.subr.mxu0 0.0
    %1410 = vmatpush2.msra.mxu0 0.0
    %1411 = vmatprep.subr.mxu0 0.0
    %1412 = vmatpush2.msra.mxu0 0.0
    %1413 = vmatprep.subr.mxu0 0.0
    %1414 = vmatpush2.msra.mxu0 0.0
    %1415 = vmatprep.subr.mxu0 0.0
    %1416 = vmatpush2.msra.mxu0 0.0
    %1417 = vmatprep.subr.mxu0 0.0
    %1418 = vmatpush2.msra.mxu0 0.0
    %1419 = vmatprep.subr.mxu0 0.0
    %1420 = vmatpush2.msra.mxu0 0.0
    %1421 = vmatprep.subr.mxu0 0.0
    %1422 = vmatpush2.msra.mxu0 0.0
    %1423 = vmatprep.subr.mxu0 0.0
    %1424 = vmatpush2.msra.mxu0 0.0
    %1425 = vmatprep.subr.mxu0 0.0
    %1426 = vmatpush2.msra.mxu0 0.0
    %1427 = vmatprep.subr.mxu0 0.0
    %1428 = vmatpush2.msra.mxu0 0.0
    %1429 = vmatprep.subr.mxu0 0.0
    %1430 = vmatpush2.msra.mxu0 0.0
    %1431 = vmatprep.subr.mxu0 0.0
    %1432 = vmatpush2.msra.mxu0 0.0
    %1433 = vmatprep.subr.mxu0 0.0
    %1434 = vmatpush2.msra.mxu0 0.0
    %1435 = vmatprep.mubr.f32.mxu0 0.0
    %1436 = vmatmul.mubr.f32.gmra.mxu0 %v1128
    %v1437 = vpop.f32.mrf.mxu0
    %v1438 = vadd.f32 0.0, %v1437
    %v1439 = vpop.f32.mrf.mxu0
    %v1440 = vadd.f32 0.0, %v1439
    %1441 = vdwg.mxu0
    %v1442 = vadd.f32 %v1296, %v1367
    %v1443 = vadd.f32 %v1297, %v1369
    %v1444 = vadd.f32 %v1298, %v1438
    %v1445 = vadd.f32 %v1299, %v1440
    %v1446 = vxor.u32 %v1442, 2147483648
    %v1447 = vmul.f32 %v1446, 1.442695
    %v1448 = vpow.pop %v1447
    %v1449 = vadd.f32 %v1448, 1.0
    %v1450 = vrcp.pop %v1449
    %v1451 = vmul.f32 1.0, %v1450
    %v1452 = vxor.u32 %v1443, 2147483648
    %v1453 = vmul.f32 %v1452, 1.442695
    %v1454 = vpow.pop %v1453
    %v1455 = vadd.f32 %v1454, 1.0
    %v1456 = vrcp.pop %v1455
    %v1457 = vmul.f32 1.0, %v1456
    %v1458 = vtanh.pop %v1444
    %v1459 = vxor.u32 %v1445, 2147483648
    %v1460 = vmul.f32 %v1459, 1.442695
    %v1461 = vpow.pop %v1460
    %v1462 = vadd.f32 %v1461, 1.0
    %v1463 = vrcp.pop %v1462
    %v1464 = vmul.f32 1.0, %v1463
    %v1465 = vmul.f32 %v1457, %v1126
    %v1466 = vmul.f32 %v1451, %v1458
    %v1467 = vadd.f32 %v1465, %v1466
    %v1468 = vtanh.pop %v1467
    %v1469 = vmul.f32 %v1464, %v1468
    %1470 = vmatprep.subr.mxu0 %v380
    %1471 = vmatpush1.msra.mxu0 %v379
    %1472 = vmatprep.subr.mxu0 %v376
    %1473 = vmatpush1.msra.mxu0 %v375
    %1474 = vmatprep.subr.mxu0 %v372
    %1475 = vmatpush1.msra.mxu0 %v371
    %1476 = vmatprep.subr.mxu0 %v368
    %1477 = vmatpush1.msra.mxu0 %v367
    %1478 = vmatprep.subr.mxu0 %v364
    %1479 = vmatpush1.msra.mxu0 %v363
    %1480 = vmatprep.subr.mxu0 %v360
    %1481 = vmatpush1.msra.mxu0 %v359
    %1482 = vmatprep.subr.mxu0 %v356
    %1483 = vmatpush1.msra.mxu0 %v355
    %1484 = vmatprep.subr.mxu0 %v352
    %1485 = vmatpush1.msra.mxu0 %v351
    %1486 = vmatprep.subr.mxu0 %v348
    %1487 = vmatpush1.msra.mxu0 %v347
    %1488 = vmatprep.subr.mxu0 %v344
    %1489 = vmatpush1.msra.mxu0 %v343
    %1490 = vmatprep.subr.mxu0 %v340
    %1491 = vmatpush1.msra.mxu0 %v339
    %1492 = vmatprep.subr.mxu0 %v336
    %1493 = vmatpush1.msra.mxu0 %v335
    %1494 = vmatprep.subr.mxu0 %v332
    %1495 = vmatpush1.msra.mxu0 %v331
    %1496 = vmatprep.subr.mxu0 %v328
    %1497 = vmatpush1.msra.mxu0 %v327
    %1498 = vmatprep.subr.mxu0 %v324
    %1499 = vmatpush1.msra.mxu0 %v323
    %1500 = vmatprep.subr.mxu0 %v320
    %1501 = vmatpush1.msra.mxu0 %v319
    %1502 = vmatprep.subr.mxu0 %v444
    %1503 = vmatpush2.msra.mxu0 %v443
    %1504 = vmatprep.subr.mxu0 %v440
    %1505 = vmatpush2.msra.mxu0 %v439
    %1506 = vmatprep.subr.mxu0 %v436
    %1507 = vmatpush2.msra.mxu0 %v435
    %1508 = vmatprep.subr.mxu0 %v432
    %1509 = vmatpush2.msra.mxu0 %v431
    %1510 = vmatprep.subr.mxu0 %v428
    %1511 = vmatpush2.msra.mxu0 %v427
    %1512 = vmatprep.subr.mxu0 %v424
    %1513 = vmatpush2.msra.mxu0 %v423
    %1514 = vmatprep.subr.mxu0 %v420
    %1515 = vmatpush2.msra.mxu0 %v419
    %1516 = vmatprep.subr.mxu0 %v416
    %1517 = vmatpush2.msra.mxu0 %v415
    %1518 = vmatprep.subr.mxu0 %v412
    %1519 = vmatpush2.msra.mxu0 %v411
    %1520 = vmatprep.subr.mxu0 %v408
    %1521 = vmatpush2.msra.mxu0 %v407
    %1522 = vmatprep.subr.mxu0 %v404
    %1523 = vmatpush2.msra.mxu0 %v403
    %1524 = vmatprep.subr.mxu0 %v400
    %1525 = vmatpush2.msra.mxu0 %v399
    %1526 = vmatprep.subr.mxu0 %v396
    %1527 = vmatpush2.msra.mxu0 %v395
    %1528 = vmatprep.subr.mxu0 %v392
    %1529 = vmatpush2.msra.mxu0 %v391
    %1530 = vmatprep.subr.mxu0 %v388
    %1531 = vmatpush2.msra.mxu0 %v387
    %1532 = vmatprep.subr.mxu0 %v384
    %1533 = vmatpush2.msra.mxu0 %v383
    %1534 = vmatprep.mubr.f32.mxu0 %v1294
    %1535 = vmatmul.mubr.f32.gmra.mxu0 %v1469
    %v1536 = vpop.f32.mrf.mxu0
    %v1537 = vadd.f32 %v64, %v1536
    %v1538 = vpop.f32.mrf.mxu0
    %v1539 = vadd.f32 %v68, %v1538
    %1540 = vdwg.mxu0
    %1541 = vmatprep.subr.mxu0 %v382
    %1542 = vmatpush1.msra.mxu0 %v381
    %1543 = vmatprep.subr.mxu0 %v378
    %1544 = vmatpush1.msra.mxu0 %v377
    %1545 = vmatprep.subr.mxu0 %v374
    %1546 = vmatpush1.msra.mxu0 %v373
    %1547 = vmatprep.subr.mxu0 %v370
    %1548 = vmatpush1.msra.mxu0 %v369
    %1549 = vmatprep.subr.mxu0 %v366
    %1550 = vmatpush1.msra.mxu0 %v365
    %1551 = vmatprep.subr.mxu0 %v362
    %1552 = vmatpush1.msra.mxu0 %v361
    %1553 = vmatprep.subr.mxu0 %v358
    %1554 = vmatpush1.msra.mxu0 %v357
    %1555 = vmatprep.subr.mxu0 %v354
    %1556 = vmatpush1.msra.mxu0 %v353
    %1557 = vmatprep.subr.mxu0 %v350
    %1558 = vmatpush1.msra.mxu0 %v349
    %1559 = vmatprep.subr.mxu0 %v346
    %1560 = vmatpush1.msra.mxu0 %v345
    %1561 = vmatprep.subr.mxu0 %v342
    %1562 = vmatpush1.msra.mxu0 %v341
    %1563 = vmatprep.subr.mxu0 %v338
    %1564 = vmatpush1.msra.mxu0 %v337
    %1565 = vmatprep.subr.mxu0 %v334
    %1566 = vmatpush1.msra.mxu0 %v333
    %1567 = vmatprep.subr.mxu0 %v330
    %1568 = vmatpush1.msra.mxu0 %v329
    %1569 = vmatprep.subr.mxu0 %v326
    %1570 = vmatpush1.msra.mxu0 %v325
    %1571 = vmatprep.subr.mxu0 %v322
    %1572 = vmatpush1.msra.mxu0 %v321
    %1573 = vmatprep.subr.mxu0 %v446
    %1574 = vmatpush2.msra.mxu0 %v445
    %1575 = vmatprep.subr.mxu0 %v442
    %1576 = vmatpush2.msra.mxu0 %v441
    %1577 = vmatprep.subr.mxu0 %v438
    %1578 = vmatpush2.msra.mxu0 %v437
    %1579 = vmatprep.subr.mxu0 %v434
    %1580 = vmatpush2.msra.mxu0 %v433
    %1581 = vmatprep.subr.mxu0 %v430
    %1582 = vmatpush2.msra.mxu0 %v429
    %1583 = vmatprep.subr.mxu0 %v426
    %1584 = vmatpush2.msra.mxu0 %v425
    %1585 = vmatprep.subr.mxu0 %v422
    %1586 = vmatpush2.msra.mxu0 %v421
    %1587 = vmatprep.subr.mxu0 %v418
    %1588 = vmatpush2.msra.mxu0 %v417
    %1589 = vmatprep.subr.mxu0 %v414
    %1590 = vmatpush2.msra.mxu0 %v413
    %1591 = vmatprep.subr.mxu0 %v410
    %1592 = vmatpush2.msra.mxu0 %v409
    %1593 = vmatprep.subr.mxu0 %v406
    %1594 = vmatpush2.msra.mxu0 %v405
    %1595 = vmatprep.subr.mxu0 %v402
    %1596 = vmatpush2.msra.mxu0 %v401
    %1597 = vmatprep.subr.mxu0 %v398
    %1598 = vmatpush2.msra.mxu0 %v397
    %1599 = vmatprep.subr.mxu0 %v394
    %1600 = vmatpush2.msra.mxu0 %v393
    %1601 = vmatprep.subr.mxu0 %v390
    %1602 = vmatpush2.msra.mxu0 %v389
    %1603 = vmatprep.subr.mxu0 %v386
    %1604 = vmatpush2.msra.mxu0 %v385
    %1605 = vmatprep.mubr.f32.mxu0 %v1294
    %1606 = vmatmul.mubr.f32.gmra.mxu0 %v1469
    %v1607 = vpop.f32.mrf.mxu0
    %v1608 = vadd.f32 %v72, %v1607
    %v1609 = vpop.f32.mrf.mxu0
    %v1610 = vadd.f32 %v76, %v1609
    %1611 = vdwg.mxu0
    %v1612 = vxor.u32 %v1537, 2147483648
    %v1613 = vmul.f32 %v1612, 1.442695
    %v1614 = vpow.pop %v1613
    %v1615 = vadd.f32 %v1614, 1.0
    %v1616 = vrcp.pop %v1615
    %v1617 = vmul.f32 1.0, %v1616
    %v1618 = vxor.u32 %v1539, 2147483648
    %v1619 = vmul.f32 %v1618, 1.442695
    %v1620 = vpow.pop %v1619
    %v1621 = vadd.f32 %v1620, 1.0
    %v1622 = vrcp.pop %v1621
    %v1623 = vmul.f32 1.0, %v1622
    %v1624 = vtanh.pop %v1608
    %v1625 = vxor.u32 %v1610, 2147483648
    %v1626 = vmul.f32 %v1625, 1.442695
    %v1627 = vpow.pop %v1626
    %v1628 = vadd.f32 %v1627, 1.0
    %v1629 = vrcp.pop %v1628
    %v1630 = vmul.f32 1.0, %v1629
    %v1631 = vmul.f32 %v1623, %v1292
    %v1632 = vmul.f32 %v1617, %v1624
    %v1633 = vadd.f32 %v1631, %v1632
    %v1634 = vtanh.pop %v1633
    %v1635 = vmul.f32 %v1630, %v1634
    %s1636 = scalar_lea.vmem %s0, 128
    %v1637 = vld [vmem:[%s1636] sm:$0xff]
    %v1638 = vld [vmem:[%s1636 + $0x8] sm:$0xff]
    %v1639 = vld [vmem:[%s1636 + $0x10] sm:$0xff]
    %v1640 = vld [vmem:[%s1636 + $0x18] sm:$0xff]
    %1641 = vmatprep.subr.mxu0 %v146
    %1642 = vmatpush1.msra.mxu0 %v145
    %1643 = vmatprep.subr.mxu0 %v142
    %1644 = vmatpush1.msra.mxu0 %v141
    %1645 = vmatprep.subr.mxu0 %v138
    %1646 = vmatpush1.msra.mxu0 %v137
    %1647 = vmatprep.subr.mxu0 %v134
    %1648 = vmatpush1.msra.mxu0 %v133
    %1649 = vmatprep.subr.mxu0 %v130
    %1650 = vmatpush1.msra.mxu0 %v129
    %1651 = vmatprep.subr.mxu0 %v126
    %1652 = vmatpush1.msra.mxu0 %v125
    %1653 = vmatprep.subr.mxu0 %v122
    %1654 = vmatpush1.msra.mxu0 %v121
    %1655 = vmatprep.subr.mxu0 %v118
    %1656 = vmatpush1.msra.mxu0 %v117
    %1657 = vmatprep.subr.mxu0 %v114
    %1658 = vmatpush1.msra.mxu0 %v113
    %1659 = vmatprep.subr.mxu0 %v110
    %1660 = vmatpush1.msra.mxu0 %v109
    %1661 = vmatprep.subr.mxu0 %v106
    %1662 = vmatpush1.msra.mxu0 %v105
    %1663 = vmatprep.subr.mxu0 %v102
    %1664 = vmatpush1.msra.mxu0 %v101
    %1665 = vmatprep.subr.mxu0 %v98
    %1666 = vmatpush1.msra.mxu0 %v97
    %1667 = vmatprep.subr.mxu0 %v94
    %1668 = vmatpush1.msra.mxu0 %v93
    %1669 = vmatprep.subr.mxu0 %v90
    %1670 = vmatpush1.msra.mxu0 %v89
    %1671 = vmatprep.subr.mxu0 %v86
    %1672 = vmatpush1.msra.mxu0 %v85
    %1673 = vmatprep.subr.mxu0 0.0
    %1674 = vmatpush2.msra.mxu0 0.0
    %1675 = vmatprep.subr.mxu0 0.0
    %1676 = vmatpush2.msra.mxu0 0.0
    %1677 = vmatprep.subr.mxu0 0.0
    %1678 = vmatpush2.msra.mxu0 0.0
    %1679 = vmatprep.subr.mxu0 0.0
    %1680 = vmatpush2.msra.mxu0 0.0
    %1681 = vmatprep.subr.mxu0 0.0
    %1682 = vmatpush2.msra.mxu0 0.0
    %1683 = vmatprep.subr.mxu0 0.0
    %1684 = vmatpush2.msra.mxu0 0.0
    %1685 = vmatprep.subr.mxu0 0.0
    %1686 = vmatpush2.msra.mxu0 0.0
    %1687 = vmatprep.subr.mxu0 0.0
    %1688 = vmatpush2.msra.mxu0 0.0
    %1689 = vmatprep.subr.mxu0 0.0
    %1690 = vmatpush2.msra.mxu0 0.0
    %1691 = vmatprep.subr.mxu0 0.0
    %1692 = vmatpush2.msra.mxu0 0.0
    %1693 = vmatprep.subr.mxu0 0.0
    %1694 = vmatpush2.msra.mxu0 0.0
    %1695 = vmatprep.subr.mxu0 0.0
    %1696 = vmatpush2.msra.mxu0 0.0
    %1697 = vmatprep.subr.mxu0 0.0
    %1698 = vmatpush2.msra.mxu0 0.0
    %1699 = vmatprep.subr.mxu0 0.0
    %1700 = vmatpush2.msra.mxu0 0.0
    %1701 = vmatprep.subr.mxu0 0.0
    %1702 = vmatpush2.msra.mxu0 0.0
    %1703 = vmatprep.subr.mxu0 0.0
    %1704 = vmatpush2.msra.mxu0 0.0
    %1705 = vmatprep.mubr.f32.mxu0 0.0
    %1706 = vmatmul.mubr.f32.gmra.mxu0 %v1469
    %v1707 = vpop.f32.mrf.mxu0
    %v1708 = vadd.f32 0.0, %v1707
    %v1709 = vpop.f32.mrf.mxu0
    %v1710 = vadd.f32 0.0, %v1709
    %1711 = vdwg.mxu0
    %1712 = vmatprep.subr.mxu0 %v148
    %1713 = vmatpush1.msra.mxu0 %v147
    %1714 = vmatprep.subr.mxu0 %v144
    %1715 = vmatpush1.msra.mxu0 %v143
    %1716 = vmatprep.subr.mxu0 %v140
    %1717 = vmatpush1.msra.mxu0 %v139
    %1718 = vmatprep.subr.mxu0 %v136
    %1719 = vmatpush1.msra.mxu0 %v135
    %1720 = vmatprep.subr.mxu0 %v132
    %1721 = vmatpush1.msra.mxu0 %v131
    %1722 = vmatprep.subr.mxu0 %v128
    %1723 = vmatpush1.msra.mxu0 %v127
    %1724 = vmatprep.subr.mxu0 %v124
    %1725 = vmatpush1.msra.mxu0 %v123
    %1726 = vmatprep.subr.mxu0 %v120
    %1727 = vmatpush1.msra.mxu0 %v119
    %1728 = vmatprep.subr.mxu0 %v116
    %1729 = vmatpush1.msra.mxu0 %v115
    %1730 = vmatprep.subr.mxu0 %v112
    %1731 = vmatpush1.msra.mxu0 %v111
    %1732 = vmatprep.subr.mxu0 %v108
    %1733 = vmatpush1.msra.mxu0 %v107
    %1734 = vmatprep.subr.mxu0 %v104
    %1735 = vmatpush1.msra.mxu0 %v103
    %1736 = vmatprep.subr.mxu0 %v100
    %1737 = vmatpush1.msra.mxu0 %v99
    %1738 = vmatprep.subr.mxu0 %v96
    %1739 = vmatpush1.msra.mxu0 %v95
    %1740 = vmatprep.subr.mxu0 %v92
    %1741 = vmatpush1.msra.mxu0 %v91
    %1742 = vmatprep.subr.mxu0 %v88
    %1743 = vmatpush1.msra.mxu0 %v87
    %1744 = vmatprep.subr.mxu0 0.0
    %1745 = vmatpush2.msra.mxu0 0.0
    %1746 = vmatprep.subr.mxu0 0.0
    %1747 = vmatpush2.msra.mxu0 0.0
    %1748 = vmatprep.subr.mxu0 0.0
    %1749 = vmatpush2.msra.mxu0 0.0
    %1750 = vmatprep.subr.mxu0 0.0
    %1751 = vmatpush2.msra.mxu0 0.0
    %1752 = vmatprep.subr.mxu0 0.0
    %1753 = vmatpush2.msra.mxu0 0.0
    %1754 = vmatprep.subr.mxu0 0.0
    %1755 = vmatpush2.msra.mxu0 0.0
    %1756 = vmatprep.subr.mxu0 0.0
    %1757 = vmatpush2.msra.mxu0 0.0
    %1758 = vmatprep.subr.mxu0 0.0
    %1759 = vmatpush2.msra.mxu0 0.0
    %1760 = vmatprep.subr.mxu0 0.0
    %1761 = vmatpush2.msra.mxu0 0.0
    %1762 = vmatprep.subr.mxu0 0.0
    %1763 = vmatpush2.msra.mxu0 0.0
    %1764 = vmatprep.subr.mxu0 0.0
    %1765 = vmatpush2.msra.mxu0 0.0
    %1766 = vmatprep.subr.mxu0 0.0
    %1767 = vmatpush2.msra.mxu0 0.0
    %1768 = vmatprep.subr.mxu0 0.0
    %1769 = vmatpush2.msra.mxu0 0.0
    %1770 = vmatprep.subr.mxu0 0.0
    %1771 = vmatpush2.msra.mxu0 0.0
    %1772 = vmatprep.subr.mxu0 0.0
    %1773 = vmatpush2.msra.mxu0 0.0
    %1774 = vmatprep.subr.mxu0 0.0
    %1775 = vmatpush2.msra.mxu0 0.0
    %1776 = vmatprep.mubr.f32.mxu0 0.0
    %1777 = vmatmul.mubr.f32.gmra.mxu0 %v1469
    %v1778 = vpop.f32.mrf.mxu0
    %v1779 = vadd.f32 0.0, %v1778
    %v1780 = vpop.f32.mrf.mxu0
    %v1781 = vadd.f32 0.0, %v1780
    %1782 = vdwg.mxu0
    %v1783 = vadd.f32 %v1637, %v1708
    %v1784 = vadd.f32 %v1638, %v1710
    %v1785 = vadd.f32 %v1639, %v1779
    %v1786 = vadd.f32 %v1640, %v1781
    %v1787 = vxor.u32 %v1783, 2147483648
    %v1788 = vmul.f32 %v1787, 1.442695
    %v1789 = vpow.pop %v1788
    %v1790 = vadd.f32 %v1789, 1.0
    %v1791 = vrcp.pop %v1790
    %v1792 = vmul.f32 1.0, %v1791
    %v1793 = vxor.u32 %v1784, 2147483648
    %v1794 = vmul.f32 %v1793, 1.442695
    %v1795 = vpow.pop %v1794
    %v1796 = vadd.f32 %v1795, 1.0
    %v1797 = vrcp.pop %v1796
    %v1798 = vmul.f32 1.0, %v1797
    %v1799 = vtanh.pop %v1785
    %v1800 = vxor.u32 %v1786, 2147483648
    %v1801 = vmul.f32 %v1800, 1.442695
    %v1802 = vpow.pop %v1801
    %v1803 = vadd.f32 %v1802, 1.0
    %v1804 = vrcp.pop %v1803
    %v1805 = vmul.f32 1.0, %v1804
    %v1806 = vmul.f32 %v1798, %v1467
    %v1807 = vmul.f32 %v1792, %v1799
    %v1808 = vadd.f32 %v1806, %v1807
    %v1809 = vtanh.pop %v1808
    %v1810 = vmul.f32 %v1805, %v1809
    %1811 = vmatprep.subr.mxu0 %v380
    %1812 = vmatpush1.msra.mxu0 %v379
    %1813 = vmatprep.subr.mxu0 %v376
    %1814 = vmatpush1.msra.mxu0 %v375
    %1815 = vmatprep.subr.mxu0 %v372
    %1816 = vmatpush1.msra.mxu0 %v371
    %1817 = vmatprep.subr.mxu0 %v368
    %1818 = vmatpush1.msra.mxu0 %v367
    %1819 = vmatprep.subr.mxu0 %v364
    %1820 = vmatpush1.msra.mxu0 %v363
    %1821 = vmatprep.subr.mxu0 %v360
    %1822 = vmatpush1.msra.mxu0 %v359
    %1823 = vmatprep.subr.mxu0 %v356
    %1824 = vmatpush1.msra.mxu0 %v355
    %1825 = vmatprep.subr.mxu0 %v352
    %1826 = vmatpush1.msra.mxu0 %v351
    %1827 = vmatprep.subr.mxu0 %v348
    %1828 = vmatpush1.msra.mxu0 %v347
    %1829 = vmatprep.subr.mxu0 %v344
    %1830 = vmatpush1.msra.mxu0 %v343
    %1831 = vmatprep.subr.mxu0 %v340
    %1832 = vmatpush1.msra.mxu0 %v339
    %1833 = vmatprep.subr.mxu0 %v336
    %1834 = vmatpush1.msra.mxu0 %v335
    %1835 = vmatprep.subr.mxu0 %v332
    %1836 = vmatpush1.msra.mxu0 %v331
    %1837 = vmatprep.subr.mxu0 %v328
    %1838 = vmatpush1.msra.mxu0 %v327
    %1839 = vmatprep.subr.mxu0 %v324
    %1840 = vmatpush1.msra.mxu0 %v323
    %1841 = vmatprep.subr.mxu0 %v320
    %1842 = vmatpush1.msra.mxu0 %v319
    %1843 = vmatprep.subr.mxu0 %v444
    %1844 = vmatpush2.msra.mxu0 %v443
    %1845 = vmatprep.subr.mxu0 %v440
    %1846 = vmatpush2.msra.mxu0 %v439
    %1847 = vmatprep.subr.mxu0 %v436
    %1848 = vmatpush2.msra.mxu0 %v435
    %1849 = vmatprep.subr.mxu0 %v432
    %1850 = vmatpush2.msra.mxu0 %v431
    %1851 = vmatprep.subr.mxu0 %v428
    %1852 = vmatpush2.msra.mxu0 %v427
    %1853 = vmatprep.subr.mxu0 %v424
    %1854 = vmatpush2.msra.mxu0 %v423
    %1855 = vmatprep.subr.mxu0 %v420
    %1856 = vmatpush2.msra.mxu0 %v419
    %1857 = vmatprep.subr.mxu0 %v416
    %1858 = vmatpush2.msra.mxu0 %v415
    %1859 = vmatprep.subr.mxu0 %v412
    %1860 = vmatpush2.msra.mxu0 %v411
    %1861 = vmatprep.subr.mxu0 %v408
    %1862 = vmatpush2.msra.mxu0 %v407
    %1863 = vmatprep.subr.mxu0 %v404
    %1864 = vmatpush2.msra.mxu0 %v403
    %1865 = vmatprep.subr.mxu0 %v400
    %1866 = vmatpush2.msra.mxu0 %v399
    %1867 = vmatprep.subr.mxu0 %v396
    %1868 = vmatpush2.msra.mxu0 %v395
    %1869 = vmatprep.subr.mxu0 %v392
    %1870 = vmatpush2.msra.mxu0 %v391
    %1871 = vmatprep.subr.mxu0 %v388
    %1872 = vmatpush2.msra.mxu0 %v387
    %1873 = vmatprep.subr.mxu0 %v384
    %1874 = vmatpush2.msra.mxu0 %v383
    %1875 = vmatprep.mubr.f32.mxu0 %v1635
    %1876 = vmatmul.mubr.f32.gmra.mxu0 %v1810
    %v1877 = vpop.f32.mrf.mxu0
    %v1878 = vadd.f32 %v64, %v1877
    %v1879 = vpop.f32.mrf.mxu0
    %v1880 = vadd.f32 %v68, %v1879
    %1881 = vdwg.mxu0
    %1882 = vmatprep.subr.mxu0 %v382
    %1883 = vmatpush1.msra.mxu0 %v381
    %1884 = vmatprep.subr.mxu0 %v378
    %1885 = vmatpush1.msra.mxu0 %v377
    %1886 = vmatprep.subr.mxu0 %v374
    %1887 = vmatpush1.msra.mxu0 %v373
    %1888 = vmatprep.subr.mxu0 %v370
    %1889 = vmatpush1.msra.mxu0 %v369
    %1890 = vmatprep.subr.mxu0 %v366
    %1891 = vmatpush1.msra.mxu0 %v365
    %1892 = vmatprep.subr.mxu0 %v362
    %1893 = vmatpush1.msra.mxu0 %v361
    %1894 = vmatprep.subr.mxu0 %v358
    %1895 = vmatpush1.msra.mxu0 %v357
    %1896 = vmatprep.subr.mxu0 %v354
    %1897 = vmatpush1.msra.mxu0 %v353
    %1898 = vmatprep.subr.mxu0 %v350
    %1899 = vmatpush1.msra.mxu0 %v349
    %1900 = vmatprep.subr.mxu0 %v346
    %1901 = vmatpush1.msra.mxu0 %v345
    %1902 = vmatprep.subr.mxu0 %v342
    %1903 = vmatpush1.msra.mxu0 %v341
    %1904 = vmatprep.subr.mxu0 %v338
    %1905 = vmatpush1.msra.mxu0 %v337
    %1906 = vmatprep.subr.mxu0 %v334
    %1907 = vmatpush1.msra.mxu0 %v333
    %1908 = vmatprep.subr.mxu0 %v330
    %1909 = vmatpush1.msra.mxu0 %v329
    %1910 = vmatprep.subr.mxu0 %v326
    %1911 = vmatpush1.msra.mxu0 %v325
    %1912 = vmatprep.subr.mxu0 %v322
    %1913 = vmatpush1.msra.mxu0 %v321
    %1914 = vmatprep.subr.mxu0 %v446
    %1915 = vmatpush2.msra.mxu0 %v445
    %1916 = vmatprep.subr.mxu0 %v442
    %1917 = vmatpush2.msra.mxu0 %v441
    %1918 = vmatprep.subr.mxu0 %v438
    %1919 = vmatpush2.msra.mxu0 %v437
    %1920 = vmatprep.subr.mxu0 %v434
    %1921 = vmatpush2.msra.mxu0 %v433
    %1922 = vmatprep.subr.mxu0 %v430
    %1923 = vmatpush2.msra.mxu0 %v429
    %1924 = vmatprep.subr.mxu0 %v426
    %1925 = vmatpush2.msra.mxu0 %v425
    %1926 = vmatprep.subr.mxu0 %v422
    %1927 = vmatpush2.msra.mxu0 %v421
    %1928 = vmatprep.subr.mxu0 %v418
    %1929 = vmatpush2.msra.mxu0 %v417
    %1930 = vmatprep.subr.mxu0 %v414
    %1931 = vmatpush2.msra.mxu0 %v413
    %1932 = vmatprep.subr.mxu0 %v410
    %1933 = vmatpush2.msra.mxu0 %v409
    %1934 = vmatprep.subr.mxu0 %v406
    %1935 = vmatpush2.msra.mxu0 %v405
    %1936 = vmatprep.subr.mxu0 %v402
    %1937 = vmatpush2.msra.mxu0 %v401
    %1938 = vmatprep.subr.mxu0 %v398
    %1939 = vmatpush2.msra.mxu0 %v397
    %1940 = vmatprep.subr.mxu0 %v394
    %1941 = vmatpush2.msra.mxu0 %v393
    %1942 = vmatprep.subr.mxu0 %v390
    %1943 = vmatpush2.msra.mxu0 %v389
    %1944 = vmatprep.subr.mxu0 %v386
    %1945 = vmatpush2.msra.mxu0 %v385
    %1946 = vmatprep.mubr.f32.mxu0 %v1635
    %1947 = vmatmul.mubr.f32.gmra.mxu0 %v1810
    %v1948 = vpop.f32.mrf.mxu0
    %v1949 = vadd.f32 %v72, %v1948
    %v1950 = vpop.f32.mrf.mxu0
    %v1951 = vadd.f32 %v76, %v1950
    %1952 = vdwg.mxu0
    %v1953 = vxor.u32 %v1878, 2147483648
    %v1954 = vmul.f32 %v1953, 1.442695
    %v1955 = vpow.pop %v1954
    %v1956 = vadd.f32 %v1955, 1.0
    %v1957 = vrcp.pop %v1956
    %v1958 = vmul.f32 1.0, %v1957
    %v1959 = vxor.u32 %v1880, 2147483648
    %v1960 = vmul.f32 %v1959, 1.442695
    %v1961 = vpow.pop %v1960
    %v1962 = vadd.f32 %v1961, 1.0
    %v1963 = vrcp.pop %v1962
    %v1964 = vmul.f32 1.0, %v1963
    %v1965 = vtanh.pop %v1949
    %v1966 = vxor.u32 %v1951, 2147483648
    %v1967 = vmul.f32 %v1966, 1.442695
    %v1968 = vpow.pop %v1967
    %v1969 = vadd.f32 %v1968, 1.0
    %v1970 = vrcp.pop %v1969
    %v1971 = vmul.f32 1.0, %v1970
    %v1972 = vmul.f32 %v1964, %v1633
    %v1973 = vmul.f32 %v1958, %v1965
    %v1974 = vadd.f32 %v1972, %v1973
    %v1975 = vtanh.pop %v1974
    %v1976 = vmul.f32 %v1971, %v1975
    %s1977 = scalar_lea.vmem %s0, 160
    %v1978 = vld [vmem:[%s1977] sm:$0xff]
    %v1979 = vld [vmem:[%s1977 + $0x8] sm:$0xff]
    %v1980 = vld [vmem:[%s1977 + $0x10] sm:$0xff]
    %v1981 = vld [vmem:[%s1977 + $0x18] sm:$0xff]
    %1982 = vmatprep.subr.mxu0 %v146
    %1983 = vmatpush1.msra.mxu0 %v145
    %1984 = vmatprep.subr.mxu0 %v142
    %1985 = vmatpush1.msra.mxu0 %v141
    %1986 = vmatprep.subr.mxu0 %v138
    %1987 = vmatpush1.msra.mxu0 %v137
    %1988 = vmatprep.subr.mxu0 %v134
    %1989 = vmatpush1.msra.mxu0 %v133
    %1990 = vmatprep.subr.mxu0 %v130
    %1991 = vmatpush1.msra.mxu0 %v129
    %1992 = vmatprep.subr.mxu0 %v126
    %1993 = vmatpush1.msra.mxu0 %v125
    %1994 = vmatprep.subr.mxu0 %v122
    %1995 = vmatpush1.msra.mxu0 %v121
    %1996 = vmatprep.subr.mxu0 %v118
    %1997 = vmatpush1.msra.mxu0 %v117
    %1998 = vmatprep.subr.mxu0 %v114
    %1999 = vmatpush1.msra.mxu0 %v113
    %2000 = vmatprep.subr.mxu0 %v110
    %2001 = vmatpush1.msra.mxu0 %v109
    %2002 = vmatprep.subr.mxu0 %v106
    %2003 = vmatpush1.msra.mxu0 %v105
    %2004 = vmatprep.subr.mxu0 %v102
    %2005 = vmatpush1.msra.mxu0 %v101
    %2006 = vmatprep.subr.mxu0 %v98
    %2007 = vmatpush1.msra.mxu0 %v97
    %2008 = vmatprep.subr.mxu0 %v94
    %2009 = vmatpush1.msra.mxu0 %v93
    %2010 = vmatprep.subr.mxu0 %v90
    %2011 = vmatpush1.msra.mxu0 %v89
    %2012 = vmatprep.subr.mxu0 %v86
    %2013 = vmatpush1.msra.mxu0 %v85
    %2014 = vmatprep.subr.mxu0 0.0
    %2015 = vmatpush2.msra.mxu0 0.0
    %2016 = vmatprep.subr.mxu0 0.0
    %2017 = vmatpush2.msra.mxu0 0.0
    %2018 = vmatprep.subr.mxu0 0.0
    %2019 = vmatpush2.msra.mxu0 0.0
    %2020 = vmatprep.subr.mxu0 0.0
    %2021 = vmatpush2.msra.mxu0 0.0
    %2022 = vmatprep.subr.mxu0 0.0
    %2023 = vmatpush2.msra.mxu0 0.0
    %2024 = vmatprep.subr.mxu0 0.0
    %2025 = vmatpush2.msra.mxu0 0.0
    %2026 = vmatprep.subr.mxu0 0.0
    %2027 = vmatpush2.msra.mxu0 0.0
    %2028 = vmatprep.subr.mxu0 0.0
    %2029 = vmatpush2.msra.mxu0 0.0
    %2030 = vmatprep.subr.mxu0 0.0
    %2031 = vmatpush2.msra.mxu0 0.0
    %2032 = vmatprep.subr.mxu0 0.0
    %2033 = vmatpush2.msra.mxu0 0.0
    %2034 = vmatprep.subr.mxu0 0.0
    %2035 = vmatpush2.msra.mxu0 0.0
    %2036 = vmatprep.subr.mxu0 0.0
    %2037 = vmatpush2.msra.mxu0 0.0
    %2038 = vmatprep.subr.mxu0 0.0
    %2039 = vmatpush2.msra.mxu0 0.0
    %2040 = vmatprep.subr.mxu0 0.0
    %2041 = vmatpush2.msra.mxu0 0.0
    %2042 = vmatprep.subr.mxu0 0.0
    %2043 = vmatpush2.msra.mxu0 0.0
    %2044 = vmatprep.subr.mxu0 0.0
    %2045 = vmatpush2.msra.mxu0 0.0
    %2046 = vmatprep.mubr.f32.mxu0 0.0
    %2047 = vmatmul.mubr.f32.gmra.mxu0 %v1810
    %v2048 = vpop.f32.mrf.mxu0
    %v2049 = vadd.f32 0.0, %v2048
    %v2050 = vpop.f32.mrf.mxu0
    %v2051 = vadd.f32 0.0, %v2050
    %2052 = vdwg.mxu0
    %2053 = vmatprep.subr.mxu0 %v148
    %2054 = vmatpush1.msra.mxu0 %v147
    %2055 = vmatprep.subr.mxu0 %v144
    %2056 = vmatpush1.msra.mxu0 %v143
    %2057 = vmatprep.subr.mxu0 %v140
    %2058 = vmatpush1.msra.mxu0 %v139
    %2059 = vmatprep.subr.mxu0 %v136
    %2060 = vmatpush1.msra.mxu0 %v135
    %2061 = vmatprep.subr.mxu0 %v132
    %2062 = vmatpush1.msra.mxu0 %v131
    %2063 = vmatprep.subr.mxu0 %v128
    %2064 = vmatpush1.msra.mxu0 %v127
    %2065 = vmatprep.subr.mxu0 %v124
    %2066 = vmatpush1.msra.mxu0 %v123
    %2067 = vmatprep.subr.mxu0 %v120
    %2068 = vmatpush1.msra.mxu0 %v119
    %2069 = vmatprep.subr.mxu0 %v116
    %2070 = vmatpush1.msra.mxu0 %v115
    %2071 = vmatprep.subr.mxu0 %v112
    %2072 = vmatpush1.msra.mxu0 %v111
    %2073 = vmatprep.subr.mxu0 %v108
    %2074 = vmatpush1.msra.mxu0 %v107
    %2075 = vmatprep.subr.mxu0 %v104
    %2076 = vmatpush1.msra.mxu0 %v103
    %2077 = vmatprep.subr.mxu0 %v100
    %2078 = vmatpush1.msra.mxu0 %v99
    %2079 = vmatprep.subr.mxu0 %v96
    %2080 = vmatpush1.msra.mxu0 %v95
    %2081 = vmatprep.subr.mxu0 %v92
    %2082 = vmatpush1.msra.mxu0 %v91
    %2083 = vmatprep.subr.mxu0 %v88
    %2084 = vmatpush1.msra.mxu0 %v87
    %2085 = vmatprep.subr.mxu0 0.0
    %2086 = vmatpush2.msra.mxu0 0.0
    %2087 = vmatprep.subr.mxu0 0.0
    %2088 = vmatpush2.msra.mxu0 0.0
    %2089 = vmatprep.subr.mxu0 0.0
    %2090 = vmatpush2.msra.mxu0 0.0
    %2091 = vmatprep.subr.mxu0 0.0
    %2092 = vmatpush2.msra.mxu0 0.0
    %2093 = vmatprep.subr.mxu0 0.0
    %2094 = vmatpush2.msra.mxu0 0.0
    %2095 = vmatprep.subr.mxu0 0.0
    %2096 = vmatpush2.msra.mxu0 0.0
    %2097 = vmatprep.subr.mxu0 0.0
    %2098 = vmatpush2.msra.mxu0 0.0
    %2099 = vmatprep.subr.mxu0 0.0
    %2100 = vmatpush2.msra.mxu0 0.0
    %2101 = vmatprep.subr.mxu0 0.0
    %2102 = vmatpush2.msra.mxu0 0.0
    %2103 = vmatprep.subr.mxu0 0.0
    %2104 = vmatpush2.msra.mxu0 0.0
    %2105 = vmatprep.subr.mxu0 0.0
    %2106 = vmatpush2.msra.mxu0 0.0
    %2107 = vmatprep.subr.mxu0 0.0
    %2108 = vmatpush2.msra.mxu0 0.0
    %2109 = vmatprep.subr.mxu0 0.0
    %2110 = vmatpush2.msra.mxu0 0.0
    %2111 = vmatprep.subr.mxu0 0.0
    %2112 = vmatpush2.msra.mxu0 0.0
    %2113 = vmatprep.subr.mxu0 0.0
    %2114 = vmatpush2.msra.mxu0 0.0
    %2115 = vmatprep.subr.mxu0 0.0
    %2116 = vmatpush2.msra.mxu0 0.0
    %2117 = vmatprep.mubr.f32.mxu0 0.0
    %2118 = vmatmul.mubr.f32.gmra.mxu0 %v1810
    %v2119 = vpop.f32.mrf.mxu0
    %v2120 = vadd.f32 0.0, %v2119
    %v2121 = vpop.f32.mrf.mxu0
    %v2122 = vadd.f32 0.0, %v2121
    %2123 = vdwg.mxu0
    %v2124 = vadd.f32 %v1978, %v2049
    %v2125 = vadd.f32 %v1979, %v2051
    %v2126 = vadd.f32 %v1980, %v2120
    %v2127 = vadd.f32 %v1981, %v2122
    %v2128 = vxor.u32 %v2124, 2147483648
    %v2129 = vmul.f32 %v2128, 1.442695
    %v2130 = vpow.pop %v2129
    %v2131 = vadd.f32 %v2130, 1.0
    %v2132 = vrcp.pop %v2131
    %v2133 = vmul.f32 1.0, %v2132
    %v2134 = vxor.u32 %v2125, 2147483648
    %v2135 = vmul.f32 %v2134, 1.442695
    %v2136 = vpow.pop %v2135
    %v2137 = vadd.f32 %v2136, 1.0
    %v2138 = vrcp.pop %v2137
    %v2139 = vmul.f32 1.0, %v2138
    %v2140 = vtanh.pop %v2126
    %v2141 = vxor.u32 %v2127, 2147483648
    %v2142 = vmul.f32 %v2141, 1.442695
    %v2143 = vpow.pop %v2142
    %v2144 = vadd.f32 %v2143, 1.0
    %v2145 = vrcp.pop %v2144
    %v2146 = vmul.f32 1.0, %v2145
    %v2147 = vmul.f32 %v2139, %v1808
    %v2148 = vmul.f32 %v2133, %v2140
    %v2149 = vadd.f32 %v2147, %v2148
    %v2150 = vtanh.pop %v2149
    %v2151 = vmul.f32 %v2146, %v2150
    %2152 = vmatprep.subr.mxu0 %v380
    %2153 = vmatpush1.msra.mxu0 %v379
    %2154 = vmatprep.subr.mxu0 %v376
    %2155 = vmatpush1.msra.mxu0 %v375
    %2156 = vmatprep.subr.mxu0 %v372
    %2157 = vmatpush1.msra.mxu0 %v371
    %2158 = vmatprep.subr.mxu0 %v368
    %2159 = vmatpush1.msra.mxu0 %v367
    %2160 = vmatprep.subr.mxu0 %v364
    %2161 = vmatpush1.msra.mxu0 %v363
    %2162 = vmatprep.subr.mxu0 %v360
    %2163 = vmatpush1.msra.mxu0 %v359
    %2164 = vmatprep.subr.mxu0 %v356
    %2165 = vmatpush1.msra.mxu0 %v355
    %2166 = vmatprep.subr.mxu0 %v352
    %2167 = vmatpush1.msra.mxu0 %v351
    %2168 = vmatprep.subr.mxu0 %v348
    %2169 = vmatpush1.msra.mxu0 %v347
    %2170 = vmatprep.subr.mxu0 %v344
    %2171 = vmatpush1.msra.mxu0 %v343
    %2172 = vmatprep.subr.mxu0 %v340
    %2173 = vmatpush1.msra.mxu0 %v339
    %2174 = vmatprep.subr.mxu0 %v336
    %2175 = vmatpush1.msra.mxu0 %v335
    %2176 = vmatprep.subr.mxu0 %v332
    %2177 = vmatpush1.msra.mxu0 %v331
    %2178 = vmatprep.subr.mxu0 %v328
    %2179 = vmatpush1.msra.mxu0 %v327
    %2180 = vmatprep.subr.mxu0 %v324
    %2181 = vmatpush1.msra.mxu0 %v323
    %2182 = vmatprep.subr.mxu0 %v320
    %2183 = vmatpush1.msra.mxu0 %v319
    %2184 = vmatprep.subr.mxu0 %v444
    %2185 = vmatpush2.msra.mxu0 %v443
    %2186 = vmatprep.subr.mxu0 %v440
    %2187 = vmatpush2.msra.mxu0 %v439
    %2188 = vmatprep.subr.mxu0 %v436
    %2189 = vmatpush2.msra.mxu0 %v435
    %2190 = vmatprep.subr.mxu0 %v432
    %2191 = vmatpush2.msra.mxu0 %v431
    %2192 = vmatprep.subr.mxu0 %v428
    %2193 = vmatpush2.msra.mxu0 %v427
    %2194 = vmatprep.subr.mxu0 %v424
    %2195 = vmatpush2.msra.mxu0 %v423
    %2196 = vmatprep.subr.mxu0 %v420
    %2197 = vmatpush2.msra.mxu0 %v419
    %2198 = vmatprep.subr.mxu0 %v416
    %2199 = vmatpush2.msra.mxu0 %v415
    %2200 = vmatprep.subr.mxu0 %v412
    %2201 = vmatpush2.msra.mxu0 %v411
    %2202 = vmatprep.subr.mxu0 %v408
    %2203 = vmatpush2.msra.mxu0 %v407
    %2204 = vmatprep.subr.mxu0 %v404
    %2205 = vmatpush2.msra.mxu0 %v403
    %2206 = vmatprep.subr.mxu0 %v400
    %2207 = vmatpush2.msra.mxu0 %v399
    %2208 = vmatprep.subr.mxu0 %v396
    %2209 = vmatpush2.msra.mxu0 %v395
    %2210 = vmatprep.subr.mxu0 %v392
    %2211 = vmatpush2.msra.mxu0 %v391
    %2212 = vmatprep.subr.mxu0 %v388
    %2213 = vmatpush2.msra.mxu0 %v387
    %2214 = vmatprep.subr.mxu0 %v384
    %2215 = vmatpush2.msra.mxu0 %v383
    %2216 = vmatprep.mubr.f32.mxu0 %v1976
    %2217 = vmatmul.mubr.f32.gmra.mxu0 %v2151
    %v2218 = vpop.f32.mrf.mxu0
    %v2219 = vadd.f32 %v64, %v2218
    %v2220 = vpop.f32.mrf.mxu0
    %v2221 = vadd.f32 %v68, %v2220
    %2222 = vdwg.mxu0
    %2223 = vmatprep.subr.mxu0 %v382
    %2224 = vmatpush1.msra.mxu0 %v381
    %2225 = vmatprep.subr.mxu0 %v378
    %2226 = vmatpush1.msra.mxu0 %v377
    %2227 = vmatprep.subr.mxu0 %v374
    %2228 = vmatpush1.msra.mxu0 %v373
    %2229 = vmatprep.subr.mxu0 %v370
    %2230 = vmatpush1.msra.mxu0 %v369
    %2231 = vmatprep.subr.mxu0 %v366
    %2232 = vmatpush1.msra.mxu0 %v365
    %2233 = vmatprep.subr.mxu0 %v362
    %2234 = vmatpush1.msra.mxu0 %v361
    %2235 = vmatprep.subr.mxu0 %v358
    %2236 = vmatpush1.msra.mxu0 %v357
    %2237 = vmatprep.subr.mxu0 %v354
    %2238 = vmatpush1.msra.mxu0 %v353
    %2239 = vmatprep.subr.mxu0 %v350
    %2240 = vmatpush1.msra.mxu0 %v349
    %2241 = vmatprep.subr.mxu0 %v346
    %2242 = vmatpush1.msra.mxu0 %v345
    %2243 = vmatprep.subr.mxu0 %v342
    %2244 = vmatpush1.msra.mxu0 %v341
    %2245 = vmatprep.subr.mxu0 %v338
    %2246 = vmatpush1.msra.mxu0 %v337
    %2247 = vmatprep.subr.mxu0 %v334
    %2248 = vmatpush1.msra.mxu0 %v333
    %2249 = vmatprep.subr.mxu0 %v330
    %2250 = vmatpush1.msra.mxu0 %v329
    %2251 = vmatprep.subr.mxu0 %v326
    %2252 = vmatpush1.msra.mxu0 %v325
    %2253 = vmatprep.subr.mxu0 %v322
    %2254 = vmatpush1.msra.mxu0 %v321
    %2255 = vmatprep.subr.mxu0 %v446
    %2256 = vmatpush2.msra.mxu0 %v445
    %2257 = vmatprep.subr.mxu0 %v442
    %2258 = vmatpush2.msra.mxu0 %v441
    %2259 = vmatprep.subr.mxu0 %v438
    %2260 = vmatpush2.msra.mxu0 %v437
    %2261 = vmatprep.subr.mxu0 %v434
    %2262 = vmatpush2.msra.mxu0 %v433
    %2263 = vmatprep.subr.mxu0 %v430
    %2264 = vmatpush2.msra.mxu0 %v429
    %2265 = vmatprep.subr.mxu0 %v426
    %2266 = vmatpush2.msra.mxu0 %v425
    %2267 = vmatprep.subr.mxu0 %v422
    %2268 = vmatpush2.msra.mxu0 %v421
    %2269 = vmatprep.subr.mxu0 %v418
    %2270 = vmatpush2.msra.mxu0 %v417
    %2271 = vmatprep.subr.mxu0 %v414
    %2272 = vmatpush2.msra.mxu0 %v413
    %2273 = vmatprep.subr.mxu0 %v410
    %2274 = vmatpush2.msra.mxu0 %v409
    %2275 = vmatprep.subr.mxu0 %v406
    %2276 = vmatpush2.msra.mxu0 %v405
    %2277 = vmatprep.subr.mxu0 %v402
    %2278 = vmatpush2.msra.mxu0 %v401
    %2279 = vmatprep.subr.mxu0 %v398
    %2280 = vmatpush2.msra.mxu0 %v397
    %2281 = vmatprep.subr.mxu0 %v394
    %2282 = vmatpush2.msra.mxu0 %v393
    %2283 = vmatprep.subr.mxu0 %v390
    %2284 = vmatpush2.msra.mxu0 %v389
    %2285 = vmatprep.subr.mxu0 %v386
    %2286 = vmatpush2.msra.mxu0 %v385
    %2287 = vmatprep.mubr.f32.mxu0 %v1976
    %2288 = vmatmul.mubr.f32.gmra.mxu0 %v2151
    %v2289 = vpop.f32.mrf.mxu0
    %v2290 = vadd.f32 %v72, %v2289
    %v2291 = vpop.f32.mrf.mxu0
    %v2292 = vadd.f32 %v76, %v2291
    %2293 = vdwg.mxu0
    %v2294 = vxor.u32 %v2219, 2147483648
    %v2295 = vmul.f32 %v2294, 1.442695
    %v2296 = vpow.pop %v2295
    %v2297 = vadd.f32 %v2296, 1.0
    %v2298 = vrcp.pop %v2297
    %v2299 = vmul.f32 1.0, %v2298
    %v2300 = vxor.u32 %v2221, 2147483648
    %v2301 = vmul.f32 %v2300, 1.442695
    %v2302 = vpow.pop %v2301
    %v2303 = vadd.f32 %v2302, 1.0
    %v2304 = vrcp.pop %v2303
    %v2305 = vmul.f32 1.0, %v2304
    %v2306 = vtanh.pop %v2290
    %v2307 = vxor.u32 %v2292, 2147483648
    %v2308 = vmul.f32 %v2307, 1.442695
    %v2309 = vpow.pop %v2308
    %v2310 = vadd.f32 %v2309, 1.0
    %v2311 = vrcp.pop %v2310
    %v2312 = vmul.f32 1.0, %v2311
    %v2313 = vmul.f32 %v2305, %v1974
    %v2314 = vmul.f32 %v2299, %v2306
    %v2315 = vadd.f32 %v2313, %v2314
    %v2316 = vtanh.pop %v2315
    %v2317 = vmul.f32 %v2312, %v2316
    %s2318 = scalar_lea.vmem %s0, 192
    %v2319 = vld [vmem:[%s2318] sm:$0xff]
    %v2320 = vld [vmem:[%s2318 + $0x8] sm:$0xff]
    %v2321 = vld [vmem:[%s2318 + $0x10] sm:$0xff]
    %v2322 = vld [vmem:[%s2318 + $0x18] sm:$0xff]
    %2323 = vmatprep.subr.mxu0 %v146
    %2324 = vmatpush1.msra.mxu0 %v145
    %2325 = vmatprep.subr.mxu0 %v142
    %2326 = vmatpush1.msra.mxu0 %v141
    %2327 = vmatprep.subr.mxu0 %v138
    %2328 = vmatpush1.msra.mxu0 %v137
    %2329 = vmatprep.subr.mxu0 %v134
    %2330 = vmatpush1.msra.mxu0 %v133
    %2331 = vmatprep.subr.mxu0 %v130
    %2332 = vmatpush1.msra.mxu0 %v129
    %2333 = vmatprep.subr.mxu0 %v126
    %2334 = vmatpush1.msra.mxu0 %v125
    %2335 = vmatprep.subr.mxu0 %v122
    %2336 = vmatpush1.msra.mxu0 %v121
    %2337 = vmatprep.subr.mxu0 %v118
    %2338 = vmatpush1.msra.mxu0 %v117
    %2339 = vmatprep.subr.mxu0 %v114
    %2340 = vmatpush1.msra.mxu0 %v113
    %2341 = vmatprep.subr.mxu0 %v110
    %2342 = vmatpush1.msra.mxu0 %v109
    %2343 = vmatprep.subr.mxu0 %v106
    %2344 = vmatpush1.msra.mxu0 %v105
    %2345 = vmatprep.subr.mxu0 %v102
    %2346 = vmatpush1.msra.mxu0 %v101
    %2347 = vmatprep.subr.mxu0 %v98
    %2348 = vmatpush1.msra.mxu0 %v97
    %2349 = vmatprep.subr.mxu0 %v94
    %2350 = vmatpush1.msra.mxu0 %v93
    %2351 = vmatprep.subr.mxu0 %v90
    %2352 = vmatpush1.msra.mxu0 %v89
    %2353 = vmatprep.subr.mxu0 %v86
    %2354 = vmatpush1.msra.mxu0 %v85
    %2355 = vmatprep.subr.mxu0 0.0
    %2356 = vmatpush2.msra.mxu0 0.0
    %2357 = vmatprep.subr.mxu0 0.0
    %2358 = vmatpush2.msra.mxu0 0.0
    %2359 = vmatprep.subr.mxu0 0.0
    %2360 = vmatpush2.msra.mxu0 0.0
    %2361 = vmatprep.subr.mxu0 0.0
    %2362 = vmatpush2.msra.mxu0 0.0
    %2363 = vmatprep.subr.mxu0 0.0
    %2364 = vmatpush2.msra.mxu0 0.0
    %2365 = vmatprep.subr.mxu0 0.0
    %2366 = vmatpush2.msra.mxu0 0.0
    %2367 = vmatprep.subr.mxu0 0.0
    %2368 = vmatpush2.msra.mxu0 0.0
    %2369 = vmatprep.subr.mxu0 0.0
    %2370 = vmatpush2.msra.mxu0 0.0
    %2371 = vmatprep.subr.mxu0 0.0
    %2372 = vmatpush2.msra.mxu0 0.0
    %2373 = vmatprep.subr.mxu0 0.0
    %2374 = vmatpush2.msra.mxu0 0.0
    %2375 = vmatprep.subr.mxu0 0.0
    %2376 = vmatpush2.msra.mxu0 0.0
    %2377 = vmatprep.subr.mxu0 0.0
    %2378 = vmatpush2.msra.mxu0 0.0
    %2379 = vmatprep.subr.mxu0 0.0
    %2380 = vmatpush2.msra.mxu0 0.0
    %2381 = vmatprep.subr.mxu0 0.0
    %2382 = vmatpush2.msra.mxu0 0.0
    %2383 = vmatprep.subr.mxu0 0.0
    %2384 = vmatpush2.msra.mxu0 0.0
    %2385 = vmatprep.subr.mxu0 0.0
    %2386 = vmatpush2.msra.mxu0 0.0
    %2387 = vmatprep.mubr.f32.mxu0 0.0
    %2388 = vmatmul.mubr.f32.gmra.mxu0 %v2151
    %v2389 = vpop.f32.mrf.mxu0
    %v2390 = vadd.f32 0.0, %v2389
    %v2391 = vpop.f32.mrf.mxu0
    %v2392 = vadd.f32 0.0, %v2391
    %2393 = vdwg.mxu0
    %2394 = vmatprep.subr.mxu0 %v148
    %2395 = vmatpush1.msra.mxu0 %v147
    %2396 = vmatprep.subr.mxu0 %v144
    %2397 = vmatpush1.msra.mxu0 %v143
    %2398 = vmatprep.subr.mxu0 %v140
    %2399 = vmatpush1.msra.mxu0 %v139
    %2400 = vmatprep.subr.mxu0 %v136
    %2401 = vmatpush1.msra.mxu0 %v135
    %2402 = vmatprep.subr.mxu0 %v132
    %2403 = vmatpush1.msra.mxu0 %v131
    %2404 = vmatprep.subr.mxu0 %v128
    %2405 = vmatpush1.msra.mxu0 %v127
    %2406 = vmatprep.subr.mxu0 %v124
    %2407 = vmatpush1.msra.mxu0 %v123
    %2408 = vmatprep.subr.mxu0 %v120
    %2409 = vmatpush1.msra.mxu0 %v119
    %2410 = vmatprep.subr.mxu0 %v116
    %2411 = vmatpush1.msra.mxu0 %v115
    %2412 = vmatprep.subr.mxu0 %v112
    %2413 = vmatpush1.msra.mxu0 %v111
    %2414 = vmatprep.subr.mxu0 %v108
    %2415 = vmatpush1.msra.mxu0 %v107
    %2416 = vmatprep.subr.mxu0 %v104
    %2417 = vmatpush1.msra.mxu0 %v103
    %2418 = vmatprep.subr.mxu0 %v100
    %2419 = vmatpush1.msra.mxu0 %v99
    %2420 = vmatprep.subr.mxu0 %v96
    %2421 = vmatpush1.msra.mxu0 %v95
    %2422 = vmatprep.subr.mxu0 %v92
    %2423 = vmatpush1.msra.mxu0 %v91
    %2424 = vmatprep.subr.mxu0 %v88
    %2425 = vmatpush1.msra.mxu0 %v87
    %2426 = vmatprep.subr.mxu0 0.0
    %2427 = vmatpush2.msra.mxu0 0.0
    %2428 = vmatprep.subr.mxu0 0.0
    %2429 = vmatpush2.msra.mxu0 0.0
    %2430 = vmatprep.subr.mxu0 0.0
    %2431 = vmatpush2.msra.mxu0 0.0
    %2432 = vmatprep.subr.mxu0 0.0
    %2433 = vmatpush2.msra.mxu0 0.0
    %2434 = vmatprep.subr.mxu0 0.0
    %2435 = vmatpush2.msra.mxu0 0.0
    %2436 = vmatprep.subr.mxu0 0.0
    %2437 = vmatpush2.msra.mxu0 0.0
    %2438 = vmatprep.subr.mxu0 0.0
    %2439 = vmatpush2.msra.mxu0 0.0
    %2440 = vmatprep.subr.mxu0 0.0
    %2441 = vmatpush2.msra.mxu0 0.0
    %2442 = vmatprep.subr.mxu0 0.0
    %2443 = vmatpush2.msra.mxu0 0.0
    %2444 = vmatprep.subr.mxu0 0.0
    %2445 = vmatpush2.msra.mxu0 0.0
    %2446 = vmatprep.subr.mxu0 0.0
    %2447 = vmatpush2.msra.mxu0 0.0
    %2448 = vmatprep.subr.mxu0 0.0
    %2449 = vmatpush2.msra.mxu0 0.0
    %2450 = vmatprep.subr.mxu0 0.0
    %2451 = vmatpush2.msra.mxu0 0.0
    %2452 = vmatprep.subr.mxu0 0.0
    %2453 = vmatpush2.msra.mxu0 0.0
    %2454 = vmatprep.subr.mxu0 0.0
    %2455 = vmatpush2.msra.mxu0 0.0
    %2456 = vmatprep.subr.mxu0 0.0
    %2457 = vmatpush2.msra.mxu0 0.0
    %2458 = vmatprep.mubr.f32.mxu0 0.0
    %2459 = vmatmul.mubr.f32.gmra.mxu0 %v2151
    %v2460 = vpop.f32.mrf.mxu0
    %v2461 = vadd.f32 0.0, %v2460
    %v2462 = vpop.f32.mrf.mxu0
    %v2463 = vadd.f32 0.0, %v2462
    %2464 = vdwg.mxu0
    %v2465 = vadd.f32 %v2319, %v2390
    %v2466 = vadd.f32 %v2320, %v2392
    %v2467 = vadd.f32 %v2321, %v2461
    %v2468 = vadd.f32 %v2322, %v2463
    %v2469 = vxor.u32 %v2465, 2147483648
    %v2470 = vmul.f32 %v2469, 1.442695
    %v2471 = vpow.pop %v2470
    %v2472 = vadd.f32 %v2471, 1.0
    %v2473 = vrcp.pop %v2472
    %v2474 = vmul.f32 1.0, %v2473
    %v2475 = vxor.u32 %v2466, 2147483648
    %v2476 = vmul.f32 %v2475, 1.442695
    %v2477 = vpow.pop %v2476
    %v2478 = vadd.f32 %v2477, 1.0
    %v2479 = vrcp.pop %v2478
    %v2480 = vmul.f32 1.0, %v2479
    %v2481 = vtanh.pop %v2467
    %v2482 = vxor.u32 %v2468, 2147483648
    %v2483 = vmul.f32 %v2482, 1.442695
    %v2484 = vpow.pop %v2483
    %v2485 = vadd.f32 %v2484, 1.0
    %v2486 = vrcp.pop %v2485
    %v2487 = vmul.f32 1.0, %v2486
    %v2488 = vmul.f32 %v2480, %v2149
    %v2489 = vmul.f32 %v2474, %v2481
    %v2490 = vadd.f32 %v2488, %v2489
    %v2491 = vtanh.pop %v2490
    %v2492 = vmul.f32 %v2487, %v2491
    %2493 = vmatprep.subr.mxu0 %v380
    %2494 = vmatpush1.msra.mxu0 %v379
    %2495 = vmatprep.subr.mxu0 %v376
    %2496 = vmatpush1.msra.mxu0 %v375
    %2497 = vmatprep.subr.mxu0 %v372
    %2498 = vmatpush1.msra.mxu0 %v371
    %2499 = vmatprep.subr.mxu0 %v368
    %2500 = vmatpush1.msra.mxu0 %v367
    %2501 = vmatprep.subr.mxu0 %v364
    %2502 = vmatpush1.msra.mxu0 %v363
    %2503 = vmatprep.subr.mxu0 %v360
    %2504 = vmatpush1.msra.mxu0 %v359
    %2505 = vmatprep.subr.mxu0 %v356
    %2506 = vmatpush1.msra.mxu0 %v355
    %2507 = vmatprep.subr.mxu0 %v352
    %2508 = vmatpush1.msra.mxu0 %v351
    %2509 = vmatprep.subr.mxu0 %v348
    %2510 = vmatpush1.msra.mxu0 %v347
    %2511 = vmatprep.subr.mxu0 %v344
    %2512 = vmatpush1.msra.mxu0 %v343
    %2513 = vmatprep.subr.mxu0 %v340
    %2514 = vmatpush1.msra.mxu0 %v339
    %2515 = vmatprep.subr.mxu0 %v336
    %2516 = vmatpush1.msra.mxu0 %v335
    %2517 = vmatprep.subr.mxu0 %v332
    %2518 = vmatpush1.msra.mxu0 %v331
    %2519 = vmatprep.subr.mxu0 %v328
    %2520 = vmatpush1.msra.mxu0 %v327
    %2521 = vmatprep.subr.mxu0 %v324
    %2522 = vmatpush1.msra.mxu0 %v323
    %2523 = vmatprep.subr.mxu0 %v320
    %2524 = vmatpush1.msra.mxu0 %v319
    %2525 = vmatprep.subr.mxu0 %v444
    %2526 = vmatpush2.msra.mxu0 %v443
    %2527 = vmatprep.subr.mxu0 %v440
    %2528 = vmatpush2.msra.mxu0 %v439
    %2529 = vmatprep.subr.mxu0 %v436
    %2530 = vmatpush2.msra.mxu0 %v435
    %2531 = vmatprep.subr.mxu0 %v432
    %2532 = vmatpush2.msra.mxu0 %v431
    %2533 = vmatprep.subr.mxu0 %v428
    %2534 = vmatpush2.msra.mxu0 %v427
    %2535 = vmatprep.subr.mxu0 %v424
    %2536 = vmatpush2.msra.mxu0 %v423
    %2537 = vmatprep.subr.mxu0 %v420
    %2538 = vmatpush2.msra.mxu0 %v419
    %2539 = vmatprep.subr.mxu0 %v416
    %2540 = vmatpush2.msra.mxu0 %v415
    %2541 = vmatprep.subr.mxu0 %v412
    %2542 = vmatpush2.msra.mxu0 %v411
    %2543 = vmatprep.subr.mxu0 %v408
    %2544 = vmatpush2.msra.mxu0 %v407
    %2545 = vmatprep.subr.mxu0 %v404
    %2546 = vmatpush2.msra.mxu0 %v403
    %2547 = vmatprep.subr.mxu0 %v400
    %2548 = vmatpush2.msra.mxu0 %v399
    %2549 = vmatprep.subr.mxu0 %v396
    %2550 = vmatpush2.msra.mxu0 %v395
    %2551 = vmatprep.subr.mxu0 %v392
    %2552 = vmatpush2.msra.mxu0 %v391
    %2553 = vmatprep.subr.mxu0 %v388
    %2554 = vmatpush2.msra.mxu0 %v387
    %2555 = vmatprep.subr.mxu0 %v384
    %2556 = vmatpush2.msra.mxu0 %v383
    %2557 = vmatprep.mubr.f32.mxu0 %v2317
    %2558 = vmatmul.mubr.f32.gmra.mxu0 %v2492
    %v2559 = vpop.f32.mrf.mxu0
    %v2560 = vadd.f32 %v64, %v2559
    %v2561 = vpop.f32.mrf.mxu0
    %v2562 = vadd.f32 %v68, %v2561
    %2563 = vdwg.mxu0
    %2564 = vmatprep.subr.mxu0 %v382
    %2565 = vmatpush1.msra.mxu0 %v381
    %2566 = vmatprep.subr.mxu0 %v378
    %2567 = vmatpush1.msra.mxu0 %v377
    %2568 = vmatprep.subr.mxu0 %v374
    %2569 = vmatpush1.msra.mxu0 %v373
    %2570 = vmatprep.subr.mxu0 %v370
    %2571 = vmatpush1.msra.mxu0 %v369
    %2572 = vmatprep.subr.mxu0 %v366
    %2573 = vmatpush1.msra.mxu0 %v365
    %2574 = vmatprep.subr.mxu0 %v362
    %2575 = vmatpush1.msra.mxu0 %v361
    %2576 = vmatprep.subr.mxu0 %v358
    %2577 = vmatpush1.msra.mxu0 %v357
    %2578 = vmatprep.subr.mxu0 %v354
    %2579 = vmatpush1.msra.mxu0 %v353
    %2580 = vmatprep.subr.mxu0 %v350
    %2581 = vmatpush1.msra.mxu0 %v349
    %2582 = vmatprep.subr.mxu0 %v346
    %2583 = vmatpush1.msra.mxu0 %v345
    %2584 = vmatprep.subr.mxu0 %v342
    %2585 = vmatpush1.msra.mxu0 %v341
    %2586 = vmatprep.subr.mxu0 %v338
    %2587 = vmatpush1.msra.mxu0 %v337
    %2588 = vmatprep.subr.mxu0 %v334
    %2589 = vmatpush1.msra.mxu0 %v333
    %2590 = vmatprep.subr.mxu0 %v330
    %2591 = vmatpush1.msra.mxu0 %v329
    %2592 = vmatprep.subr.mxu0 %v326
    %2593 = vmatpush1.msra.mxu0 %v325
    %2594 = vmatprep.subr.mxu0 %v322
    %2595 = vmatpush1.msra.mxu0 %v321
    %2596 = vmatprep.subr.mxu0 %v446
    %2597 = vmatpush2.msra.mxu0 %v445
    %2598 = vmatprep.subr.mxu0 %v442
    %2599 = vmatpush2.msra.mxu0 %v441
    %2600 = vmatprep.subr.mxu0 %v438
    %2601 = vmatpush2.msra.mxu0 %v437
    %2602 = vmatprep.subr.mxu0 %v434
    %2603 = vmatpush2.msra.mxu0 %v433
    %2604 = vmatprep.subr.mxu0 %v430
    %2605 = vmatpush2.msra.mxu0 %v429
    %2606 = vmatprep.subr.mxu0 %v426
    %2607 = vmatpush2.msra.mxu0 %v425
    %2608 = vmatprep.subr.mxu0 %v422
    %2609 = vmatpush2.msra.mxu0 %v421
    %2610 = vmatprep.subr.mxu0 %v418
    %2611 = vmatpush2.msra.mxu0 %v417
    %2612 = vmatprep.subr.mxu0 %v414
    %2613 = vmatpush2.msra.mxu0 %v413
    %2614 = vmatprep.subr.mxu0 %v410
    %2615 = vmatpush2.msra.mxu0 %v409
    %2616 = vmatprep.subr.mxu0 %v406
    %2617 = vmatpush2.msra.mxu0 %v405
    %2618 = vmatprep.subr.mxu0 %v402
    %2619 = vmatpush2.msra.mxu0 %v401
    %2620 = vmatprep.subr.mxu0 %v398
    %2621 = vmatpush2.msra.mxu0 %v397
    %2622 = vmatprep.subr.mxu0 %v394
    %2623 = vmatpush2.msra.mxu0 %v393
    %2624 = vmatprep.subr.mxu0 %v390
    %2625 = vmatpush2.msra.mxu0 %v389
    %2626 = vmatprep.subr.mxu0 %v386
    %2627 = vmatpush2.msra.mxu0 %v385
    %2628 = vmatprep.mubr.f32.mxu0 %v2317
    %2629 = vmatmul.mubr.f32.gmra.mxu0 %v2492
    %v2630 = vpop.f32.mrf.mxu0
    %v2631 = vadd.f32 %v72, %v2630
    %v2632 = vpop.f32.mrf.mxu0
    %v2633 = vadd.f32 %v76, %v2632
    %2634 = vdwg.mxu0
    %v2635 = vxor.u32 %v2560, 2147483648
    %v2636 = vmul.f32 %v2635, 1.442695
    %v2637 = vpow.pop %v2636
    %v2638 = vadd.f32 %v2637, 1.0
    %v2639 = vrcp.pop %v2638
    %v2640 = vmul.f32 1.0, %v2639
    %v2641 = vxor.u32 %v2562, 2147483648
    %v2642 = vmul.f32 %v2641, 1.442695
    %v2643 = vpow.pop %v2642
    %v2644 = vadd.f32 %v2643, 1.0
    %v2645 = vrcp.pop %v2644
    %v2646 = vmul.f32 1.0, %v2645
    %v2647 = vtanh.pop %v2631
    %v2648 = vxor.u32 %v2633, 2147483648
    %v2649 = vmul.f32 %v2648, 1.442695
    %v2650 = vpow.pop %v2649
    %v2651 = vadd.f32 %v2650, 1.0
    %v2652 = vrcp.pop %v2651
    %v2653 = vmul.f32 1.0, %v2652
    %v2654 = vmul.f32 %v2646, %v2315
    %v2655 = vmul.f32 %v2640, %v2647
    %v2656 = vadd.f32 %v2654, %v2655
    %v2657 = vtanh.pop %v2656
    %v2658 = vmul.f32 %v2653, %v2657
    %s2659 = scalar_lea.vmem %s0, 224
    %v2660 = vld [vmem:[%s2659] sm:$0xff]
    %v2661 = vld [vmem:[%s2659 + $0x8] sm:$0xff]
    %v2662 = vld [vmem:[%s2659 + $0x10] sm:$0xff]
    %v2663 = vld [vmem:[%s2659 + $0x18] sm:$0xff]
    %2664 = vmatprep.subr.mxu0 %v146
    %2665 = vmatpush1.msra.mxu0 %v145
    %2666 = vmatprep.subr.mxu0 %v142
    %2667 = vmatpush1.msra.mxu0 %v141
    %2668 = vmatprep.subr.mxu0 %v138
    %2669 = vmatpush1.msra.mxu0 %v137
    %2670 = vmatprep.subr.mxu0 %v134
    %2671 = vmatpush1.msra.mxu0 %v133
    %2672 = vmatprep.subr.mxu0 %v130
    %2673 = vmatpush1.msra.mxu0 %v129
    %2674 = vmatprep.subr.mxu0 %v126
    %2675 = vmatpush1.msra.mxu0 %v125
    %2676 = vmatprep.subr.mxu0 %v122
    %2677 = vmatpush1.msra.mxu0 %v121
    %2678 = vmatprep.subr.mxu0 %v118
    %2679 = vmatpush1.msra.mxu0 %v117
    %2680 = vmatprep.subr.mxu0 %v114
    %2681 = vmatpush1.msra.mxu0 %v113
    %2682 = vmatprep.subr.mxu0 %v110
    %2683 = vmatpush1.msra.mxu0 %v109
    %2684 = vmatprep.subr.mxu0 %v106
    %2685 = vmatpush1.msra.mxu0 %v105
    %2686 = vmatprep.subr.mxu0 %v102
    %2687 = vmatpush1.msra.mxu0 %v101
    %2688 = vmatprep.subr.mxu0 %v98
    %2689 = vmatpush1.msra.mxu0 %v97
    %2690 = vmatprep.subr.mxu0 %v94
    %2691 = vmatpush1.msra.mxu0 %v93
    %2692 = vmatprep.subr.mxu0 %v90
    %2693 = vmatpush1.msra.mxu0 %v89
    %2694 = vmatprep.subr.mxu0 %v86
    %2695 = vmatpush1.msra.mxu0 %v85
    %2696 = vmatprep.subr.mxu0 0.0
    %2697 = vmatpush2.msra.mxu0 0.0
    %2698 = vmatprep.subr.mxu0 0.0
    %2699 = vmatpush2.msra.mxu0 0.0
    %2700 = vmatprep.subr.mxu0 0.0
    %2701 = vmatpush2.msra.mxu0 0.0
    %2702 = vmatprep.subr.mxu0 0.0
    %2703 = vmatpush2.msra.mxu0 0.0
    %2704 = vmatprep.subr.mxu0 0.0
    %2705 = vmatpush2.msra.mxu0 0.0
    %2706 = vmatprep.subr.mxu0 0.0
    %2707 = vmatpush2.msra.mxu0 0.0
    %2708 = vmatprep.subr.mxu0 0.0
    %2709 = vmatpush2.msra.mxu0 0.0
    %2710 = vmatprep.subr.mxu0 0.0
    %2711 = vmatpush2.msra.mxu0 0.0
    %2712 = vmatprep.subr.mxu0 0.0
    %2713 = vmatpush2.msra.mxu0 0.0
    %2714 = vmatprep.subr.mxu0 0.0
    %2715 = vmatpush2.msra.mxu0 0.0
    %2716 = vmatprep.subr.mxu0 0.0
    %2717 = vmatpush2.msra.mxu0 0.0
    %2718 = vmatprep.subr.mxu0 0.0
    %2719 = vmatpush2.msra.mxu0 0.0
    %2720 = vmatprep.subr.mxu0 0.0
    %2721 = vmatpush2.msra.mxu0 0.0
    %2722 = vmatprep.subr.mxu0 0.0
    %2723 = vmatpush2.msra.mxu0 0.0
    %2724 = vmatprep.subr.mxu0 0.0
    %2725 = vmatpush2.msra.mxu0 0.0
    %2726 = vmatprep.subr.mxu0 0.0
    %2727 = vmatpush2.msra.mxu0 0.0
    %2728 = vmatprep.mubr.f32.mxu0 0.0
    %2729 = vmatmul.mubr.f32.gmra.mxu0 %v2492
    %v2730 = vpop.f32.mrf.mxu0
    %v2731 = vadd.f32 0.0, %v2730
    %v2732 = vpop.f32.mrf.mxu0
    %v2733 = vadd.f32 0.0, %v2732
    %2734 = vdwg.mxu0
    %2735 = vmatprep.subr.mxu0 %v148
    %2736 = vmatpush1.msra.mxu0 %v147
    %2737 = vmatprep.subr.mxu0 %v144
    %2738 = vmatpush1.msra.mxu0 %v143
    %2739 = vmatprep.subr.mxu0 %v140
    %2740 = vmatpush1.msra.mxu0 %v139
    %2741 = vmatprep.subr.mxu0 %v136
    %2742 = vmatpush1.msra.mxu0 %v135
    %2743 = vmatprep.subr.mxu0 %v132
    %2744 = vmatpush1.msra.mxu0 %v131
    %2745 = vmatprep.subr.mxu0 %v128
    %2746 = vmatpush1.msra.mxu0 %v127
    %2747 = vmatprep.subr.mxu0 %v124
    %2748 = vmatpush1.msra.mxu0 %v123
    %2749 = vmatprep.subr.mxu0 %v120
    %2750 = vmatpush1.msra.mxu0 %v119
    %2751 = vmatprep.subr.mxu0 %v116
    %2752 = vmatpush1.msra.mxu0 %v115
    %2753 = vmatprep.subr.mxu0 %v112
    %2754 = vmatpush1.msra.mxu0 %v111
    %2755 = vmatprep.subr.mxu0 %v108
    %2756 = vmatpush1.msra.mxu0 %v107
    %2757 = vmatprep.subr.mxu0 %v104
    %2758 = vmatpush1.msra.mxu0 %v103
    %2759 = vmatprep.subr.mxu0 %v100
    %2760 = vmatpush1.msra.mxu0 %v99
    %2761 = vmatprep.subr.mxu0 %v96
    %2762 = vmatpush1.msra.mxu0 %v95
    %2763 = vmatprep.subr.mxu0 %v92
    %2764 = vmatpush1.msra.mxu0 %v91
    %2765 = vmatprep.subr.mxu0 %v88
    %2766 = vmatpush1.msra.mxu0 %v87
    %2767 = vmatprep.subr.mxu0 0.0
    %2768 = vmatpush2.msra.mxu0 0.0
    %2769 = vmatprep.subr.mxu0 0.0
    %2770 = vmatpush2.msra.mxu0 0.0
    %2771 = vmatprep.subr.mxu0 0.0
    %2772 = vmatpush2.msra.mxu0 0.0
    %2773 = vmatprep.subr.mxu0 0.0
    %2774 = vmatpush2.msra.mxu0 0.0
    %2775 = vmatprep.subr.mxu0 0.0
    %2776 = vmatpush2.msra.mxu0 0.0
    %2777 = vmatprep.subr.mxu0 0.0
    %2778 = vmatpush2.msra.mxu0 0.0
    %2779 = vmatprep.subr.mxu0 0.0
    %2780 = vmatpush2.msra.mxu0 0.0
    %2781 = vmatprep.subr.mxu0 0.0
    %2782 = vmatpush2.msra.mxu0 0.0
    %2783 = vmatprep.subr.mxu0 0.0
    %2784 = vmatpush2.msra.mxu0 0.0
    %2785 = vmatprep.subr.mxu0 0.0
    %2786 = vmatpush2.msra.mxu0 0.0
    %2787 = vmatprep.subr.mxu0 0.0
    %2788 = vmatpush2.msra.mxu0 0.0
    %2789 = vmatprep.subr.mxu0 0.0
    %2790 = vmatpush2.msra.mxu0 0.0
    %2791 = vmatprep.subr.mxu0 0.0
    %2792 = vmatpush2.msra.mxu0 0.0
    %2793 = vmatprep.subr.mxu0 0.0
    %2794 = vmatpush2.msra.mxu0 0.0
    %2795 = vmatprep.subr.mxu0 0.0
    %2796 = vmatpush2.msra.mxu0 0.0
    %2797 = vmatprep.subr.mxu0 0.0
    %2798 = vmatpush2.msra.mxu0 0.0
    %2799 = vmatprep.mubr.f32.mxu0 0.0
    %2800 = vmatmul.mubr.f32.gmra.mxu0 %v2492
    %v2801 = vpop.f32.mrf.mxu0
    %v2802 = vadd.f32 0.0, %v2801
    %v2803 = vpop.f32.mrf.mxu0
    %v2804 = vadd.f32 0.0, %v2803
    %2805 = vdwg.mxu0
    %v2806 = vadd.f32 %v2660, %v2731
    %v2807 = vadd.f32 %v2661, %v2733
    %v2808 = vadd.f32 %v2662, %v2802
    %v2809 = vadd.f32 %v2663, %v2804
    %v2810 = vxor.u32 %v2806, 2147483648
    %v2811 = vmul.f32 %v2810, 1.442695
    %v2812 = vpow.pop %v2811
    %v2813 = vadd.f32 %v2812, 1.0
    %v2814 = vrcp.pop %v2813
    %v2815 = vmul.f32 1.0, %v2814
    %v2816 = vxor.u32 %v2807, 2147483648
    %v2817 = vmul.f32 %v2816, 1.442695
    %v2818 = vpow.pop %v2817
    %v2819 = vadd.f32 %v2818, 1.0
    %v2820 = vrcp.pop %v2819
    %v2821 = vmul.f32 1.0, %v2820
    %v2822 = vtanh.pop %v2808
    %v2823 = vxor.u32 %v2809, 2147483648
    %v2824 = vmul.f32 %v2823, 1.442695
    %v2825 = vpow.pop %v2824
    %v2826 = vadd.f32 %v2825, 1.0
    %v2827 = vrcp.pop %v2826
    %v2828 = vmul.f32 1.0, %v2827
    %v2829 = vmul.f32 %v2821, %v2490
    %v2830 = vmul.f32 %v2815, %v2822
    %v2831 = vadd.f32 %v2829, %v2830
    %v2832 = vtanh.pop %v2831
    %v2833 = vmul.f32 %v2828, %v2832
    %2834 = vmatprep.subr.mxu0 %v380
    %2835 = vmatpush1.msra.mxu0 %v379
    %2836 = vmatprep.subr.mxu0 %v376
    %2837 = vmatpush1.msra.mxu0 %v375
    %2838 = vmatprep.subr.mxu0 %v372
    %2839 = vmatpush1.msra.mxu0 %v371
    %2840 = vmatprep.subr.mxu0 %v368
    %2841 = vmatpush1.msra.mxu0 %v367
    %2842 = vmatprep.subr.mxu0 %v364
    %2843 = vmatpush1.msra.mxu0 %v363
    %2844 = vmatprep.subr.mxu0 %v360
    %2845 = vmatpush1.msra.mxu0 %v359
    %2846 = vmatprep.subr.mxu0 %v356
    %2847 = vmatpush1.msra.mxu0 %v355
    %2848 = vmatprep.subr.mxu0 %v352
    %2849 = vmatpush1.msra.mxu0 %v351
    %2850 = vmatprep.subr.mxu0 %v348
    %2851 = vmatpush1.msra.mxu0 %v347
    %2852 = vmatprep.subr.mxu0 %v344
    %2853 = vmatpush1.msra.mxu0 %v343
    %2854 = vmatprep.subr.mxu0 %v340
    %2855 = vmatpush1.msra.mxu0 %v339
    %2856 = vmatprep.subr.mxu0 %v336
    %2857 = vmatpush1.msra.mxu0 %v335
    %2858 = vmatprep.subr.mxu0 %v332
    %2859 = vmatpush1.msra.mxu0 %v331
    %2860 = vmatprep.subr.mxu0 %v328
    %2861 = vmatpush1.msra.mxu0 %v327
    %2862 = vmatprep.subr.mxu0 %v324
    %2863 = vmatpush1.msra.mxu0 %v323
    %2864 = vmatprep.subr.mxu0 %v320
    %2865 = vmatpush1.msra.mxu0 %v319
    %2866 = vmatprep.subr.mxu0 %v444
    %2867 = vmatpush2.msra.mxu0 %v443
    %2868 = vmatprep.subr.mxu0 %v440
    %2869 = vmatpush2.msra.mxu0 %v439
    %2870 = vmatprep.subr.mxu0 %v436
    %2871 = vmatpush2.msra.mxu0 %v435
    %2872 = vmatprep.subr.mxu0 %v432
    %2873 = vmatpush2.msra.mxu0 %v431
    %2874 = vmatprep.subr.mxu0 %v428
    %2875 = vmatpush2.msra.mxu0 %v427
    %2876 = vmatprep.subr.mxu0 %v424
    %2877 = vmatpush2.msra.mxu0 %v423
    %2878 = vmatprep.subr.mxu0 %v420
    %2879 = vmatpush2.msra.mxu0 %v419
    %2880 = vmatprep.subr.mxu0 %v416
    %2881 = vmatpush2.msra.mxu0 %v415
    %2882 = vmatprep.subr.mxu0 %v412
    %2883 = vmatpush2.msra.mxu0 %v411
    %2884 = vmatprep.subr.mxu0 %v408
    %2885 = vmatpush2.msra.mxu0 %v407
    %2886 = vmatprep.subr.mxu0 %v404
    %2887 = vmatpush2.msra.mxu0 %v403
    %2888 = vmatprep.subr.mxu0 %v400
    %2889 = vmatpush2.msra.mxu0 %v399
    %2890 = vmatprep.subr.mxu0 %v396
    %2891 = vmatpush2.msra.mxu0 %v395
    %2892 = vmatprep.subr.mxu0 %v392
    %2893 = vmatpush2.msra.mxu0 %v391
    %2894 = vmatprep.subr.mxu0 %v388
    %2895 = vmatpush2.msra.mxu0 %v387
    %2896 = vmatprep.subr.mxu0 %v384
    %2897 = vmatpush2.msra.mxu0 %v383
    %2898 = vmatprep.mubr.f32.mxu0 %v2658
    %2899 = vmatmul.mubr.f32.gmra.mxu0 %v2833
    %v2900 = vpop.f32.mrf.mxu0
    %v2901 = vadd.f32 %v64, %v2900
    %v2902 = vpop.f32.mrf.mxu0
    %v2903 = vadd.f32 %v68, %v2902
    %2904 = vdwg.mxu0
    %2905 = vmatprep.subr.mxu0 %v382
    %2906 = vmatpush1.msra.mxu0 %v381
    %2907 = vmatprep.subr.mxu0 %v378
    %2908 = vmatpush1.msra.mxu0 %v377
    %2909 = vmatprep.subr.mxu0 %v374
    %2910 = vmatpush1.msra.mxu0 %v373
    %2911 = vmatprep.subr.mxu0 %v370
    %2912 = vmatpush1.msra.mxu0 %v369
    %2913 = vmatprep.subr.mxu0 %v366
    %2914 = vmatpush1.msra.mxu0 %v365
    %2915 = vmatprep.subr.mxu0 %v362
    %2916 = vmatpush1.msra.mxu0 %v361
    %2917 = vmatprep.subr.mxu0 %v358
    %2918 = vmatpush1.msra.mxu0 %v357
    %2919 = vmatprep.subr.mxu0 %v354
    %2920 = vmatpush1.msra.mxu0 %v353
    %2921 = vmatprep.subr.mxu0 %v350
    %2922 = vmatpush1.msra.mxu0 %v349
    %2923 = vmatprep.subr.mxu0 %v346
    %2924 = vmatpush1.msra.mxu0 %v345
    %2925 = vmatprep.subr.mxu0 %v342
    %2926 = vmatpush1.msra.mxu0 %v341
    %2927 = vmatprep.subr.mxu0 %v338
    %2928 = vmatpush1.msra.mxu0 %v337
    %2929 = vmatprep.subr.mxu0 %v334
    %2930 = vmatpush1.msra.mxu0 %v333
    %2931 = vmatprep.subr.mxu0 %v330
    %2932 = vmatpush1.msra.mxu0 %v329
    %2933 = vmatprep.subr.mxu0 %v326
    %2934 = vmatpush1.msra.mxu0 %v325
    %2935 = vmatprep.subr.mxu0 %v322
    %2936 = vmatpush1.msra.mxu0 %v321
    %2937 = vmatprep.subr.mxu0 %v446
    %2938 = vmatpush2.msra.mxu0 %v445
    %2939 = vmatprep.subr.mxu0 %v442
    %2940 = vmatpush2.msra.mxu0 %v441
    %2941 = vmatprep.subr.mxu0 %v438
    %2942 = vmatpush2.msra.mxu0 %v437
    %2943 = vmatprep.subr.mxu0 %v434
    %2944 = vmatpush2.msra.mxu0 %v433
    %2945 = vmatprep.subr.mxu0 %v430
    %2946 = vmatpush2.msra.mxu0 %v429
    %2947 = vmatprep.subr.mxu0 %v426
    %2948 = vmatpush2.msra.mxu0 %v425
    %2949 = vmatprep.subr.mxu0 %v422
    %2950 = vmatpush2.msra.mxu0 %v421
    %2951 = vmatprep.subr.mxu0 %v418
    %2952 = vmatpush2.msra.mxu0 %v417
    %2953 = vmatprep.subr.mxu0 %v414
    %2954 = vmatpush2.msra.mxu0 %v413
    %2955 = vmatprep.subr.mxu0 %v410
    %2956 = vmatpush2.msra.mxu0 %v409
    %2957 = vmatprep.subr.mxu0 %v406
    %2958 = vmatpush2.msra.mxu0 %v405
    %2959 = vmatprep.subr.mxu0 %v402
    %2960 = vmatpush2.msra.mxu0 %v401
    %2961 = vmatprep.subr.mxu0 %v398
    %2962 = vmatpush2.msra.mxu0 %v397
    %2963 = vmatprep.subr.mxu0 %v394
    %2964 = vmatpush2.msra.mxu0 %v393
    %2965 = vmatprep.subr.mxu0 %v390
    %2966 = vmatpush2.msra.mxu0 %v389
    %2967 = vmatprep.subr.mxu0 %v386
    %2968 = vmatpush2.msra.mxu0 %v385
    %2969 = vmatprep.mubr.f32.mxu0 %v2658
    %2970 = vmatmul.mubr.f32.gmra.mxu0 %v2833
    %v2971 = vpop.f32.mrf.mxu0
    %v2972 = vadd.f32 %v72, %v2971
    %v2973 = vpop.f32.mrf.mxu0
    %v2974 = vadd.f32 %v76, %v2973
    %2975 = vdwg.mxu0
    %v2976 = vxor.u32 %v2901, 2147483648
    %v2977 = vmul.f32 %v2976, 1.442695
    %v2978 = vpow.pop %v2977
    %v2979 = vadd.f32 %v2978, 1.0
    %v2980 = vrcp.pop %v2979
    %v2981 = vmul.f32 1.0, %v2980
    %v2982 = vxor.u32 %v2903, 2147483648
    %v2983 = vmul.f32 %v2982, 1.442695
    %v2984 = vpow.pop %v2983
    %v2985 = vadd.f32 %v2984, 1.0
    %v2986 = vrcp.pop %v2985
    %v2987 = vmul.f32 1.0, %v2986
    %v2988 = vtanh.pop %v2972
    %v2989 = vxor.u32 %v2974, 2147483648
    %v2990 = vmul.f32 %v2989, 1.442695
    %v2991 = vpow.pop %v2990
    %v2992 = vadd.f32 %v2991, 1.0
    %v2993 = vrcp.pop %v2992
    %v2994 = vmul.f32 1.0, %v2993
    %v2995 = vmul.f32 %v2987, %v2656
    %v2996 = vmul.f32 %v2981, %v2988
    %v2997 = vadd.f32 %v2995, %v2996
    %v2998 = vtanh.pop %v2997
    %v2999 = vmul.f32 %v2994, %v2998
    %v3000 = vld [vmem:[%s4] sm:$0xff]
    %v3001 = vld [vmem:[%s4 + $0x8] sm:$0xff]
    %v3002 = vld [vmem:[%s4 + $0x10] sm:$0xff]
    %v3003 = vld [vmem:[%s4 + $0x18] sm:$0xff]
    %v3004 = vld [vmem:[%s4 + $0x20] sm:$0xff]
    %v3005 = vld [vmem:[%s4 + $0x28] sm:$0xff]
    %v3006 = vld [vmem:[%s4 + $0x30] sm:$0xff]
    %v3007 = vld [vmem:[%s4 + $0x38] sm:$0xff]
    %v3008 = vld [vmem:[%s4 + $0x40] sm:$0xff]
    %v3009 = vld [vmem:[%s4 + $0x48] sm:$0xff]
    %v3010 = vld [vmem:[%s4 + $0x50] sm:$0xff]
    %v3011 = vld [vmem:[%s4 + $0x58] sm:$0xff]
    %v3012 = vld [vmem:[%s4 + $0x60] sm:$0xff]
    %v3013 = vld [vmem:[%s4 + $0x68] sm:$0xff]
    %v3014 = vld [vmem:[%s4 + $0x70] sm:$0xff]
    %v3015 = vld [vmem:[%s4 + $0x78] sm:$0xff]
    %v3016 = vld [vmem:[%s5] sm:$0x1]
    %v3018 = vlaneseq
    %v3019 = vshrl.u32 %v3018, 7
    %v3020 = vsub.s32 0, %v3019
    %v3021 = vrot.slane %v3016, %v3020
    %3023 = vmatprep.subr.mxu0 0.0
    %3024 = vmatpush1.msra.mxu0 %v3015
    %3025 = vmatprep.subr.mxu0 0.0
    %3026 = vmatpush1.msra.mxu0 %v3014
    %3027 = vmatprep.subr.mxu0 0.0
    %3028 = vmatpush1.msra.mxu0 %v3013
    %3029 = vmatprep.subr.mxu0 0.0
    %3030 = vmatpush1.msra.mxu0 %v3012
    %3031 = vmatprep.subr.mxu0 0.0
    %3032 = vmatpush1.msra.mxu0 %v3011
    %3033 = vmatprep.subr.mxu0 0.0
    %3034 = vmatpush1.msra.mxu0 %v3010
    %3035 = vmatprep.subr.mxu0 0.0
    %3036 = vmatpush1.msra.mxu0 %v3009
    %3037 = vmatprep.subr.mxu0 0.0
    %3038 = vmatpush1.msra.mxu0 %v3008
    %3039 = vmatprep.subr.mxu0 0.0
    %3040 = vmatpush1.msra.mxu0 %v3007
    %3041 = vmatprep.subr.mxu0 0.0
    %3042 = vmatpush1.msra.mxu0 %v3006
    %3043 = vmatprep.subr.mxu0 0.0
    %3044 = vmatpush1.msra.mxu0 %v3005
    %3045 = vmatprep.subr.mxu0 0.0
    %3046 = vmatpush1.msra.mxu0 %v3004
    %3047 = vmatprep.subr.mxu0 0.0
    %3048 = vmatpush1.msra.mxu0 %v3003
    %3049 = vmatprep.subr.mxu0 0.0
    %3050 = vmatpush1.msra.mxu0 %v3002
    %3051 = vmatprep.subr.mxu0 0.0
    %3052 = vmatpush1.msra.mxu0 %v3001
    %3053 = vmatprep.subr.mxu0 0.0
    %3054 = vmatpush1.msra.mxu0 %v3000
    %3055 = vmatprep.subr.mxu0 0.0
    %3056 = vmatpush2.msra.mxu0 0.0
    %3057 = vmatprep.subr.mxu0 0.0
    %3058 = vmatpush2.msra.mxu0 0.0
    %3059 = vmatprep.subr.mxu0 0.0
    %3060 = vmatpush2.msra.mxu0 0.0
    %3061 = vmatprep.subr.mxu0 0.0
    %3062 = vmatpush2.msra.mxu0 0.0
    %3063 = vmatprep.subr.mxu0 0.0
    %3064 = vmatpush2.msra.mxu0 0.0
    %3065 = vmatprep.subr.mxu0 0.0
    %3066 = vmatpush2.msra.mxu0 0.0
    %3067 = vmatprep.subr.mxu0 0.0
    %3068 = vmatpush2.msra.mxu0 0.0
    %3069 = vmatprep.subr.mxu0 0.0
    %3070 = vmatpush2.msra.mxu0 0.0
    %3071 = vmatprep.subr.mxu0 0.0
    %3072 = vmatpush2.msra.mxu0 0.0
    %3073 = vmatprep.subr.mxu0 0.0
    %3074 = vmatpush2.msra.mxu0 0.0
    %3075 = vmatprep.subr.mxu0 0.0
    %3076 = vmatpush2.msra.mxu0 0.0
    %3077 = vmatprep.subr.mxu0 0.0
    %3078 = vmatpush2.msra.mxu0 0.0
    %3079 = vmatprep.subr.mxu0 0.0
    %3080 = vmatpush2.msra.mxu0 0.0
    %3081 = vmatprep.subr.mxu0 0.0
    %3082 = vmatpush2.msra.mxu0 0.0
    %3083 = vmatprep.subr.mxu0 0.0
    %3084 = vmatpush2.msra.mxu0 0.0
    %3085 = vmatprep.subr.mxu0 0.0
    %3086 = vmatpush2.msra.mxu0 0.0
    %3087 = vmatprep.mubr.f32.mxu0 0.0
    %3088 = vmatmul.mubr.f32.gmra.mxu0 %v2999
    %v3089 = vpop.f32.mrf.mxu0
    %v3090 = vadd.f32 %v3021, %v3089
    %v3091 = vpop.f32.mrf.mxu0
    %3092 = vdwg.mxu0
    %v3093 = vmax.f32 %v3090, 0.0
    %v3094 = vld [vmem:[%s6] sm:$0x1]
    %v3096 = vlaneseq
    %v3097 = vshrl.u32 %v3096, 7
    %v3098 = vsub.s32 0, %v3097
    %v3099 = vrot.slane %v3094, %v3098
    %v3101 = vmul.f32 %v3093, %v3099
    %3102 = vadd.xlane.f32.xlu0 %v3101
    %v3103 = vpop.xlane.xlu0 %3102
    %v3104 = vld [vmem:[#allocation2] sm:$0x1]
    %v3106 = vlaneseq
    %v3107 = vshrl.u32 %v3106, 7
    %v3108 = vsub.s32 0, %v3107
    %v3109 = vrot.slane %v3104, %v3108
    %v3111 = vadd.f32 %v3103, %v3109
    %vm3112 = vcmask 7168
    %3113 = vst.msk [vmem:[%s8] sm:$0xff] %vm3112, %v3111
    // Predicated region
    $region42: #{lstm_model_forward.1} parent=1 // pred_check
      _
    $region43: #{lstm_model_forward.1} parent=1 // pred_check_branch
      %3115 = sbr.rel (0) target = $region45
    $region44: #{lstm_model_forward.1} parent=1 // pred_region
      _
    $region45: #{lstm_model_forward.1} parent=1 // pred_fallthru
      _
    // Predicated region
    $region46: #{lstm_model_forward.1} parent=1 // pred_check
      _
    $region47: #{lstm_model_forward.1} parent=1 // pred_check_branch
      %3117 = sbr.rel (0) target = $region49
    $region48: #{lstm_model_forward.1} parent=1 // pred_region
      _
    $region49: #{lstm_model_forward.1} parent=1 // pred_fallthru
      _
    %3118 = vsyncpa [#allocation4], 1
    %3119 = vsyncpa [#allocation6], 1

</llo_original>
